<compile_context>
chip_gen: v5e
topology: v5e:2x2
jax: 0.10.0
libtpu: 0.0.40
codegen_flags: <defaults>
</compile_context>

<pallas_src>
import jax
import jax.numpy as jnp
from jax import lax
from jax.experimental import pallas as pl
from jax.experimental.pallas import tpu as pltpu


def _round_up(x, m):
    return (x + m - 1) // m * m


# --------------------------------------------------------------------------
# Fused Pallas kernel: 3-layer GRU over the full sequence + output projection
# --------------------------------------------------------------------------
def fused_gru_kernel(x_ref, wih0_ref, wihr_ref, whh_ref, bx_ref, bhn_ref,
                     wout_ref, bout_ref, o_ref, seq_ref, xg_ref):
    """One batch tile.

    x_ref   : (S, Bt, Dp)    f32  embedded inputs (emb dim padded to lanes)
    wih0_ref: (Dp, 3H)       f32  layer-0 input weights, pre-transposed
    wihr_ref: (L-1, H, 3H)   f32  layer>=1 input weights, pre-transposed
    whh_ref : (L, H, 3H)     f32  hidden weights, pre-transposed
    bx_ref  : (L, 1, 3H)     f32  [bih_r+bhh_r, bih_z+bhh_z, bih_n] per layer
    bhn_ref : (L, 1, H)      f32  bhh_n per layer (applied before r-multiply)
    wout_ref: (H, Vp)        f32  output weights, pre-transposed
    bout_ref: (1, Vp)        f32
    o_ref   : (S, Bt, Vp)    f32  logits
    seq_ref : (S, Bt, H)     f32  VMEM scratch: per-layer hidden states
    xg_ref  : (S, Bt, 3H)    f32  VMEM scratch: hoisted input projection
    """
    S, Bt, Dp = x_ref.shape
    L, H, _ = whh_ref.shape

    for l in range(L):
        # ---- hoisted input projection: one matmul for all timesteps --------
        if l == 0:
            x_all = x_ref[...].reshape(S * Bt, Dp)
            wih_t = wih0_ref[...]                       # (Dp, 3H)
        else:
            x_all = seq_ref[...].reshape(S * Bt, H)
            wih_t = wihr_ref[l - 1]                     # (H, 3H)
        xg_ref[...] = (
            jnp.dot(x_all, wih_t, preferred_element_type=jnp.float32)
            + bx_ref[l]
        ).reshape(S, Bt, 3 * H)

        whh_t = whh_ref[l]                              # (H, 3H), loaded once
        bhn = bhn_ref[l]                                # (1, H)

        # ---- recurrence: only h @ W_hh + gate elementwise per step ---------
        def step(t, h):
            xg = xg_ref[t]                                              # (Bt, 3H)
            hg = jnp.dot(h, whh_t, preferred_element_type=jnp.float32)  # (Bt, 3H)
            rz = jax.nn.sigmoid(xg[:, :2 * H] + hg[:, :2 * H])
            r = rz[:, :H]
            z = rz[:, H:]
            n = jnp.tanh(xg[:, 2 * H:] + r * (hg[:, 2 * H:] + bhn))
            h_new = (1.0 - z) * n + z * h
            seq_ref[t] = h_new
            return h_new

        # hidden=None in torch -> zero initial state; unroll gives the LLO
        # scheduler cross-timestep visibility.
        lax.fori_loop(0, S, step, jnp.zeros((Bt, H), jnp.float32), unroll=True)

    # ---- output projection on the last layer's hidden states ---------------
    h_all = seq_ref[...].reshape(S * Bt, H)
    logits = (jnp.dot(h_all, wout_ref[...], preferred_element_type=jnp.float32)
              + bout_ref[...])
    o_ref[...] = logits.reshape(S, Bt, -1)


# --------------------------------------------------------------------------
# Parameter prep: pad / transpose / stack / fold biases (once, outside kernel)
# --------------------------------------------------------------------------
def _prep_gru_params(params, emb_pad, vocab_pad):
    H = params["gru"][0]["whh"].shape[1]
    L = len(params["gru"])

    wih0 = params["gru"][0]["wih"]                       # (3H, E)
    E = wih0.shape[1]
    wih0_t = jnp.pad(wih0, ((0, 0), (0, emb_pad - E))).T          # (Dp, 3H)

    wihr_t = jnp.stack([params["gru"][l]["wih"].T for l in range(1, L)])  # (L-1,H,3H)
    whh_t = jnp.stack([params["gru"][l]["whh"].T for l in range(L)])      # (L,H,3H)

    bx, bhn = [], []
    for l in range(L):
        bih = params["gru"][l]["bih"]
        bhh = params["gru"][l]["bhh"]
        # fold r/z biases; keep n-gate input bias separate from bhh_n
        bx.append(jnp.concatenate([bih[:2 * H] + bhh[:2 * H], bih[2 * H:]])[None, :])
        bhn.append(bhh[2 * H:][None, :])
    bx = jnp.stack(bx)                                   # (L, 1, 3H)
    bhn = jnp.stack(bhn)                                 # (L, 1, H)

    V = params["w_out"].shape[0]
    wout_t = jnp.pad(params["w_out"], ((0, vocab_pad - V), (0, 0))).T     # (H, Vp)
    bout = jnp.pad(params["b_out"], (0, vocab_pad - V))[None, :]          # (1, Vp)

    return wih0_t, wihr_t, whh_t, bx, bhn, wout_t, bout


# --------------------------------------------------------------------------
# Forward wrapper
# --------------------------------------------------------------------------
def recurrent_collaborative_forward(params, inputs):
    """inputs: (seq, batch) int32 token ids -> (seq, batch, vocab) logits."""
    # TODO(synk): nn.GRU inter-layer dropout (p=0.5) applies only in torch
    # train mode and is stochastic; this implements eval/inference semantics.
    S, B = inputs.shape
    V, E = params["emb"].shape
    H = params["gru"][0]["whh"].shape[1]
    L = len(params["gru"])

    Dp = _round_up(E, 128)           # emb dim -> lane width
    Vp = _round_up(V, 128)           # vocab   -> lane-dense output stores
    Bp = _round_up(max(B, 8), 8)     # batch   -> sublane count

    # Embedding gather (plain-JAX glue), zero-padded to (S, Bp, Dp).
    emb = jnp.take(params["emb"], inputs, axis=0)                 # (S, B, E)
    emb = jnp.pad(emb, ((0, 0), (0, Bp - B), (0, Dp - E)))

    wih0_t, wihr_t, whh_t, bx, bhn, wout_t, bout = _prep_gru_params(params, Dp, Vp)

    # One batch tile per grid step ("parallel" -> v7x megacore batch sharding).
    bt = Bp if Bp <= 128 else 128
    assert Bp % bt == 0
    grid = (Bp // bt,)

    out = pl.pallas_call(
        fused_gru_kernel,
        out_shape=jax.ShapeDtypeStruct((S, Bp, Vp), jnp.float32),
        grid_spec=pltpu.PrefetchScalarGridSpec(
            num_scalar_prefetch=0,
            grid=grid,
            in_specs=[
                pl.BlockSpec((S, bt, Dp), lambda b: (0, b, 0)),       # x
                pl.BlockSpec((Dp, 3 * H), lambda b: (0, 0)),          # wih0_t
                pl.BlockSpec((L - 1, H, 3 * H), lambda b: (0, 0, 0)), # wihr_t
                pl.BlockSpec((L, H, 3 * H), lambda b: (0, 0, 0)),     # whh_t
                pl.BlockSpec((L, 1, 3 * H), lambda b: (0, 0, 0)),     # bx
                pl.BlockSpec((L, 1, H), lambda b: (0, 0, 0)),         # bhn
                pl.BlockSpec((H, Vp), lambda b: (0, 0)),              # wout_t
                pl.BlockSpec((1, Vp), lambda b: (0, 0)),              # bout
            ],
            out_specs=pl.BlockSpec((S, bt, Vp), lambda b: (0, b, 0)),
            scratch_shapes=[
                pltpu.VMEM((S, bt, H), jnp.float32),       # seq_ref
                pltpu.VMEM((S, bt, 3 * H), jnp.float32),   # xg_ref
            ],
        ),
        compiler_params=pltpu.CompilerParams(
            dimension_semantics=("parallel",)),
    )(emb, wih0_t, wihr_t, whh_t, bx, bhn, wout_t, bout)

    return out[:, :B, :V]


# --------------------------------------------------------------------------
# Deterministic parameter init (shapes match torch module __init__)
# --------------------------------------------------------------------------
def init_params(key, vocab_size, emb_dim=100, hidden_dim=128, num_layers=3):
    n_keys = 1 + 4 * num_layers + 2
    keys = list(jax.random.split(key, n_keys))
    k_iter = iter(keys)

    params = {}
    # nn.Embedding: N(0, 1)
    params["emb"] = jax.random.normal(next(k_iter), (vocab_size, emb_dim), jnp.float32)

    # nn.GRU: uniform(-1/sqrt(H), 1/sqrt(H)), gate order [r, z, n]
    bound = 1.0 / jnp.sqrt(jnp.float32(hidden_dim))
    gru = []
    for layer in range(num_layers):
        in_dim = emb_dim if layer == 0 else hidden_dim
        gru.append({
            "wih": jax.random.uniform(next(k_iter), (3 * hidden_dim, in_dim),
                                      jnp.float32, -bound, bound),
            "whh": jax.random.uniform(next(k_iter), (3 * hidden_dim, hidden_dim),
                                      jnp.float32, -bound, bound),
            "bih": jax.random.uniform(next(k_iter), (3 * hidden_dim,),
                                      jnp.float32, -bound, bound),
            "bhh": jax.random.uniform(next(k_iter), (3 * hidden_dim,),
                                      jnp.float32, -bound, bound),
        })
    params["gru"] = gru

    # nn.Linear(hidden, vocab): uniform(-1/sqrt(H), 1/sqrt(H))
    params["w_out"] = jax.random.uniform(next(k_iter), (vocab_size, hidden_dim),
                                         jnp.float32, -bound, bound)
    params["b_out"] = jax.random.uniform(next(k_iter), (vocab_size,),
                                         jnp.float32, -bound, bound)
    return params


# --------------------------------------------------------------------------
if __name__ == "__main__":
    vocab_size, emb_dim, hidden_dim = 64, 100, 128
    seq_len, batch = 8, 2

    key = jax.random.PRNGKey(0)
    pkey, ikey = jax.random.split(key)
    params = init_params(pkey, vocab_size, emb_dim, hidden_dim)

    inputs = jax.random.randint(ikey, (seq_len, batch), 0, vocab_size, dtype=jnp.int32)

    logits = jax.jit(recurrent_collaborative_forward)(params, inputs)
    jax.block_until_ready(logits)

    assert logits.shape == (seq_len, batch, vocab_size), logits.shape
    assert logits.dtype == jnp.float32
    print("KERNEL_OK")
</pallas_src>

<mosaic_0001>
module attributes {stable_mosaic.version = 11 : i64} {
  func.func @fused_gru_kernel(%arg0: i32, %arg1: memref<8x8x128xf32, #tpu.memory_space<vmem>>, %arg2: memref<128x384xf32, #tpu.memory_space<vmem>>, %arg3: memref<2x128x384xf32, #tpu.memory_space<vmem>>, %arg4: memref<3x128x384xf32, #tpu.memory_space<vmem>>, %arg5: memref<3x1x384xf32, #tpu.memory_space<vmem>>, %arg6: memref<3x1x128xf32, #tpu.memory_space<vmem>>, %arg7: memref<128x128xf32, #tpu.memory_space<vmem>>, %arg8: memref<1x128xf32, #tpu.memory_space<vmem>>, %arg9: memref<8x8x128xf32, #tpu.memory_space<vmem>>, %arg10: memref<8x8x128xf32, #tpu.memory_space<vmem>>, %arg11: memref<8x8x384xf32, #tpu.memory_space<vmem>>) attributes {dimension_semantics = [#tpu.dimension_semantics<parallel>], iteration_bounds = array<i64: 1>, scalar_prefetch = 0 : i64, scratch_operands = 2 : i64, tpu.core_type = #tpu.core_type<tc>, window_params = [{transform_indices = @transform_0, window_bounds = array<i64: 8, 8, 128>}, {pipeline_mode = #tpu.pipeline_mode<synchronous>, transform_indices = @transform_1, window_bounds = array<i64: 128, 384>}, {pipeline_mode = #tpu.pipeline_mode<synchronous>, transform_indices = @transform_2, window_bounds = array<i64: 2, 128, 384>}, {pipeline_mode = #tpu.pipeline_mode<synchronous>, transform_indices = @transform_3, window_bounds = array<i64: 3, 128, 384>}, {pipeline_mode = #tpu.pipeline_mode<synchronous>, transform_indices = @transform_4, window_bounds = array<i64: 3, 1, 384>}, {pipeline_mode = #tpu.pipeline_mode<synchronous>, transform_indices = @transform_5, window_bounds = array<i64: 3, 1, 128>}, {pipeline_mode = #tpu.pipeline_mode<synchronous>, transform_indices = @transform_6, window_bounds = array<i64: 128, 128>}, {pipeline_mode = #tpu.pipeline_mode<synchronous>, transform_indices = @transform_7, window_bounds = array<i64: 1, 128>}, {transform_indices = @transform_8, window_bounds = array<i64: 8, 8, 128>}]} {
    %c0 = arith.constant 0 : index
    %c0_0 = arith.constant 0 : index
    %c0_1 = arith.constant 0 : index
    %0 = vector.load %arg1[%c0, %c0_0, %c0_1] : memref<8x8x128xf32, #tpu.memory_space<vmem>>, vector<8x8x128xf32>
    %1 = vector.shape_cast %0 : vector<8x8x128xf32> to vector<64x128xf32>
    %c0_2 = arith.constant 0 : index
    %c0_3 = arith.constant 0 : index
    %2 = vector.load %arg2[%c0_2, %c0_3] : memref<128x384xf32, #tpu.memory_space<vmem>>, vector<128x384xf32>
    %cst = arith.constant dense<0.000000e+00> : vector<64x384xf32>
    %3 = tpu.matmul %1, %2, %cst {dimension_numbers = #tpu.dot_dimension_numbers<[1], [0], [0], [1], [0, 0, 1, 1], [], []>} : vector<64x128xf32>, vector<128x384xf32>, vector<64x384xf32> -> vector<64x384xf32>
    %c0_4 = arith.constant 0 : index
    %c0_5 = arith.constant 0 : index
    %c0_6 = arith.constant 0 : index
    %4 = vector.load %arg5[%c0_4, %c0_5, %c0_6] : memref<3x1x384xf32, #tpu.memory_space<vmem>>, vector<1x1x384xf32>
    %5 = vector.shape_cast %4 : vector<1x1x384xf32> to vector<1x384xf32>
    %6 = vector.broadcast %5 : vector<1x384xf32> to vector<64x384xf32>
    %7 = arith.addf %3, %6 : vector<64x384xf32>
    %8 = vector.shape_cast %7 : vector<64x384xf32> to vector<8x8x384xf32>
    %c0_7 = arith.constant 0 : index
    %c0_8 = arith.constant 0 : index
    %c0_9 = arith.constant 0 : index
    %9 = vector.load %arg11[%c0_7, %c0_8, %c0_9] : memref<8x8x384xf32, #tpu.memory_space<vmem>>, vector<8x8x384xf32>
    tpu.vector_store %arg11[%c0_7, %c0_8, %c0_9], %8 {strides = array<i32>} : memref<8x8x384xf32, #tpu.memory_space<vmem>>, vector<8x8x384xf32>,
    %c0_10 = arith.constant 0 : index
    %c0_11 = arith.constant 0 : index
    %c0_12 = arith.constant 0 : index
    %10 = vector.load %arg4[%c0_10, %c0_11, %c0_12] : memref<3x128x384xf32, #tpu.memory_space<vmem>>, vector<1x128x384xf32>
    %11 = vector.shape_cast %10 : vector<1x128x384xf32> to vector<128x384xf32>
    %c0_13 = arith.constant 0 : index
    %c0_14 = arith.constant 0 : index
    %c0_15 = arith.constant 0 : index
    %12 = vector.load %arg6[%c0_13, %c0_14, %c0_15] : memref<3x1x128xf32, #tpu.memory_space<vmem>>, vector<1x1x128xf32>
    %13 = vector.shape_cast %12 : vector<1x1x128xf32> to vector<1x128xf32>
    %cst_16 = arith.constant 0.000000e+00 : f32
    %14 = vector.broadcast %cst_16 : f32 to vector<8x128xf32>
    %c0_i32 = arith.constant 0 : i32
    %15 = arith.index_cast %c0_i32 : i32 to index
    %c0_17 = arith.constant 0 : index
    %c0_18 = arith.constant 0 : index
    %16 = vector.load %arg11[%15, %c0_17, %c0_18] : memref<8x8x384xf32, #tpu.memory_space<vmem>>, vector<1x8x384xf32>
    %17 = vector.shape_cast %16 : vector<1x8x384xf32> to vector<8x384xf32>
    %cst_19 = arith.constant dense<0.000000e+00> : vector<8x384xf32>
    %18 = tpu.matmul %14, %11, %cst_19 {dimension_numbers = #tpu.dot_dimension_numbers<[1], [0], [0], [1], [0, 0, 1, 1], [], []>} : vector<8x128xf32>, vector<128x384xf32>, vector<8x384xf32> -> vector<8x384xf32>
    %19 = vector.extract_strided_slice %17 {offsets = [0, 0], sizes = [8, 256], strides = [1, 1]} : vector<8x384xf32> to vector<8x256xf32>
    %20 = vector.extract_strided_slice %18 {offsets = [0, 0], sizes = [8, 256], strides = [1, 1]} : vector<8x384xf32> to vector<8x256xf32>
    %21 = arith.addf %19, %20 : vector<8x256xf32>
    %22 = arith.negf %21 : vector<8x256xf32>
    %23 = math.exp %22 : vector<8x256xf32>
    %cst_20 = arith.constant 1.000000e+00 : f32
    %24 = vector.broadcast %cst_20 : f32 to vector<8x256xf32>
    %25 = arith.addf %24, %23 : vector<8x256xf32>
    %26 = arith.divf %24, %25 : vector<8x256xf32>
    %27 = vector.extract_strided_slice %26 {offsets = [0, 0], sizes = [8, 128], strides = [1, 1]} : vector<8x256xf32> to vector<8x128xf32>
    %28 = vector.extract_strided_slice %26 {offsets = [0, 128], sizes = [8, 128], strides = [1, 1]} : vector<8x256xf32> to vector<8x128xf32>
    %29 = vector.extract_strided_slice %17 {offsets = [0, 256], sizes = [8, 128], strides = [1, 1]} : vector<8x384xf32> to vector<8x128xf32>
    %30 = vector.extract_strided_slice %18 {offsets = [0, 256], sizes = [8, 128], strides = [1, 1]} : vector<8x384xf32> to vector<8x128xf32>
    %31 = vector.broadcast %13 : vector<1x128xf32> to vector<8x128xf32>
    %32 = arith.addf %30, %31 : vector<8x128xf32>
    %33 = arith.mulf %27, %32 : vector<8x128xf32>
    %34 = arith.addf %29, %33 : vector<8x128xf32>
    %35 = math.tanh %34 : vector<8x128xf32>
    %cst_21 = arith.constant 1.000000e+00 : f32
    %36 = vector.broadcast %cst_21 : f32 to vector<8x128xf32>
    %37 = arith.subf %36, %28 : vector<8x128xf32>
    %38 = arith.mulf %37, %35 : vector<8x128xf32>
    %39 = arith.mulf %28, %14 : vector<8x128xf32>
    %40 = arith.addf %38, %39 : vector<8x128xf32>
    %41 = arith.index_cast %c0_i32 : i32 to index
    %c0_22 = arith.constant 0 : index
    %c0_23 = arith.constant 0 : index
    %42 = vector.load %arg10[%41, %c0_22, %c0_23] : memref<8x8x128xf32, #tpu.memory_space<vmem>>, vector<1x8x128xf32>
    %43 = vector.shape_cast %42 : vector<1x8x128xf32> to vector<8x128xf32>
    %44 = vector.shape_cast %40 : vector<8x128xf32> to vector<1x8x128xf32>
    tpu.vector_store %arg10[%41, %c0_22, %c0_23], %44 {strides = array<i32>} : memref<8x8x128xf32, #tpu.memory_space<vmem>>, vector<1x8x128xf32>,
    %c1_i32 = arith.constant 1 : i32
    %45 = arith.index_cast %c1_i32 : i32 to index
    %c0_24 = arith.constant 0 : index
    %c0_25 = arith.constant 0 : index
    %46 = vector.load %arg11[%45, %c0_24, %c0_25] : memref<8x8x384xf32, #tpu.memory_space<vmem>>, vector<1x8x384xf32>
    %47 = vector.shape_cast %46 : vector<1x8x384xf32> to vector<8x384xf32>
    %cst_26 = arith.constant dense<0.000000e+00> : vector<8x384xf32>
    %48 = tpu.matmul %40, %11, %cst_26 {dimension_numbers = #tpu.dot_dimension_numbers<[1], [0], [0], [1], [0, 0, 1, 1], [], []>} : vector<8x128xf32>, vector<128x384xf32>, vector<8x384xf32> -> vector<8x384xf32>
    %49 = vector.extract_strided_slice %47 {offsets = [0, 0], sizes = [8, 256], strides = [1, 1]} : vector<8x384xf32> to vector<8x256xf32>
    %50 = vector.extract_strided_slice %48 {offsets = [0, 0], sizes = [8, 256], strides = [1, 1]} : vector<8x384xf32> to vector<8x256xf32>
    %51 = arith.addf %49, %50 : vector<8x256xf32>
    %52 = arith.negf %51 : vector<8x256xf32>
    %53 = math.exp %52 : vector<8x256xf32>
    %cst_27 = arith.constant 1.000000e+00 : f32
    %54 = vector.broadcast %cst_27 : f32 to vector<8x256xf32>
    %55 = arith.addf %54, %53 : vector<8x256xf32>
    %56 = arith.divf %54, %55 : vector<8x256xf32>
    %57 = vector.extract_strided_slice %56 {offsets = [0, 0], sizes = [8, 128], strides = [1, 1]} : vector<8x256xf32> to vector<8x128xf32>
    %58 = vector.extract_strided_slice %56 {offsets = [0, 128], sizes = [8, 128], strides = [1, 1]} : vector<8x256xf32> to vector<8x128xf32>
    %59 = vector.extract_strided_slice %47 {offsets = [0, 256], sizes = [8, 128], strides = [1, 1]} : vector<8x384xf32> to vector<8x128xf32>
    %60 = vector.extract_strided_slice %48 {offsets = [0, 256], sizes = [8, 128], strides = [1, 1]} : vector<8x384xf32> to vector<8x128xf32>
    %61 = vector.broadcast %13 : vector<1x128xf32> to vector<8x128xf32>
    %62 = arith.addf %60, %61 : vector<8x128xf32>
    %63 = arith.mulf %57, %62 : vector<8x128xf32>
    %64 = arith.addf %59, %63 : vector<8x128xf32>
    %65 = math.tanh %64 : vector<8x128xf32>
    %cst_28 = arith.constant 1.000000e+00 : f32
    %66 = vector.broadcast %cst_28 : f32 to vector<8x128xf32>
    %67 = arith.subf %66, %58 : vector<8x128xf32>
    %68 = arith.mulf %67, %65 : vector<8x128xf32>
    %69 = arith.mulf %58, %40 : vector<8x128xf32>
    %70 = arith.addf %68, %69 : vector<8x128xf32>
    %71 = arith.index_cast %c1_i32 : i32 to index
    %c0_29 = arith.constant 0 : index
    %c0_30 = arith.constant 0 : index
    %72 = vector.load %arg10[%71, %c0_29, %c0_30] : memref<8x8x128xf32, #tpu.memory_space<vmem>>, vector<1x8x128xf32>
    %73 = vector.shape_cast %72 : vector<1x8x128xf32> to vector<8x128xf32>
    %74 = vector.shape_cast %70 : vector<8x128xf32> to vector<1x8x128xf32>
    tpu.vector_store %arg10[%71, %c0_29, %c0_30], %74 {strides = array<i32>} : memref<8x8x128xf32, #tpu.memory_space<vmem>>, vector<1x8x128xf32>,
    %c2_i32 = arith.constant 2 : i32
    %75 = arith.index_cast %c2_i32 : i32 to index
    %c0_31 = arith.constant 0 : index
    %c0_32 = arith.constant 0 : index
    %76 = vector.load %arg11[%75, %c0_31, %c0_32] : memref<8x8x384xf32, #tpu.memory_space<vmem>>, vector<1x8x384xf32>
    %77 = vector.shape_cast %76 : vector<1x8x384xf32> to vector<8x384xf32>
    %cst_33 = arith.constant dense<0.000000e+00> : vector<8x384xf32>
    %78 = tpu.matmul %70, %11, %cst_33 {dimension_numbers = #tpu.dot_dimension_numbers<[1], [0], [0], [1], [0, 0, 1, 1], [], []>} : vector<8x128xf32>, vector<128x384xf32>, vector<8x384xf32> -> vector<8x384xf32>
    %79 = vector.extract_strided_slice %77 {offsets = [0, 0], sizes = [8, 256], strides = [1, 1]} : vector<8x384xf32> to vector<8x256xf32>
    %80 = vector.extract_strided_slice %78 {offsets = [0, 0], sizes = [8, 256], strides = [1, 1]} : vector<8x384xf32> to vector<8x256xf32>
    %81 = arith.addf %79, %80 : vector<8x256xf32>
    %82 = arith.negf %81 : vector<8x256xf32>
    %83 = math.exp %82 : vector<8x256xf32>
    %cst_34 = arith.constant 1.000000e+00 : f32
    %84 = vector.broadcast %cst_34 : f32 to vector<8x256xf32>
    %85 = arith.addf %84, %83 : vector<8x256xf32>
    %86 = arith.divf %84, %85 : vector<8x256xf32>
    %87 = vector.extract_strided_slice %86 {offsets = [0, 0], sizes = [8, 128], strides = [1, 1]} : vector<8x256xf32> to vector<8x128xf32>
    %88 = vector.extract_strided_slice %86 {offsets = [0, 128], sizes = [8, 128], strides = [1, 1]} : vector<8x256xf32> to vector<8x128xf32>
    %89 = vector.extract_strided_slice %77 {offsets = [0, 256], sizes = [8, 128], strides = [1, 1]} : vector<8x384xf32> to vector<8x128xf32>
    %90 = vector.extract_strided_slice %78 {offsets = [0, 256], sizes = [8, 128], strides = [1, 1]} : vector<8x384xf32> to vector<8x128xf32>
    %91 = vector.broadcast %13 : vector<1x128xf32> to vector<8x128xf32>
    %92 = arith.addf %90, %91 : vector<8x128xf32>
    %93 = arith.mulf %87, %92 : vector<8x128xf32>
    %94 = arith.addf %89, %93 : vector<8x128xf32>
    %95 = math.tanh %94 : vector<8x128xf32>
    %cst_35 = arith.constant 1.000000e+00 : f32
    %96 = vector.broadcast %cst_35 : f32 to vector<8x128xf32>
    %97 = arith.subf %96, %88 : vector<8x128xf32>
    %98 = arith.mulf %97, %95 : vector<8x128xf32>
    %99 = arith.mulf %88, %70 : vector<8x128xf32>
    %100 = arith.addf %98, %99 : vector<8x128xf32>
    %101 = arith.index_cast %c2_i32 : i32 to index
    %c0_36 = arith.constant 0 : index
    %c0_37 = arith.constant 0 : index
    %102 = vector.load %arg10[%101, %c0_36, %c0_37] : memref<8x8x128xf32, #tpu.memory_space<vmem>>, vector<1x8x128xf32>
    %103 = vector.shape_cast %102 : vector<1x8x128xf32> to vector<8x128xf32>
    %104 = vector.shape_cast %100 : vector<8x128xf32> to vector<1x8x128xf32>
    tpu.vector_store %arg10[%101, %c0_36, %c0_37], %104 {strides = array<i32>} : memref<8x8x128xf32, #tpu.memory_space<vmem>>, vector<1x8x128xf32>,
    %c3_i32 = arith.constant 3 : i32
    %105 = arith.index_cast %c3_i32 : i32 to index
    %c0_38 = arith.constant 0 : index
    %c0_39 = arith.constant 0 : index
    %106 = vector.load %arg11[%105, %c0_38, %c0_39] : memref<8x8x384xf32, #tpu.memory_space<vmem>>, vector<1x8x384xf32>
    %107 = vector.shape_cast %106 : vector<1x8x384xf32> to vector<8x384xf32>
    %cst_40 = arith.constant dense<0.000000e+00> : vector<8x384xf32>
    %108 = tpu.matmul %100, %11, %cst_40 {dimension_numbers = #tpu.dot_dimension_numbers<[1], [0], [0], [1], [0, 0, 1, 1], [], []>} : vector<8x128xf32>, vector<128x384xf32>, vector<8x384xf32> -> vector<8x384xf32>
    %109 = vector.extract_strided_slice %107 {offsets = [0, 0], sizes = [8, 256], strides = [1, 1]} : vector<8x384xf32> to vector<8x256xf32>
    %110 = vector.extract_strided_slice %108 {offsets = [0, 0], sizes = [8, 256], strides = [1, 1]} : vector<8x384xf32> to vector<8x256xf32>
    %111 = arith.addf %109, %110 : vector<8x256xf32>
    %112 = arith.negf %111 : vector<8x256xf32>
    %113 = math.exp %112 : vector<8x256xf32>
    %cst_41 = arith.constant 1.000000e+00 : f32
    %114 = vector.broadcast %cst_41 : f32 to vector<8x256xf32>
    %115 = arith.addf %114, %113 : vector<8x256xf32>
    %116 = arith.divf %114, %115 : vector<8x256xf32>
    %117 = vector.extract_strided_slice %116 {offsets = [0, 0], sizes = [8, 128], strides = [1, 1]} : vector<8x256xf32> to vector<8x128xf32>
    %118 = vector.extract_strided_slice %116 {offsets = [0, 128], sizes = [8, 128], strides = [1, 1]} : vector<8x256xf32> to vector<8x128xf32>
    %119 = vector.extract_strided_slice %107 {offsets = [0, 256], sizes = [8, 128], strides = [1, 1]} : vector<8x384xf32> to vector<8x128xf32>
    %120 = vector.extract_strided_slice %108 {offsets = [0, 256], sizes = [8, 128], strides = [1, 1]} : vector<8x384xf32> to vector<8x128xf32>
    %121 = vector.broadcast %13 : vector<1x128xf32> to vector<8x128xf32>
    %122 = arith.addf %120, %121 : vector<8x128xf32>
    %123 = arith.mulf %117, %122 : vector<8x128xf32>
    %124 = arith.addf %119, %123 : vector<8x128xf32>
    %125 = math.tanh %124 : vector<8x128xf32>
    %cst_42 = arith.constant 1.000000e+00 : f32
    %126 = vector.broadcast %cst_42 : f32 to vector<8x128xf32>
    %127 = arith.subf %126, %118 : vector<8x128xf32>
    %128 = arith.mulf %127, %125 : vector<8x128xf32>
    %129 = arith.mulf %118, %100 : vector<8x128xf32>
    %130 = arith.addf %128, %129 : vector<8x128xf32>
    %131 = arith.index_cast %c3_i32 : i32 to index
    %c0_43 = arith.constant 0 : index
    %c0_44 = arith.constant 0 : index
    %132 = vector.load %arg10[%131, %c0_43, %c0_44] : memref<8x8x128xf32, #tpu.memory_space<vmem>>, vector<1x8x128xf32>
    %133 = vector.shape_cast %132 : vector<1x8x128xf32> to vector<8x128xf32>
    %134 = vector.shape_cast %130 : vector<8x128xf32> to vector<1x8x128xf32>
    tpu.vector_store %arg10[%131, %c0_43, %c0_44], %134 {strides = array<i32>} : memref<8x8x128xf32, #tpu.memory_space<vmem>>, vector<1x8x128xf32>,
    %c4_i32 = arith.constant 4 : i32
    %135 = arith.index_cast %c4_i32 : i32 to index
    %c0_45 = arith.constant 0 : index
    %c0_46 = arith.constant 0 : index
    %136 = vector.load %arg11[%135, %c0_45, %c0_46] : memref<8x8x384xf32, #tpu.memory_space<vmem>>, vector<1x8x384xf32>
    %137 = vector.shape_cast %136 : vector<1x8x384xf32> to vector<8x384xf32>
    %cst_47 = arith.constant dense<0.000000e+00> : vector<8x384xf32>
    %138 = tpu.matmul %130, %11, %cst_47 {dimension_numbers = #tpu.dot_dimension_numbers<[1], [0], [0], [1], [0, 0, 1, 1], [], []>} : vector<8x128xf32>, vector<128x384xf32>, vector<8x384xf32> -> vector<8x384xf32>
    %139 = vector.extract_strided_slice %137 {offsets = [0, 0], sizes = [8, 256], strides = [1, 1]} : vector<8x384xf32> to vector<8x256xf32>
    %140 = vector.extract_strided_slice %138 {offsets = [0, 0], sizes = [8, 256], strides = [1, 1]} : vector<8x384xf32> to vector<8x256xf32>
    %141 = arith.addf %139, %140 : vector<8x256xf32>
    %142 = arith.negf %141 : vector<8x256xf32>
    %143 = math.exp %142 : vector<8x256xf32>
    %cst_48 = arith.constant 1.000000e+00 : f32
    %144 = vector.broadcast %cst_48 : f32 to vector<8x256xf32>
    %145 = arith.addf %144, %143 : vector<8x256xf32>
    %146 = arith.divf %144, %145 : vector<8x256xf32>
    %147 = vector.extract_strided_slice %146 {offsets = [0, 0], sizes = [8, 128], strides = [1, 1]} : vector<8x256xf32> to vector<8x128xf32>
    %148 = vector.extract_strided_slice %146 {offsets = [0, 128], sizes = [8, 128], strides = [1, 1]} : vector<8x256xf32> to vector<8x128xf32>
    %149 = vector.extract_strided_slice %137 {offsets = [0, 256], sizes = [8, 128], strides = [1, 1]} : vector<8x384xf32> to vector<8x128xf32>
    %150 = vector.extract_strided_slice %138 {offsets = [0, 256], sizes = [8, 128], strides = [1, 1]} : vector<8x384xf32> to vector<8x128xf32>
    %151 = vector.broadcast %13 : vector<1x128xf32> to vector<8x128xf32>
    %152 = arith.addf %150, %151 : vector<8x128xf32>
    %153 = arith.mulf %147, %152 : vector<8x128xf32>
    %154 = arith.addf %149, %153 : vector<8x128xf32>
    %155 = math.tanh %154 : vector<8x128xf32>
    %cst_49 = arith.constant 1.000000e+00 : f32
    %156 = vector.broadcast %cst_49 : f32 to vector<8x128xf32>
    %157 = arith.subf %156, %148 : vector<8x128xf32>
    %158 = arith.mulf %157, %155 : vector<8x128xf32>
    %159 = arith.mulf %148, %130 : vector<8x128xf32>
    %160 = arith.addf %158, %159 : vector<8x128xf32>
    %161 = arith.index_cast %c4_i32 : i32 to index
    %c0_50 = arith.constant 0 : index
    %c0_51 = arith.constant 0 : index
    %162 = vector.load %arg10[%161, %c0_50, %c0_51] : memref<8x8x128xf32, #tpu.memory_space<vmem>>, vector<1x8x128xf32>
    %163 = vector.shape_cast %162 : vector<1x8x128xf32> to vector<8x128xf32>
    %164 = vector.shape_cast %160 : vector<8x128xf32> to vector<1x8x128xf32>
    tpu.vector_store %arg10[%161, %c0_50, %c0_51], %164 {strides = array<i32>} : memref<8x8x128xf32, #tpu.memory_space<vmem>>, vector<1x8x128xf32>,
    %c5_i32 = arith.constant 5 : i32
    %165 = arith.index_cast %c5_i32 : i32 to index
    %c0_52 = arith.constant 0 : index
    %c0_53 = arith.constant 0 : index
    %166 = vector.load %arg11[%165, %c0_52, %c0_53] : memref<8x8x384xf32, #tpu.memory_space<vmem>>, vector<1x8x384xf32>
    %167 = vector.shape_cast %166 : vector<1x8x384xf32> to vector<8x384xf32>
    %cst_54 = arith.constant dense<0.000000e+00> : vector<8x384xf32>
    %168 = tpu.matmul %160, %11, %cst_54 {dimension_numbers = #tpu.dot_dimension_numbers<[1], [0], [0], [1], [0, 0, 1, 1], [], []>} : vector<8x128xf32>, vector<128x384xf32>, vector<8x384xf32> -> vector<8x384xf32>
    %169 = vector.extract_strided_slice %167 {offsets = [0, 0], sizes = [8, 256], strides = [1, 1]} : vector<8x384xf32> to vector<8x256xf32>
    %170 = vector.extract_strided_slice %168 {offsets = [0, 0], sizes = [8, 256], strides = [1, 1]} : vector<8x384xf32> to vector<8x256xf32>
    %171 = arith.addf %169, %170 : vector<8x256xf32>
    %172 = arith.negf %171 : vector<8x256xf32>
    %173 = math.exp %172 : vector<8x256xf32>
    %cst_55 = arith.constant 1.000000e+00 : f32
    %174 = vector.broadcast %cst_55 : f32 to vector<8x256xf32>
    %175 = arith.addf %174, %173 : vector<8x256xf32>
    %176 = arith.divf %174, %175 : vector<8x256xf32>
    %177 = vector.extract_strided_slice %176 {offsets = [0, 0], sizes = [8, 128], strides = [1, 1]} : vector<8x256xf32> to vector<8x128xf32>
    %178 = vector.extract_strided_slice %176 {offsets = [0, 128], sizes = [8, 128], strides = [1, 1]} : vector<8x256xf32> to vector<8x128xf32>
    %179 = vector.extract_strided_slice %167 {offsets = [0, 256], sizes = [8, 128], strides = [1, 1]} : vector<8x384xf32> to vector<8x128xf32>
    %180 = vector.extract_strided_slice %168 {offsets = [0, 256], sizes = [8, 128], strides = [1, 1]} : vector<8x384xf32> to vector<8x128xf32>
    %181 = vector.broadcast %13 : vector<1x128xf32> to vector<8x128xf32>
    %182 = arith.addf %180, %181 : vector<8x128xf32>
    %183 = arith.mulf %177, %182 : vector<8x128xf32>
    %184 = arith.addf %179, %183 : vector<8x128xf32>
    %185 = math.tanh %184 : vector<8x128xf32>
    %cst_56 = arith.constant 1.000000e+00 : f32
    %186 = vector.broadcast %cst_56 : f32 to vector<8x128xf32>
    %187 = arith.subf %186, %178 : vector<8x128xf32>
    %188 = arith.mulf %187, %185 : vector<8x128xf32>
    %189 = arith.mulf %178, %160 : vector<8x128xf32>
    %190 = arith.addf %188, %189 : vector<8x128xf32>
    %191 = arith.index_cast %c5_i32 : i32 to index
    %c0_57 = arith.constant 0 : index
    %c0_58 = arith.constant 0 : index
    %192 = vector.load %arg10[%191, %c0_57, %c0_58] : memref<8x8x128xf32, #tpu.memory_space<vmem>>, vector<1x8x128xf32>
    %193 = vector.shape_cast %192 : vector<1x8x128xf32> to vector<8x128xf32>
    %194 = vector.shape_cast %190 : vector<8x128xf32> to vector<1x8x128xf32>
    tpu.vector_store %arg10[%191, %c0_57, %c0_58], %194 {strides = array<i32>} : memref<8x8x128xf32, #tpu.memory_space<vmem>>, vector<1x8x128xf32>,
    %c6_i32 = arith.constant 6 : i32
    %195 = arith.index_cast %c6_i32 : i32 to index
    %c0_59 = arith.constant 0 : index
    %c0_60 = arith.constant 0 : index
    %196 = vector.load %arg11[%195, %c0_59, %c0_60] : memref<8x8x384xf32, #tpu.memory_space<vmem>>, vector<1x8x384xf32>
    %197 = vector.shape_cast %196 : vector<1x8x384xf32> to vector<8x384xf32>
    %cst_61 = arith.constant dense<0.000000e+00> : vector<8x384xf32>
    %198 = tpu.matmul %190, %11, %cst_61 {dimension_numbers = #tpu.dot_dimension_numbers<[1], [0], [0], [1], [0, 0, 1, 1], [], []>} : vector<8x128xf32>, vector<128x384xf32>, vector<8x384xf32> -> vector<8x384xf32>
    %199 = vector.extract_strided_slice %197 {offsets = [0, 0], sizes = [8, 256], strides = [1, 1]} : vector<8x384xf32> to vector<8x256xf32>
    %200 = vector.extract_strided_slice %198 {offsets = [0, 0], sizes = [8, 256], strides = [1, 1]} : vector<8x384xf32> to vector<8x256xf32>
    %201 = arith.addf %199, %200 : vector<8x256xf32>
    %202 = arith.negf %201 : vector<8x256xf32>
    %203 = math.exp %202 : vector<8x256xf32>
    %cst_62 = arith.constant 1.000000e+00 : f32
    %204 = vector.broadcast %cst_62 : f32 to vector<8x256xf32>
    %205 = arith.addf %204, %203 : vector<8x256xf32>
    %206 = arith.divf %204, %205 : vector<8x256xf32>
    %207 = vector.extract_strided_slice %206 {offsets = [0, 0], sizes = [8, 128], strides = [1, 1]} : vector<8x256xf32> to vector<8x128xf32>
    %208 = vector.extract_strided_slice %206 {offsets = [0, 128], sizes = [8, 128], strides = [1, 1]} : vector<8x256xf32> to vector<8x128xf32>
    %209 = vector.extract_strided_slice %197 {offsets = [0, 256], sizes = [8, 128], strides = [1, 1]} : vector<8x384xf32> to vector<8x128xf32>
    %210 = vector.extract_strided_slice %198 {offsets = [0, 256], sizes = [8, 128], strides = [1, 1]} : vector<8x384xf32> to vector<8x128xf32>
    %211 = vector.broadcast %13 : vector<1x128xf32> to vector<8x128xf32>
    %212 = arith.addf %210, %211 : vector<8x128xf32>
    %213 = arith.mulf %207, %212 : vector<8x128xf32>
    %214 = arith.addf %209, %213 : vector<8x128xf32>
    %215 = math.tanh %214 : vector<8x128xf32>
    %cst_63 = arith.constant 1.000000e+00 : f32
    %216 = vector.broadcast %cst_63 : f32 to vector<8x128xf32>
    %217 = arith.subf %216, %208 : vector<8x128xf32>
    %218 = arith.mulf %217, %215 : vector<8x128xf32>
    %219 = arith.mulf %208, %190 : vector<8x128xf32>
    %220 = arith.addf %218, %219 : vector<8x128xf32>
    %221 = arith.index_cast %c6_i32 : i32 to index
    %c0_64 = arith.constant 0 : index
    %c0_65 = arith.constant 0 : index
    %222 = vector.load %arg10[%221, %c0_64, %c0_65] : memref<8x8x128xf32, #tpu.memory_space<vmem>>, vector<1x8x128xf32>
    %223 = vector.shape_cast %222 : vector<1x8x128xf32> to vector<8x128xf32>
    %224 = vector.shape_cast %220 : vector<8x128xf32> to vector<1x8x128xf32>
    tpu.vector_store %arg10[%221, %c0_64, %c0_65], %224 {strides = array<i32>} : memref<8x8x128xf32, #tpu.memory_space<vmem>>, vector<1x8x128xf32>,
    %c7_i32 = arith.constant 7 : i32
    %225 = arith.index_cast %c7_i32 : i32 to index
    %c0_66 = arith.constant 0 : index
    %c0_67 = arith.constant 0 : index
    %226 = vector.load %arg11[%225, %c0_66, %c0_67] : memref<8x8x384xf32, #tpu.memory_space<vmem>>, vector<1x8x384xf32>
    %227 = vector.shape_cast %226 : vector<1x8x384xf32> to vector<8x384xf32>
    %cst_68 = arith.constant dense<0.000000e+00> : vector<8x384xf32>
    %228 = tpu.matmul %220, %11, %cst_68 {dimension_numbers = #tpu.dot_dimension_numbers<[1], [0], [0], [1], [0, 0, 1, 1], [], []>} : vector<8x128xf32>, vector<128x384xf32>, vector<8x384xf32> -> vector<8x384xf32>
    %229 = vector.extract_strided_slice %227 {offsets = [0, 0], sizes = [8, 256], strides = [1, 1]} : vector<8x384xf32> to vector<8x256xf32>
    %230 = vector.extract_strided_slice %228 {offsets = [0, 0], sizes = [8, 256], strides = [1, 1]} : vector<8x384xf32> to vector<8x256xf32>
    %231 = arith.addf %229, %230 : vector<8x256xf32>
    %232 = arith.negf %231 : vector<8x256xf32>
    %233 = math.exp %232 : vector<8x256xf32>
    %cst_69 = arith.constant 1.000000e+00 : f32
    %234 = vector.broadcast %cst_69 : f32 to vector<8x256xf32>
    %235 = arith.addf %234, %233 : vector<8x256xf32>
    %236 = arith.divf %234, %235 : vector<8x256xf32>
    %237 = vector.extract_strided_slice %236 {offsets = [0, 0], sizes = [8, 128], strides = [1, 1]} : vector<8x256xf32> to vector<8x128xf32>
    %238 = vector.extract_strided_slice %236 {offsets = [0, 128], sizes = [8, 128], strides = [1, 1]} : vector<8x256xf32> to vector<8x128xf32>
    %239 = vector.extract_strided_slice %227 {offsets = [0, 256], sizes = [8, 128], strides = [1, 1]} : vector<8x384xf32> to vector<8x128xf32>
    %240 = vector.extract_strided_slice %228 {offsets = [0, 256], sizes = [8, 128], strides = [1, 1]} : vector<8x384xf32> to vector<8x128xf32>
    %241 = vector.broadcast %13 : vector<1x128xf32> to vector<8x128xf32>
    %242 = arith.addf %240, %241 : vector<8x128xf32>
    %243 = arith.mulf %237, %242 : vector<8x128xf32>
    %244 = arith.addf %239, %243 : vector<8x128xf32>
    %245 = math.tanh %244 : vector<8x128xf32>
    %cst_70 = arith.constant 1.000000e+00 : f32
    %246 = vector.broadcast %cst_70 : f32 to vector<8x128xf32>
    %247 = arith.subf %246, %238 : vector<8x128xf32>
    %248 = arith.mulf %247, %245 : vector<8x128xf32>
    %249 = arith.mulf %238, %220 : vector<8x128xf32>
    %250 = arith.addf %248, %249 : vector<8x128xf32>
    %251 = arith.index_cast %c7_i32 : i32 to index
    %c0_71 = arith.constant 0 : index
    %c0_72 = arith.constant 0 : index
    %252 = vector.load %arg10[%251, %c0_71, %c0_72] : memref<8x8x128xf32, #tpu.memory_space<vmem>>, vector<1x8x128xf32>
    %253 = vector.shape_cast %252 : vector<1x8x128xf32> to vector<8x128xf32>
    %254 = vector.shape_cast %250 : vector<8x128xf32> to vector<1x8x128xf32>
    tpu.vector_store %arg10[%251, %c0_71, %c0_72], %254 {strides = array<i32>} : memref<8x8x128xf32, #tpu.memory_space<vmem>>, vector<1x8x128xf32>,
    %c8_i32 = arith.constant 8 : i32
    %c0_73 = arith.constant 0 : index
    %c0_74 = arith.constant 0 : index
    %c0_75 = arith.constant 0 : index
    %255 = vector.load %arg10[%c0_73, %c0_74, %c0_75] : memref<8x8x128xf32, #tpu.memory_space<vmem>>, vector<8x8x128xf32>
    %256 = vector.shape_cast %255 : vector<8x8x128xf32> to vector<64x128xf32>
    %c0_76 = arith.constant 0 : index
    %c0_77 = arith.constant 0 : index
    %c0_78 = arith.constant 0 : index
    %257 = vector.load %arg3[%c0_76, %c0_77, %c0_78] : memref<2x128x384xf32, #tpu.memory_space<vmem>>, vector<1x128x384xf32>
    %258 = vector.shape_cast %257 : vector<1x128x384xf32> to vector<128x384xf32>
    %cst_79 = arith.constant dense<0.000000e+00> : vector<64x384xf32>
    %259 = tpu.matmul %256, %258, %cst_79 {dimension_numbers = #tpu.dot_dimension_numbers<[1], [0], [0], [1], [0, 0, 1, 1], [], []>} : vector<64x128xf32>, vector<128x384xf32>, vector<64x384xf32> -> vector<64x384xf32>
    %c1 = arith.constant 1 : index
    %c0_80 = arith.constant 0 : index
    %c0_81 = arith.constant 0 : index
    %260 = vector.load %arg5[%c1, %c0_80, %c0_81] : memref<3x1x384xf32, #tpu.memory_space<vmem>>, vector<1x1x384xf32>
    %261 = vector.shape_cast %260 : vector<1x1x384xf32> to vector<1x384xf32>
    %262 = vector.broadcast %261 : vector<1x384xf32> to vector<64x384xf32>
    %263 = arith.addf %259, %262 : vector<64x384xf32>
    %264 = vector.shape_cast %263 : vector<64x384xf32> to vector<8x8x384xf32>
    %c0_82 = arith.constant 0 : index
    %c0_83 = arith.constant 0 : index
    %c0_84 = arith.constant 0 : index
    %265 = vector.load %arg11[%c0_82, %c0_83, %c0_84] : memref<8x8x384xf32, #tpu.memory_space<vmem>>, vector<8x8x384xf32>
    tpu.vector_store %arg11[%c0_82, %c0_83, %c0_84], %264 {strides = array<i32>} : memref<8x8x384xf32, #tpu.memory_space<vmem>>, vector<8x8x384xf32>,
    %c1_85 = arith.constant 1 : index
    %c0_86 = arith.constant 0 : index
    %c0_87 = arith.constant 0 : index
    %266 = vector.load %arg4[%c1_85, %c0_86, %c0_87] : memref<3x128x384xf32, #tpu.memory_space<vmem>>, vector<1x128x384xf32>
    %267 = vector.shape_cast %266 : vector<1x128x384xf32> to vector<128x384xf32>
    %c1_88 = arith.constant 1 : index
    %c0_89 = arith.constant 0 : index
    %c0_90 = arith.constant 0 : index
    %268 = vector.load %arg6[%c1_88, %c0_89, %c0_90] : memref<3x1x128xf32, #tpu.memory_space<vmem>>, vector<1x1x128xf32>
    %269 = vector.shape_cast %268 : vector<1x1x128xf32> to vector<1x128xf32>
    %cst_91 = arith.constant 0.000000e+00 : f32
    %270 = vector.broadcast %cst_91 : f32 to vector<8x128xf32>
    %c0_i32_92 = arith.constant 0 : i32
    %271 = arith.index_cast %c0_i32_92 : i32 to index
    %c0_93 = arith.constant 0 : index
    %c0_94 = arith.constant 0 : index
    %272 = vector.load %arg11[%271, %c0_93, %c0_94] : memref<8x8x384xf32, #tpu.memory_space<vmem>>, vector<1x8x384xf32>
    %273 = vector.shape_cast %272 : vector<1x8x384xf32> to vector<8x384xf32>
    %cst_95 = arith.constant dense<0.000000e+00> : vector<8x384xf32>
    %274 = tpu.matmul %270, %267, %cst_95 {dimension_numbers = #tpu.dot_dimension_numbers<[1], [0], [0], [1], [0, 0, 1, 1], [], []>} : vector<8x128xf32>, vector<128x384xf32>, vector<8x384xf32> -> vector<8x384xf32>
    %275 = vector.extract_strided_slice %273 {offsets = [0, 0], sizes = [8, 256], strides = [1, 1]} : vector<8x384xf32> to vector<8x256xf32>
    %276 = vector.extract_strided_slice %274 {offsets = [0, 0], sizes = [8, 256], strides = [1, 1]} : vector<8x384xf32> to vector<8x256xf32>
    %277 = arith.addf %275, %276 : vector<8x256xf32>
    %278 = arith.negf %277 : vector<8x256xf32>
    %279 = math.exp %278 : vector<8x256xf32>
    %cst_96 = arith.constant 1.000000e+00 : f32
    %280 = vector.broadcast %cst_96 : f32 to vector<8x256xf32>
    %281 = arith.addf %280, %279 : vector<8x256xf32>
    %282 = arith.divf %280, %281 : vector<8x256xf32>
    %283 = vector.extract_strided_slice %282 {offsets = [0, 0], sizes = [8, 128], strides = [1, 1]} : vector<8x256xf32> to vector<8x128xf32>
    %284 = vector.extract_strided_slice %282 {offsets = [0, 128], sizes = [8, 128], strides = [1, 1]} : vector<8x256xf32> to vector<8x128xf32>
    %285 = vector.extract_strided_slice %273 {offsets = [0, 256], sizes = [8, 128], strides = [1, 1]} : vector<8x384xf32> to vector<8x128xf32>
    %286 = vector.extract_strided_slice %274 {offsets = [0, 256], sizes = [8, 128], strides = [1, 1]} : vector<8x384xf32> to vector<8x128xf32>
    %287 = vector.broadcast %269 : vector<1x128xf32> to vector<8x128xf32>
    %288 = arith.addf %286, %287 : vector<8x128xf32>
    %289 = arith.mulf %283, %288 : vector<8x128xf32>
    %290 = arith.addf %285, %289 : vector<8x128xf32>
    %291 = math.tanh %290 : vector<8x128xf32>
    %cst_97 = arith.constant 1.000000e+00 : f32
    %292 = vector.broadcast %cst_97 : f32 to vector<8x128xf32>
    %293 = arith.subf %292, %284 : vector<8x128xf32>
    %294 = arith.mulf %293, %291 : vector<8x128xf32>
    %295 = arith.mulf %284, %270 : vector<8x128xf32>
    %296 = arith.addf %294, %295 : vector<8x128xf32>
    %297 = arith.index_cast %c0_i32_92 : i32 to index
    %c0_98 = arith.constant 0 : index
    %c0_99 = arith.constant 0 : index
    %298 = vector.load %arg10[%297, %c0_98, %c0_99] : memref<8x8x128xf32, #tpu.memory_space<vmem>>, vector<1x8x128xf32>
    %299 = vector.shape_cast %298 : vector<1x8x128xf32> to vector<8x128xf32>
    %300 = vector.shape_cast %296 : vector<8x128xf32> to vector<1x8x128xf32>
    tpu.vector_store %arg10[%297, %c0_98, %c0_99], %300 {strides = array<i32>} : memref<8x8x128xf32, #tpu.memory_space<vmem>>, vector<1x8x128xf32>,
    %c1_i32_100 = arith.constant 1 : i32
    %301 = arith.index_cast %c1_i32_100 : i32 to index
    %c0_101 = arith.constant 0 : index
    %c0_102 = arith.constant 0 : index
    %302 = vector.load %arg11[%301, %c0_101, %c0_102] : memref<8x8x384xf32, #tpu.memory_space<vmem>>, vector<1x8x384xf32>
    %303 = vector.shape_cast %302 : vector<1x8x384xf32> to vector<8x384xf32>
    %cst_103 = arith.constant dense<0.000000e+00> : vector<8x384xf32>
    %304 = tpu.matmul %296, %267, %cst_103 {dimension_numbers = #tpu.dot_dimension_numbers<[1], [0], [0], [1], [0, 0, 1, 1], [], []>} : vector<8x128xf32>, vector<128x384xf32>, vector<8x384xf32> -> vector<8x384xf32>
    %305 = vector.extract_strided_slice %303 {offsets = [0, 0], sizes = [8, 256], strides = [1, 1]} : vector<8x384xf32> to vector<8x256xf32>
    %306 = vector.extract_strided_slice %304 {offsets = [0, 0], sizes = [8, 256], strides = [1, 1]} : vector<8x384xf32> to vector<8x256xf32>
    %307 = arith.addf %305, %306 : vector<8x256xf32>
    %308 = arith.negf %307 : vector<8x256xf32>
    %309 = math.exp %308 : vector<8x256xf32>
    %cst_104 = arith.constant 1.000000e+00 : f32
    %310 = vector.broadcast %cst_104 : f32 to vector<8x256xf32>
    %311 = arith.addf %310, %309 : vector<8x256xf32>
    %312 = arith.divf %310, %311 : vector<8x256xf32>
    %313 = vector.extract_strided_slice %312 {offsets = [0, 0], sizes = [8, 128], strides = [1, 1]} : vector<8x256xf32> to vector<8x128xf32>
    %314 = vector.extract_strided_slice %312 {offsets = [0, 128], sizes = [8, 128], strides = [1, 1]} : vector<8x256xf32> to vector<8x128xf32>
    %315 = vector.extract_strided_slice %303 {offsets = [0, 256], sizes = [8, 128], strides = [1, 1]} : vector<8x384xf32> to vector<8x128xf32>
    %316 = vector.extract_strided_slice %304 {offsets = [0, 256], sizes = [8, 128], strides = [1, 1]} : vector<8x384xf32> to vector<8x128xf32>
    %317 = vector.broadcast %269 : vector<1x128xf32> to vector<8x128xf32>
    %318 = arith.addf %316, %317 : vector<8x128xf32>
    %319 = arith.mulf %313, %318 : vector<8x128xf32>
    %320 = arith.addf %315, %319 : vector<8x128xf32>
    %321 = math.tanh %320 : vector<8x128xf32>
    %cst_105 = arith.constant 1.000000e+00 : f32
    %322 = vector.broadcast %cst_105 : f32 to vector<8x128xf32>
    %323 = arith.subf %322, %314 : vector<8x128xf32>
    %324 = arith.mulf %323, %321 : vector<8x128xf32>
    %325 = arith.mulf %314, %296 : vector<8x128xf32>
    %326 = arith.addf %324, %325 : vector<8x128xf32>
    %327 = arith.index_cast %c1_i32_100 : i32 to index
    %c0_106 = arith.constant 0 : index
    %c0_107 = arith.constant 0 : index
    %328 = vector.load %arg10[%327, %c0_106, %c0_107] : memref<8x8x128xf32, #tpu.memory_space<vmem>>, vector<1x8x128xf32>
    %329 = vector.shape_cast %328 : vector<1x8x128xf32> to vector<8x128xf32>
    %330 = vector.shape_cast %326 : vector<8x128xf32> to vector<1x8x128xf32>
    tpu.vector_store %arg10[%327, %c0_106, %c0_107], %330 {strides = array<i32>} : memref<8x8x128xf32, #tpu.memory_space<vmem>>, vector<1x8x128xf32>,
    %c2_i32_108 = arith.constant 2 : i32
    %331 = arith.index_cast %c2_i32_108 : i32 to index
    %c0_109 = arith.constant 0 : index
    %c0_110 = arith.constant 0 : index
    %332 = vector.load %arg11[%331, %c0_109, %c0_110] : memref<8x8x384xf32, #tpu.memory_space<vmem>>, vector<1x8x384xf32>
    %333 = vector.shape_cast %332 : vector<1x8x384xf32> to vector<8x384xf32>
    %cst_111 = arith.constant dense<0.000000e+00> : vector<8x384xf32>
    %334 = tpu.matmul %326, %267, %cst_111 {dimension_numbers = #tpu.dot_dimension_numbers<[1], [0], [0], [1], [0, 0, 1, 1], [], []>} : vector<8x128xf32>, vector<128x384xf32>, vector<8x384xf32> -> vector<8x384xf32>
    %335 = vector.extract_strided_slice %333 {offsets = [0, 0], sizes = [8, 256], strides = [1, 1]} : vector<8x384xf32> to vector<8x256xf32>
    %336 = vector.extract_strided_slice %334 {offsets = [0, 0], sizes = [8, 256], strides = [1, 1]} : vector<8x384xf32> to vector<8x256xf32>
    %337 = arith.addf %335, %336 : vector<8x256xf32>
    %338 = arith.negf %337 : vector<8x256xf32>
    %339 = math.exp %338 : vector<8x256xf32>
    %cst_112 = arith.constant 1.000000e+00 : f32
    %340 = vector.broadcast %cst_112 : f32 to vector<8x256xf32>
    %341 = arith.addf %340, %339 : vector<8x256xf32>
    %342 = arith.divf %340, %341 : vector<8x256xf32>
    %343 = vector.extract_strided_slice %342 {offsets = [0, 0], sizes = [8, 128], strides = [1, 1]} : vector<8x256xf32> to vector<8x128xf32>
    %344 = vector.extract_strided_slice %342 {offsets = [0, 128], sizes = [8, 128], strides = [1, 1]} : vector<8x256xf32> to vector<8x128xf32>
    %345 = vector.extract_strided_slice %333 {offsets = [0, 256], sizes = [8, 128], strides = [1, 1]} : vector<8x384xf32> to vector<8x128xf32>
    %346 = vector.extract_strided_slice %334 {offsets = [0, 256], sizes = [8, 128], strides = [1, 1]} : vector<8x384xf32> to vector<8x128xf32>
    %347 = vector.broadcast %269 : vector<1x128xf32> to vector<8x128xf32>
    %348 = arith.addf %346, %347 : vector<8x128xf32>
    %349 = arith.mulf %343, %348 : vector<8x128xf32>
    %350 = arith.addf %345, %349 : vector<8x128xf32>
    %351 = math.tanh %350 : vector<8x128xf32>
    %cst_113 = arith.constant 1.000000e+00 : f32
    %352 = vector.broadcast %cst_113 : f32 to vector<8x128xf32>
    %353 = arith.subf %352, %344 : vector<8x128xf32>
    %354 = arith.mulf %353, %351 : vector<8x128xf32>
    %355 = arith.mulf %344, %326 : vector<8x128xf32>
    %356 = arith.addf %354, %355 : vector<8x128xf32>
    %357 = arith.index_cast %c2_i32_108 : i32 to index
    %c0_114 = arith.constant 0 : index
    %c0_115 = arith.constant 0 : index
    %358 = vector.load %arg10[%357, %c0_114, %c0_115] : memref<8x8x128xf32, #tpu.memory_space<vmem>>, vector<1x8x128xf32>
    %359 = vector.shape_cast %358 : vector<1x8x128xf32> to vector<8x128xf32>
    %360 = vector.shape_cast %356 : vector<8x128xf32> to vector<1x8x128xf32>
    tpu.vector_store %arg10[%357, %c0_114, %c0_115], %360 {strides = array<i32>} : memref<8x8x128xf32, #tpu.memory_space<vmem>>, vector<1x8x128xf32>,
    %c3_i32_116 = arith.constant 3 : i32
    %361 = arith.index_cast %c3_i32_116 : i32 to index
    %c0_117 = arith.constant 0 : index
    %c0_118 = arith.constant 0 : index
    %362 = vector.load %arg11[%361, %c0_117, %c0_118] : memref<8x8x384xf32, #tpu.memory_space<vmem>>, vector<1x8x384xf32>
    %363 = vector.shape_cast %362 : vector<1x8x384xf32> to vector<8x384xf32>
    %cst_119 = arith.constant dense<0.000000e+00> : vector<8x384xf32>
    %364 = tpu.matmul %356, %267, %cst_119 {dimension_numbers = #tpu.dot_dimension_numbers<[1], [0], [0], [1], [0, 0, 1, 1], [], []>} : vector<8x128xf32>, vector<128x384xf32>, vector<8x384xf32> -> vector<8x384xf32>
    %365 = vector.extract_strided_slice %363 {offsets = [0, 0], sizes = [8, 256], strides = [1, 1]} : vector<8x384xf32> to vector<8x256xf32>
    %366 = vector.extract_strided_slice %364 {offsets = [0, 0], sizes = [8, 256], strides = [1, 1]} : vector<8x384xf32> to vector<8x256xf32>
    %367 = arith.addf %365, %366 : vector<8x256xf32>
    %368 = arith.negf %367 : vector<8x256xf32>
    %369 = math.exp %368 : vector<8x256xf32>
    %cst_120 = arith.constant 1.000000e+00 : f32
    %370 = vector.broadcast %cst_120 : f32 to vector<8x256xf32>
    %371 = arith.addf %370, %369 : vector<8x256xf32>
    %372 = arith.divf %370, %371 : vector<8x256xf32>
    %373 = vector.extract_strided_slice %372 {offsets = [0, 0], sizes = [8, 128], strides = [1, 1]} : vector<8x256xf32> to vector<8x128xf32>
    %374 = vector.extract_strided_slice %372 {offsets = [0, 128], sizes = [8, 128], strides = [1, 1]} : vector<8x256xf32> to vector<8x128xf32>
    %375 = vector.extract_strided_slice %363 {offsets = [0, 256], sizes = [8, 128], strides = [1, 1]} : vector<8x384xf32> to vector<8x128xf32>
    %376 = vector.extract_strided_slice %364 {offsets = [0, 256], sizes = [8, 128], strides = [1, 1]} : vector<8x384xf32> to vector<8x128xf32>
    %377 = vector.broadcast %269 : vector<1x128xf32> to vector<8x128xf32>
    %378 = arith.addf %376, %377 : vector<8x128xf32>
    %379 = arith.mulf %373, %378 : vector<8x128xf32>
    %380 = arith.addf %375, %379 : vector<8x128xf32>
    %381 = math.tanh %380 : vector<8x128xf32>
    %cst_121 = arith.constant 1.000000e+00 : f32
    %382 = vector.broadcast %cst_121 : f32 to vector<8x128xf32>
    %383 = arith.subf %382, %374 : vector<8x128xf32>
    %384 = arith.mulf %383, %381 : vector<8x128xf32>
    %385 = arith.mulf %374, %356 : vector<8x128xf32>
    %386 = arith.addf %384, %385 : vector<8x128xf32>
    %387 = arith.index_cast %c3_i32_116 : i32 to index
    %c0_122 = arith.constant 0 : index
    %c0_123 = arith.constant 0 : index
    %388 = vector.load %arg10[%387, %c0_122, %c0_123] : memref<8x8x128xf32, #tpu.memory_space<vmem>>, vector<1x8x128xf32>
    %389 = vector.shape_cast %388 : vector<1x8x128xf32> to vector<8x128xf32>
    %390 = vector.shape_cast %386 : vector<8x128xf32> to vector<1x8x128xf32>
    tpu.vector_store %arg10[%387, %c0_122, %c0_123], %390 {strides = array<i32>} : memref<8x8x128xf32, #tpu.memory_space<vmem>>, vector<1x8x128xf32>,
    %c4_i32_124 = arith.constant 4 : i32
    %391 = arith.index_cast %c4_i32_124 : i32 to index
    %c0_125 = arith.constant 0 : index
    %c0_126 = arith.constant 0 : index
    %392 = vector.load %arg11[%391, %c0_125, %c0_126] : memref<8x8x384xf32, #tpu.memory_space<vmem>>, vector<1x8x384xf32>
    %393 = vector.shape_cast %392 : vector<1x8x384xf32> to vector<8x384xf32>
    %cst_127 = arith.constant dense<0.000000e+00> : vector<8x384xf32>
    %394 = tpu.matmul %386, %267, %cst_127 {dimension_numbers = #tpu.dot_dimension_numbers<[1], [0], [0], [1], [0, 0, 1, 1], [], []>} : vector<8x128xf32>, vector<128x384xf32>, vector<8x384xf32> -> vector<8x384xf32>
    %395 = vector.extract_strided_slice %393 {offsets = [0, 0], sizes = [8, 256], strides = [1, 1]} : vector<8x384xf32> to vector<8x256xf32>
    %396 = vector.extract_strided_slice %394 {offsets = [0, 0], sizes = [8, 256], strides = [1, 1]} : vector<8x384xf32> to vector<8x256xf32>
    %397 = arith.addf %395, %396 : vector<8x256xf32>
    %398 = arith.negf %397 : vector<8x256xf32>
    %399 = math.exp %398 : vector<8x256xf32>
    %cst_128 = arith.constant 1.000000e+00 : f32
    %400 = vector.broadcast %cst_128 : f32 to vector<8x256xf32>
    %401 = arith.addf %400, %399 : vector<8x256xf32>
    %402 = arith.divf %400, %401 : vector<8x256xf32>
    %403 = vector.extract_strided_slice %402 {offsets = [0, 0], sizes = [8, 128], strides = [1, 1]} : vector<8x256xf32> to vector<8x128xf32>
    %404 = vector.extract_strided_slice %402 {offsets = [0, 128], sizes = [8, 128], strides = [1, 1]} : vector<8x256xf32> to vector<8x128xf32>
    %405 = vector.extract_strided_slice %393 {offsets = [0, 256], sizes = [8, 128], strides = [1, 1]} : vector<8x384xf32> to vector<8x128xf32>
    %406 = vector.extract_strided_slice %394 {offsets = [0, 256], sizes = [8, 128], strides = [1, 1]} : vector<8x384xf32> to vector<8x128xf32>
    %407 = vector.broadcast %269 : vector<1x128xf32> to vector<8x128xf32>
    %408 = arith.addf %406, %407 : vector<8x128xf32>
    %409 = arith.mulf %403, %408 : vector<8x128xf32>
    %410 = arith.addf %405, %409 : vector<8x128xf32>
    %411 = math.tanh %410 : vector<8x128xf32>
    %cst_129 = arith.constant 1.000000e+00 : f32
    %412 = vector.broadcast %cst_129 : f32 to vector<8x128xf32>
    %413 = arith.subf %412, %404 : vector<8x128xf32>
    %414 = arith.mulf %413, %411 : vector<8x128xf32>
    %415 = arith.mulf %404, %386 : vector<8x128xf32>
    %416 = arith.addf %414, %415 : vector<8x128xf32>
    %417 = arith.index_cast %c4_i32_124 : i32 to index
    %c0_130 = arith.constant 0 : index
    %c0_131 = arith.constant 0 : index
    %418 = vector.load %arg10[%417, %c0_130, %c0_131] : memref<8x8x128xf32, #tpu.memory_space<vmem>>, vector<1x8x128xf32>
    %419 = vector.shape_cast %418 : vector<1x8x128xf32> to vector<8x128xf32>
    %420 = vector.shape_cast %416 : vector<8x128xf32> to vector<1x8x128xf32>
    tpu.vector_store %arg10[%417, %c0_130, %c0_131], %420 {strides = array<i32>} : memref<8x8x128xf32, #tpu.memory_space<vmem>>, vector<1x8x128xf32>,
    %c5_i32_132 = arith.constant 5 : i32
    %421 = arith.index_cast %c5_i32_132 : i32 to index
    %c0_133 = arith.constant 0 : index
    %c0_134 = arith.constant 0 : index
    %422 = vector.load %arg11[%421, %c0_133, %c0_134] : memref<8x8x384xf32, #tpu.memory_space<vmem>>, vector<1x8x384xf32>
    %423 = vector.shape_cast %422 : vector<1x8x384xf32> to vector<8x384xf32>
    %cst_135 = arith.constant dense<0.000000e+00> : vector<8x384xf32>
    %424 = tpu.matmul %416, %267, %cst_135 {dimension_numbers = #tpu.dot_dimension_numbers<[1], [0], [0], [1], [0, 0, 1, 1], [], []>} : vector<8x128xf32>, vector<128x384xf32>, vector<8x384xf32> -> vector<8x384xf32>
    %425 = vector.extract_strided_slice %423 {offsets = [0, 0], sizes = [8, 256], strides = [1, 1]} : vector<8x384xf32> to vector<8x256xf32>
    %426 = vector.extract_strided_slice %424 {offsets = [0, 0], sizes = [8, 256], strides = [1, 1]} : vector<8x384xf32> to vector<8x256xf32>
    %427 = arith.addf %425, %426 : vector<8x256xf32>
    %428 = arith.negf %427 : vector<8x256xf32>
    %429 = math.exp %428 : vector<8x256xf32>
    %cst_136 = arith.constant 1.000000e+00 : f32
    %430 = vector.broadcast %cst_136 : f32 to vector<8x256xf32>
    %431 = arith.addf %430, %429 : vector<8x256xf32>
    %432 = arith.divf %430, %431 : vector<8x256xf32>
    %433 = vector.extract_strided_slice %432 {offsets = [0, 0], sizes = [8, 128], strides = [1, 1]} : vector<8x256xf32> to vector<8x128xf32>
    %434 = vector.extract_strided_slice %432 {offsets = [0, 128], sizes = [8, 128], strides = [1, 1]} : vector<8x256xf32> to vector<8x128xf32>
    %435 = vector.extract_strided_slice %423 {offsets = [0, 256], sizes = [8, 128], strides = [1, 1]} : vector<8x384xf32> to vector<8x128xf32>
    %436 = vector.extract_strided_slice %424 {offsets = [0, 256], sizes = [8, 128], strides = [1, 1]} : vector<8x384xf32> to vector<8x128xf32>
    %437 = vector.broadcast %269 : vector<1x128xf32> to vector<8x128xf32>
    %438 = arith.addf %436, %437 : vector<8x128xf32>
    %439 = arith.mulf %433, %438 : vector<8x128xf32>
    %440 = arith.addf %435, %439 : vector<8x128xf32>
    %441 = math.tanh %440 : vector<8x128xf32>
    %cst_137 = arith.constant 1.000000e+00 : f32
    %442 = vector.broadcast %cst_137 : f32 to vector<8x128xf32>
    %443 = arith.subf %442, %434 : vector<8x128xf32>
    %444 = arith.mulf %443, %441 : vector<8x128xf32>
    %445 = arith.mulf %434, %416 : vector<8x128xf32>
    %446 = arith.addf %444, %445 : vector<8x128xf32>
    %447 = arith.index_cast %c5_i32_132 : i32 to index
    %c0_138 = arith.constant 0 : index
    %c0_139 = arith.constant 0 : index
    %448 = vector.load %arg10[%447, %c0_138, %c0_139] : memref<8x8x128xf32, #tpu.memory_space<vmem>>, vector<1x8x128xf32>
    %449 = vector.shape_cast %448 : vector<1x8x128xf32> to vector<8x128xf32>
    %450 = vector.shape_cast %446 : vector<8x128xf32> to vector<1x8x128xf32>
    tpu.vector_store %arg10[%447, %c0_138, %c0_139], %450 {strides = array<i32>} : memref<8x8x128xf32, #tpu.memory_space<vmem>>, vector<1x8x128xf32>,
    %c6_i32_140 = arith.constant 6 : i32
    %451 = arith.index_cast %c6_i32_140 : i32 to index
    %c0_141 = arith.constant 0 : index
    %c0_142 = arith.constant 0 : index
    %452 = vector.load %arg11[%451, %c0_141, %c0_142] : memref<8x8x384xf32, #tpu.memory_space<vmem>>, vector<1x8x384xf32>
    %453 = vector.shape_cast %452 : vector<1x8x384xf32> to vector<8x384xf32>
    %cst_143 = arith.constant dense<0.000000e+00> : vector<8x384xf32>
    %454 = tpu.matmul %446, %267, %cst_143 {dimension_numbers = #tpu.dot_dimension_numbers<[1], [0], [0], [1], [0, 0, 1, 1], [], []>} : vector<8x128xf32>, vector<128x384xf32>, vector<8x384xf32> -> vector<8x384xf32>
    %455 = vector.extract_strided_slice %453 {offsets = [0, 0], sizes = [8, 256], strides = [1, 1]} : vector<8x384xf32> to vector<8x256xf32>
    %456 = vector.extract_strided_slice %454 {offsets = [0, 0], sizes = [8, 256], strides = [1, 1]} : vector<8x384xf32> to vector<8x256xf32>
    %457 = arith.addf %455, %456 : vector<8x256xf32>
    %458 = arith.negf %457 : vector<8x256xf32>
    %459 = math.exp %458 : vector<8x256xf32>
    %cst_144 = arith.constant 1.000000e+00 : f32
    %460 = vector.broadcast %cst_144 : f32 to vector<8x256xf32>
    %461 = arith.addf %460, %459 : vector<8x256xf32>
    %462 = arith.divf %460, %461 : vector<8x256xf32>
    %463 = vector.extract_strided_slice %462 {offsets = [0, 0], sizes = [8, 128], strides = [1, 1]} : vector<8x256xf32> to vector<8x128xf32>
    %464 = vector.extract_strided_slice %462 {offsets = [0, 128], sizes = [8, 128], strides = [1, 1]} : vector<8x256xf32> to vector<8x128xf32>
    %465 = vector.extract_strided_slice %453 {offsets = [0, 256], sizes = [8, 128], strides = [1, 1]} : vector<8x384xf32> to vector<8x128xf32>
    %466 = vector.extract_strided_slice %454 {offsets = [0, 256], sizes = [8, 128], strides = [1, 1]} : vector<8x384xf32> to vector<8x128xf32>
    %467 = vector.broadcast %269 : vector<1x128xf32> to vector<8x128xf32>
    %468 = arith.addf %466, %467 : vector<8x128xf32>
    %469 = arith.mulf %463, %468 : vector<8x128xf32>
    %470 = arith.addf %465, %469 : vector<8x128xf32>
    %471 = math.tanh %470 : vector<8x128xf32>
    %cst_145 = arith.constant 1.000000e+00 : f32
    %472 = vector.broadcast %cst_145 : f32 to vector<8x128xf32>
    %473 = arith.subf %472, %464 : vector<8x128xf32>
    %474 = arith.mulf %473, %471 : vector<8x128xf32>
    %475 = arith.mulf %464, %446 : vector<8x128xf32>
    %476 = arith.addf %474, %475 : vector<8x128xf32>
    %477 = arith.index_cast %c6_i32_140 : i32 to index
    %c0_146 = arith.constant 0 : index
    %c0_147 = arith.constant 0 : index
    %478 = vector.load %arg10[%477, %c0_146, %c0_147] : memref<8x8x128xf32, #tpu.memory_space<vmem>>, vector<1x8x128xf32>
    %479 = vector.shape_cast %478 : vector<1x8x128xf32> to vector<8x128xf32>
    %480 = vector.shape_cast %476 : vector<8x128xf32> to vector<1x8x128xf32>
    tpu.vector_store %arg10[%477, %c0_146, %c0_147], %480 {strides = array<i32>} : memref<8x8x128xf32, #tpu.memory_space<vmem>>, vector<1x8x128xf32>,
    %c7_i32_148 = arith.constant 7 : i32
    %481 = arith.index_cast %c7_i32_148 : i32 to index
    %c0_149 = arith.constant 0 : index
    %c0_150 = arith.constant 0 : index
    %482 = vector.load %arg11[%481, %c0_149, %c0_150] : memref<8x8x384xf32, #tpu.memory_space<vmem>>, vector<1x8x384xf32>
    %483 = vector.shape_cast %482 : vector<1x8x384xf32> to vector<8x384xf32>
    %cst_151 = arith.constant dense<0.000000e+00> : vector<8x384xf32>
    %484 = tpu.matmul %476, %267, %cst_151 {dimension_numbers = #tpu.dot_dimension_numbers<[1], [0], [0], [1], [0, 0, 1, 1], [], []>} : vector<8x128xf32>, vector<128x384xf32>, vector<8x384xf32> -> vector<8x384xf32>
    %485 = vector.extract_strided_slice %483 {offsets = [0, 0], sizes = [8, 256], strides = [1, 1]} : vector<8x384xf32> to vector<8x256xf32>
    %486 = vector.extract_strided_slice %484 {offsets = [0, 0], sizes = [8, 256], strides = [1, 1]} : vector<8x384xf32> to vector<8x256xf32>
    %487 = arith.addf %485, %486 : vector<8x256xf32>
    %488 = arith.negf %487 : vector<8x256xf32>
    %489 = math.exp %488 : vector<8x256xf32>
    %cst_152 = arith.constant 1.000000e+00 : f32
    %490 = vector.broadcast %cst_152 : f32 to vector<8x256xf32>
    %491 = arith.addf %490, %489 : vector<8x256xf32>
    %492 = arith.divf %490, %491 : vector<8x256xf32>
    %493 = vector.extract_strided_slice %492 {offsets = [0, 0], sizes = [8, 128], strides = [1, 1]} : vector<8x256xf32> to vector<8x128xf32>
    %494 = vector.extract_strided_slice %492 {offsets = [0, 128], sizes = [8, 128], strides = [1, 1]} : vector<8x256xf32> to vector<8x128xf32>
    %495 = vector.extract_strided_slice %483 {offsets = [0, 256], sizes = [8, 128], strides = [1, 1]} : vector<8x384xf32> to vector<8x128xf32>
    %496 = vector.extract_strided_slice %484 {offsets = [0, 256], sizes = [8, 128], strides = [1, 1]} : vector<8x384xf32> to vector<8x128xf32>
    %497 = vector.broadcast %269 : vector<1x128xf32> to vector<8x128xf32>
    %498 = arith.addf %496, %497 : vector<8x128xf32>
    %499 = arith.mulf %493, %498 : vector<8x128xf32>
    %500 = arith.addf %495, %499 : vector<8x128xf32>
    %501 = math.tanh %500 : vector<8x128xf32>
    %cst_153 = arith.constant 1.000000e+00 : f32
    %502 = vector.broadcast %cst_153 : f32 to vector<8x128xf32>
    %503 = arith.subf %502, %494 : vector<8x128xf32>
    %504 = arith.mulf %503, %501 : vector<8x128xf32>
    %505 = arith.mulf %494, %476 : vector<8x128xf32>
    %506 = arith.addf %504, %505 : vector<8x128xf32>
    %507 = arith.index_cast %c7_i32_148 : i32 to index
    %c0_154 = arith.constant 0 : index
    %c0_155 = arith.constant 0 : index
    %508 = vector.load %arg10[%507, %c0_154, %c0_155] : memref<8x8x128xf32, #tpu.memory_space<vmem>>, vector<1x8x128xf32>
    %509 = vector.shape_cast %508 : vector<1x8x128xf32> to vector<8x128xf32>
    %510 = vector.shape_cast %506 : vector<8x128xf32> to vector<1x8x128xf32>
    tpu.vector_store %arg10[%507, %c0_154, %c0_155], %510 {strides = array<i32>} : memref<8x8x128xf32, #tpu.memory_space<vmem>>, vector<1x8x128xf32>,
    %c8_i32_156 = arith.constant 8 : i32
    %c0_157 = arith.constant 0 : index
    %c0_158 = arith.constant 0 : index
    %c0_159 = arith.constant 0 : index
    %511 = vector.load %arg10[%c0_157, %c0_158, %c0_159] : memref<8x8x128xf32, #tpu.memory_space<vmem>>, vector<8x8x128xf32>
    %512 = vector.shape_cast %511 : vector<8x8x128xf32> to vector<64x128xf32>
    %c1_160 = arith.constant 1 : index
    %c0_161 = arith.constant 0 : index
    %c0_162 = arith.constant 0 : index
    %513 = vector.load %arg3[%c1_160, %c0_161, %c0_162] : memref<2x128x384xf32, #tpu.memory_space<vmem>>, vector<1x128x384xf32>
    %514 = vector.shape_cast %513 : vector<1x128x384xf32> to vector<128x384xf32>
    %cst_163 = arith.constant dense<0.000000e+00> : vector<64x384xf32>
    %515 = tpu.matmul %512, %514, %cst_163 {dimension_numbers = #tpu.dot_dimension_numbers<[1], [0], [0], [1], [0, 0, 1, 1], [], []>} : vector<64x128xf32>, vector<128x384xf32>, vector<64x384xf32> -> vector<64x384xf32>
    %c2 = arith.constant 2 : index
    %c0_164 = arith.constant 0 : index
    %c0_165 = arith.constant 0 : index
    %516 = vector.load %arg5[%c2, %c0_164, %c0_165] : memref<3x1x384xf32, #tpu.memory_space<vmem>>, vector<1x1x384xf32>
    %517 = vector.shape_cast %516 : vector<1x1x384xf32> to vector<1x384xf32>
    %518 = vector.broadcast %517 : vector<1x384xf32> to vector<64x384xf32>
    %519 = arith.addf %515, %518 : vector<64x384xf32>
    %520 = vector.shape_cast %519 : vector<64x384xf32> to vector<8x8x384xf32>
    %c0_166 = arith.constant 0 : index
    %c0_167 = arith.constant 0 : index
    %c0_168 = arith.constant 0 : index
    %521 = vector.load %arg11[%c0_166, %c0_167, %c0_168] : memref<8x8x384xf32, #tpu.memory_space<vmem>>, vector<8x8x384xf32>
    tpu.vector_store %arg11[%c0_166, %c0_167, %c0_168], %520 {strides = array<i32>} : memref<8x8x384xf32, #tpu.memory_space<vmem>>, vector<8x8x384xf32>,
    %c2_169 = arith.constant 2 : index
    %c0_170 = arith.constant 0 : index
    %c0_171 = arith.constant 0 : index
    %522 = vector.load %arg4[%c2_169, %c0_170, %c0_171] : memref<3x128x384xf32, #tpu.memory_space<vmem>>, vector<1x128x384xf32>
    %523 = vector.shape_cast %522 : vector<1x128x384xf32> to vector<128x384xf32>
    %c2_172 = arith.constant 2 : index
    %c0_173 = arith.constant 0 : index
    %c0_174 = arith.constant 0 : index
    %524 = vector.load %arg6[%c2_172, %c0_173, %c0_174] : memref<3x1x128xf32, #tpu.memory_space<vmem>>, vector<1x1x128xf32>
    %525 = vector.shape_cast %524 : vector<1x1x128xf32> to vector<1x128xf32>
    %cst_175 = arith.constant 0.000000e+00 : f32
    %526 = vector.broadcast %cst_175 : f32 to vector<8x128xf32>
    %c0_i32_176 = arith.constant 0 : i32
    %527 = arith.index_cast %c0_i32_176 : i32 to index
    %c0_177 = arith.constant 0 : index
    %c0_178 = arith.constant 0 : index
    %528 = vector.load %arg11[%527, %c0_177, %c0_178] : memref<8x8x384xf32, #tpu.memory_space<vmem>>, vector<1x8x384xf32>
    %529 = vector.shape_cast %528 : vector<1x8x384xf32> to vector<8x384xf32>
    %cst_179 = arith.constant dense<0.000000e+00> : vector<8x384xf32>
    %530 = tpu.matmul %526, %523, %cst_179 {dimension_numbers = #tpu.dot_dimension_numbers<[1], [0], [0], [1], [0, 0, 1, 1], [], []>} : vector<8x128xf32>, vector<128x384xf32>, vector<8x384xf32> -> vector<8x384xf32>
    %531 = vector.extract_strided_slice %529 {offsets = [0, 0], sizes = [8, 256], strides = [1, 1]} : vector<8x384xf32> to vector<8x256xf32>
    %532 = vector.extract_strided_slice %530 {offsets = [0, 0], sizes = [8, 256], strides = [1, 1]} : vector<8x384xf32> to vector<8x256xf32>
    %533 = arith.addf %531, %532 : vector<8x256xf32>
    %534 = arith.negf %533 : vector<8x256xf32>
    %535 = math.exp %534 : vector<8x256xf32>
    %cst_180 = arith.constant 1.000000e+00 : f32
    %536 = vector.broadcast %cst_180 : f32 to vector<8x256xf32>
    %537 = arith.addf %536, %535 : vector<8x256xf32>
    %538 = arith.divf %536, %537 : vector<8x256xf32>
    %539 = vector.extract_strided_slice %538 {offsets = [0, 0], sizes = [8, 128], strides = [1, 1]} : vector<8x256xf32> to vector<8x128xf32>
    %540 = vector.extract_strided_slice %538 {offsets = [0, 128], sizes = [8, 128], strides = [1, 1]} : vector<8x256xf32> to vector<8x128xf32>
    %541 = vector.extract_strided_slice %529 {offsets = [0, 256], sizes = [8, 128], strides = [1, 1]} : vector<8x384xf32> to vector<8x128xf32>
    %542 = vector.extract_strided_slice %530 {offsets = [0, 256], sizes = [8, 128], strides = [1, 1]} : vector<8x384xf32> to vector<8x128xf32>
    %543 = vector.broadcast %525 : vector<1x128xf32> to vector<8x128xf32>
    %544 = arith.addf %542, %543 : vector<8x128xf32>
    %545 = arith.mulf %539, %544 : vector<8x128xf32>
    %546 = arith.addf %541, %545 : vector<8x128xf32>
    %547 = math.tanh %546 : vector<8x128xf32>
    %cst_181 = arith.constant 1.000000e+00 : f32
    %548 = vector.broadcast %cst_181 : f32 to vector<8x128xf32>
    %549 = arith.subf %548, %540 : vector<8x128xf32>
    %550 = arith.mulf %549, %547 : vector<8x128xf32>
    %551 = arith.mulf %540, %526 : vector<8x128xf32>
    %552 = arith.addf %550, %551 : vector<8x128xf32>
    %553 = arith.index_cast %c0_i32_176 : i32 to index
    %c0_182 = arith.constant 0 : index
    %c0_183 = arith.constant 0 : index
    %554 = vector.load %arg10[%553, %c0_182, %c0_183] : memref<8x8x128xf32, #tpu.memory_space<vmem>>, vector<1x8x128xf32>
    %555 = vector.shape_cast %554 : vector<1x8x128xf32> to vector<8x128xf32>
    %556 = vector.shape_cast %552 : vector<8x128xf32> to vector<1x8x128xf32>
    tpu.vector_store %arg10[%553, %c0_182, %c0_183], %556 {strides = array<i32>} : memref<8x8x128xf32, #tpu.memory_space<vmem>>, vector<1x8x128xf32>,
    %c1_i32_184 = arith.constant 1 : i32
    %557 = arith.index_cast %c1_i32_184 : i32 to index
    %c0_185 = arith.constant 0 : index
    %c0_186 = arith.constant 0 : index
    %558 = vector.load %arg11[%557, %c0_185, %c0_186] : memref<8x8x384xf32, #tpu.memory_space<vmem>>, vector<1x8x384xf32>
    %559 = vector.shape_cast %558 : vector<1x8x384xf32> to vector<8x384xf32>
    %cst_187 = arith.constant dense<0.000000e+00> : vector<8x384xf32>
    %560 = tpu.matmul %552, %523, %cst_187 {dimension_numbers = #tpu.dot_dimension_numbers<[1], [0], [0], [1], [0, 0, 1, 1], [], []>} : vector<8x128xf32>, vector<128x384xf32>, vector<8x384xf32> -> vector<8x384xf32>
    %561 = vector.extract_strided_slice %559 {offsets = [0, 0], sizes = [8, 256], strides = [1, 1]} : vector<8x384xf32> to vector<8x256xf32>
    %562 = vector.extract_strided_slice %560 {offsets = [0, 0], sizes = [8, 256], strides = [1, 1]} : vector<8x384xf32> to vector<8x256xf32>
    %563 = arith.addf %561, %562 : vector<8x256xf32>
    %564 = arith.negf %563 : vector<8x256xf32>
    %565 = math.exp %564 : vector<8x256xf32>
    %cst_188 = arith.constant 1.000000e+00 : f32
    %566 = vector.broadcast %cst_188 : f32 to vector<8x256xf32>
    %567 = arith.addf %566, %565 : vector<8x256xf32>
    %568 = arith.divf %566, %567 : vector<8x256xf32>
    %569 = vector.extract_strided_slice %568 {offsets = [0, 0], sizes = [8, 128], strides = [1, 1]} : vector<8x256xf32> to vector<8x128xf32>
    %570 = vector.extract_strided_slice %568 {offsets = [0, 128], sizes = [8, 128], strides = [1, 1]} : vector<8x256xf32> to vector<8x128xf32>
    %571 = vector.extract_strided_slice %559 {offsets = [0, 256], sizes = [8, 128], strides = [1, 1]} : vector<8x384xf32> to vector<8x128xf32>
    %572 = vector.extract_strided_slice %560 {offsets = [0, 256], sizes = [8, 128], strides = [1, 1]} : vector<8x384xf32> to vector<8x128xf32>
    %573 = vector.broadcast %525 : vector<1x128xf32> to vector<8x128xf32>
    %574 = arith.addf %572, %573 : vector<8x128xf32>
    %575 = arith.mulf %569, %574 : vector<8x128xf32>
    %576 = arith.addf %571, %575 : vector<8x128xf32>
    %577 = math.tanh %576 : vector<8x128xf32>
    %cst_189 = arith.constant 1.000000e+00 : f32
    %578 = vector.broadcast %cst_189 : f32 to vector<8x128xf32>
    %579 = arith.subf %578, %570 : vector<8x128xf32>
    %580 = arith.mulf %579, %577 : vector<8x128xf32>
    %581 = arith.mulf %570, %552 : vector<8x128xf32>
    %582 = arith.addf %580, %581 : vector<8x128xf32>
    %583 = arith.index_cast %c1_i32_184 : i32 to index
    %c0_190 = arith.constant 0 : index
    %c0_191 = arith.constant 0 : index
    %584 = vector.load %arg10[%583, %c0_190, %c0_191] : memref<8x8x128xf32, #tpu.memory_space<vmem>>, vector<1x8x128xf32>
    %585 = vector.shape_cast %584 : vector<1x8x128xf32> to vector<8x128xf32>
    %586 = vector.shape_cast %582 : vector<8x128xf32> to vector<1x8x128xf32>
    tpu.vector_store %arg10[%583, %c0_190, %c0_191], %586 {strides = array<i32>} : memref<8x8x128xf32, #tpu.memory_space<vmem>>, vector<1x8x128xf32>,
    %c2_i32_192 = arith.constant 2 : i32
    %587 = arith.index_cast %c2_i32_192 : i32 to index
    %c0_193 = arith.constant 0 : index
    %c0_194 = arith.constant 0 : index
    %588 = vector.load %arg11[%587, %c0_193, %c0_194] : memref<8x8x384xf32, #tpu.memory_space<vmem>>, vector<1x8x384xf32>
    %589 = vector.shape_cast %588 : vector<1x8x384xf32> to vector<8x384xf32>
    %cst_195 = arith.constant dense<0.000000e+00> : vector<8x384xf32>
    %590 = tpu.matmul %582, %523, %cst_195 {dimension_numbers = #tpu.dot_dimension_numbers<[1], [0], [0], [1], [0, 0, 1, 1], [], []>} : vector<8x128xf32>, vector<128x384xf32>, vector<8x384xf32> -> vector<8x384xf32>
    %591 = vector.extract_strided_slice %589 {offsets = [0, 0], sizes = [8, 256], strides = [1, 1]} : vector<8x384xf32> to vector<8x256xf32>
    %592 = vector.extract_strided_slice %590 {offsets = [0, 0], sizes = [8, 256], strides = [1, 1]} : vector<8x384xf32> to vector<8x256xf32>
    %593 = arith.addf %591, %592 : vector<8x256xf32>
    %594 = arith.negf %593 : vector<8x256xf32>
    %595 = math.exp %594 : vector<8x256xf32>
    %cst_196 = arith.constant 1.000000e+00 : f32
    %596 = vector.broadcast %cst_196 : f32 to vector<8x256xf32>
    %597 = arith.addf %596, %595 : vector<8x256xf32>
    %598 = arith.divf %596, %597 : vector<8x256xf32>
    %599 = vector.extract_strided_slice %598 {offsets = [0, 0], sizes = [8, 128], strides = [1, 1]} : vector<8x256xf32> to vector<8x128xf32>
    %600 = vector.extract_strided_slice %598 {offsets = [0, 128], sizes = [8, 128], strides = [1, 1]} : vector<8x256xf32> to vector<8x128xf32>
    %601 = vector.extract_strided_slice %589 {offsets = [0, 256], sizes = [8, 128], strides = [1, 1]} : vector<8x384xf32> to vector<8x128xf32>
    %602 = vector.extract_strided_slice %590 {offsets = [0, 256], sizes = [8, 128], strides = [1, 1]} : vector<8x384xf32> to vector<8x128xf32>
    %603 = vector.broadcast %525 : vector<1x128xf32> to vector<8x128xf32>
    %604 = arith.addf %602, %603 : vector<8x128xf32>
    %605 = arith.mulf %599, %604 : vector<8x128xf32>
    %606 = arith.addf %601, %605 : vector<8x128xf32>
    %607 = math.tanh %606 : vector<8x128xf32>
    %cst_197 = arith.constant 1.000000e+00 : f32
    %608 = vector.broadcast %cst_197 : f32 to vector<8x128xf32>
    %609 = arith.subf %608, %600 : vector<8x128xf32>
    %610 = arith.mulf %609, %607 : vector<8x128xf32>
    %611 = arith.mulf %600, %582 : vector<8x128xf32>
    %612 = arith.addf %610, %611 : vector<8x128xf32>
    %613 = arith.index_cast %c2_i32_192 : i32 to index
    %c0_198 = arith.constant 0 : index
    %c0_199 = arith.constant 0 : index
    %614 = vector.load %arg10[%613, %c0_198, %c0_199] : memref<8x8x128xf32, #tpu.memory_space<vmem>>, vector<1x8x128xf32>
    %615 = vector.shape_cast %614 : vector<1x8x128xf32> to vector<8x128xf32>
    %616 = vector.shape_cast %612 : vector<8x128xf32> to vector<1x8x128xf32>
    tpu.vector_store %arg10[%613, %c0_198, %c0_199], %616 {strides = array<i32>} : memref<8x8x128xf32, #tpu.memory_space<vmem>>, vector<1x8x128xf32>,
    %c3_i32_200 = arith.constant 3 : i32
    %617 = arith.index_cast %c3_i32_200 : i32 to index
    %c0_201 = arith.constant 0 : index
    %c0_202 = arith.constant 0 : index
    %618 = vector.load %arg11[%617, %c0_201, %c0_202] : memref<8x8x384xf32, #tpu.memory_space<vmem>>, vector<1x8x384xf32>
    %619 = vector.shape_cast %618 : vector<1x8x384xf32> to vector<8x384xf32>
    %cst_203 = arith.constant dense<0.000000e+00> : vector<8x384xf32>
    %620 = tpu.matmul %612, %523, %cst_203 {dimension_numbers = #tpu.dot_dimension_numbers<[1], [0], [0], [1], [0, 0, 1, 1], [], []>} : vector<8x128xf32>, vector<128x384xf32>, vector<8x384xf32> -> vector<8x384xf32>
    %621 = vector.extract_strided_slice %619 {offsets = [0, 0], sizes = [8, 256], strides = [1, 1]} : vector<8x384xf32> to vector<8x256xf32>
    %622 = vector.extract_strided_slice %620 {offsets = [0, 0], sizes = [8, 256], strides = [1, 1]} : vector<8x384xf32> to vector<8x256xf32>
    %623 = arith.addf %621, %622 : vector<8x256xf32>
    %624 = arith.negf %623 : vector<8x256xf32>
    %625 = math.exp %624 : vector<8x256xf32>
    %cst_204 = arith.constant 1.000000e+00 : f32
    %626 = vector.broadcast %cst_204 : f32 to vector<8x256xf32>
    %627 = arith.addf %626, %625 : vector<8x256xf32>
    %628 = arith.divf %626, %627 : vector<8x256xf32>
    %629 = vector.extract_strided_slice %628 {offsets = [0, 0], sizes = [8, 128], strides = [1, 1]} : vector<8x256xf32> to vector<8x128xf32>
    %630 = vector.extract_strided_slice %628 {offsets = [0, 128], sizes = [8, 128], strides = [1, 1]} : vector<8x256xf32> to vector<8x128xf32>
    %631 = vector.extract_strided_slice %619 {offsets = [0, 256], sizes = [8, 128], strides = [1, 1]} : vector<8x384xf32> to vector<8x128xf32>
    %632 = vector.extract_strided_slice %620 {offsets = [0, 256], sizes = [8, 128], strides = [1, 1]} : vector<8x384xf32> to vector<8x128xf32>
    %633 = vector.broadcast %525 : vector<1x128xf32> to vector<8x128xf32>
    %634 = arith.addf %632, %633 : vector<8x128xf32>
    %635 = arith.mulf %629, %634 : vector<8x128xf32>
    %636 = arith.addf %631, %635 : vector<8x128xf32>
    %637 = math.tanh %636 : vector<8x128xf32>
    %cst_205 = arith.constant 1.000000e+00 : f32
    %638 = vector.broadcast %cst_205 : f32 to vector<8x128xf32>
    %639 = arith.subf %638, %630 : vector<8x128xf32>
    %640 = arith.mulf %639, %637 : vector<8x128xf32>
    %641 = arith.mulf %630, %612 : vector<8x128xf32>
    %642 = arith.addf %640, %641 : vector<8x128xf32>
    %643 = arith.index_cast %c3_i32_200 : i32 to index
    %c0_206 = arith.constant 0 : index
    %c0_207 = arith.constant 0 : index
    %644 = vector.load %arg10[%643, %c0_206, %c0_207] : memref<8x8x128xf32, #tpu.memory_space<vmem>>, vector<1x8x128xf32>
    %645 = vector.shape_cast %644 : vector<1x8x128xf32> to vector<8x128xf32>
    %646 = vector.shape_cast %642 : vector<8x128xf32> to vector<1x8x128xf32>
    tpu.vector_store %arg10[%643, %c0_206, %c0_207], %646 {strides = array<i32>} : memref<8x8x128xf32, #tpu.memory_space<vmem>>, vector<1x8x128xf32>,
    %c4_i32_208 = arith.constant 4 : i32
    %647 = arith.index_cast %c4_i32_208 : i32 to index
    %c0_209 = arith.constant 0 : index
    %c0_210 = arith.constant 0 : index
    %648 = vector.load %arg11[%647, %c0_209, %c0_210] : memref<8x8x384xf32, #tpu.memory_space<vmem>>, vector<1x8x384xf32>
    %649 = vector.shape_cast %648 : vector<1x8x384xf32> to vector<8x384xf32>
    %cst_211 = arith.constant dense<0.000000e+00> : vector<8x384xf32>
    %650 = tpu.matmul %642, %523, %cst_211 {dimension_numbers = #tpu.dot_dimension_numbers<[1], [0], [0], [1], [0, 0, 1, 1], [], []>} : vector<8x128xf32>, vector<128x384xf32>, vector<8x384xf32> -> vector<8x384xf32>
    %651 = vector.extract_strided_slice %649 {offsets = [0, 0], sizes = [8, 256], strides = [1, 1]} : vector<8x384xf32> to vector<8x256xf32>
    %652 = vector.extract_strided_slice %650 {offsets = [0, 0], sizes = [8, 256], strides = [1, 1]} : vector<8x384xf32> to vector<8x256xf32>
    %653 = arith.addf %651, %652 : vector<8x256xf32>
    %654 = arith.negf %653 : vector<8x256xf32>
    %655 = math.exp %654 : vector<8x256xf32>
    %cst_212 = arith.constant 1.000000e+00 : f32
    %656 = vector.broadcast %cst_212 : f32 to vector<8x256xf32>
    %657 = arith.addf %656, %655 : vector<8x256xf32>
    %658 = arith.divf %656, %657 : vector<8x256xf32>
    %659 = vector.extract_strided_slice %658 {offsets = [0, 0], sizes = [8, 128], strides = [1, 1]} : vector<8x256xf32> to vector<8x128xf32>
    %660 = vector.extract_strided_slice %658 {offsets = [0, 128], sizes = [8, 128], strides = [1, 1]} : vector<8x256xf32> to vector<8x128xf32>
    %661 = vector.extract_strided_slice %649 {offsets = [0, 256], sizes = [8, 128], strides = [1, 1]} : vector<8x384xf32> to vector<8x128xf32>
    %662 = vector.extract_strided_slice %650 {offsets = [0, 256], sizes = [8, 128], strides = [1, 1]} : vector<8x384xf32> to vector<8x128xf32>
    %663 = vector.broadcast %525 : vector<1x128xf32> to vector<8x128xf32>
    %664 = arith.addf %662, %663 : vector<8x128xf32>
    %665 = arith.mulf %659, %664 : vector<8x128xf32>
    %666 = arith.addf %661, %665 : vector<8x128xf32>
    %667 = math.tanh %666 : vector<8x128xf32>
    %cst_213 = arith.constant 1.000000e+00 : f32
    %668 = vector.broadcast %cst_213 : f32 to vector<8x128xf32>
    %669 = arith.subf %668, %660 : vector<8x128xf32>
    %670 = arith.mulf %669, %667 : vector<8x128xf32>
    %671 = arith.mulf %660, %642 : vector<8x128xf32>
    %672 = arith.addf %670, %671 : vector<8x128xf32>
    %673 = arith.index_cast %c4_i32_208 : i32 to index
    %c0_214 = arith.constant 0 : index
    %c0_215 = arith.constant 0 : index
    %674 = vector.load %arg10[%673, %c0_214, %c0_215] : memref<8x8x128xf32, #tpu.memory_space<vmem>>, vector<1x8x128xf32>
    %675 = vector.shape_cast %674 : vector<1x8x128xf32> to vector<8x128xf32>
    %676 = vector.shape_cast %672 : vector<8x128xf32> to vector<1x8x128xf32>
    tpu.vector_store %arg10[%673, %c0_214, %c0_215], %676 {strides = array<i32>} : memref<8x8x128xf32, #tpu.memory_space<vmem>>, vector<1x8x128xf32>,
    %c5_i32_216 = arith.constant 5 : i32
    %677 = arith.index_cast %c5_i32_216 : i32 to index
    %c0_217 = arith.constant 0 : index
    %c0_218 = arith.constant 0 : index
    %678 = vector.load %arg11[%677, %c0_217, %c0_218] : memref<8x8x384xf32, #tpu.memory_space<vmem>>, vector<1x8x384xf32>
    %679 = vector.shape_cast %678 : vector<1x8x384xf32> to vector<8x384xf32>
    %cst_219 = arith.constant dense<0.000000e+00> : vector<8x384xf32>
    %680 = tpu.matmul %672, %523, %cst_219 {dimension_numbers = #tpu.dot_dimension_numbers<[1], [0], [0], [1], [0, 0, 1, 1], [], []>} : vector<8x128xf32>, vector<128x384xf32>, vector<8x384xf32> -> vector<8x384xf32>
    %681 = vector.extract_strided_slice %679 {offsets = [0, 0], sizes = [8, 256], strides = [1, 1]} : vector<8x384xf32> to vector<8x256xf32>
    %682 = vector.extract_strided_slice %680 {offsets = [0, 0], sizes = [8, 256], strides = [1, 1]} : vector<8x384xf32> to vector<8x256xf32>
    %683 = arith.addf %681, %682 : vector<8x256xf32>
    %684 = arith.negf %683 : vector<8x256xf32>
    %685 = math.exp %684 : vector<8x256xf32>
    %cst_220 = arith.constant 1.000000e+00 : f32
    %686 = vector.broadcast %cst_220 : f32 to vector<8x256xf32>
    %687 = arith.addf %686, %685 : vector<8x256xf32>
    %688 = arith.divf %686, %687 : vector<8x256xf32>
    %689 = vector.extract_strided_slice %688 {offsets = [0, 0], sizes = [8, 128], strides = [1, 1]} : vector<8x256xf32> to vector<8x128xf32>
    %690 = vector.extract_strided_slice %688 {offsets = [0, 128], sizes = [8, 128], strides = [1, 1]} : vector<8x256xf32> to vector<8x128xf32>
    %691 = vector.extract_strided_slice %679 {offsets = [0, 256], sizes = [8, 128], strides = [1, 1]} : vector<8x384xf32> to vector<8x128xf32>
    %692 = vector.extract_strided_slice %680 {offsets = [0, 256], sizes = [8, 128], strides = [1, 1]} : vector<8x384xf32> to vector<8x128xf32>
    %693 = vector.broadcast %525 : vector<1x128xf32> to vector<8x128xf32>
    %694 = arith.addf %692, %693 : vector<8x128xf32>
    %695 = arith.mulf %689, %694 : vector<8x128xf32>
    %696 = arith.addf %691, %695 : vector<8x128xf32>
    %697 = math.tanh %696 : vector<8x128xf32>
    %cst_221 = arith.constant 1.000000e+00 : f32
    %698 = vector.broadcast %cst_221 : f32 to vector<8x128xf32>
    %699 = arith.subf %698, %690 : vector<8x128xf32>
    %700 = arith.mulf %699, %697 : vector<8x128xf32>
    %701 = arith.mulf %690, %672 : vector<8x128xf32>
    %702 = arith.addf %700, %701 : vector<8x128xf32>
    %703 = arith.index_cast %c5_i32_216 : i32 to index
    %c0_222 = arith.constant 0 : index
    %c0_223 = arith.constant 0 : index
    %704 = vector.load %arg10[%703, %c0_222, %c0_223] : memref<8x8x128xf32, #tpu.memory_space<vmem>>, vector<1x8x128xf32>
    %705 = vector.shape_cast %704 : vector<1x8x128xf32> to vector<8x128xf32>
    %706 = vector.shape_cast %702 : vector<8x128xf32> to vector<1x8x128xf32>
    tpu.vector_store %arg10[%703, %c0_222, %c0_223], %706 {strides = array<i32>} : memref<8x8x128xf32, #tpu.memory_space<vmem>>, vector<1x8x128xf32>,
    %c6_i32_224 = arith.constant 6 : i32
    %707 = arith.index_cast %c6_i32_224 : i32 to index
    %c0_225 = arith.constant 0 : index
    %c0_226 = arith.constant 0 : index
    %708 = vector.load %arg11[%707, %c0_225, %c0_226] : memref<8x8x384xf32, #tpu.memory_space<vmem>>, vector<1x8x384xf32>
    %709 = vector.shape_cast %708 : vector<1x8x384xf32> to vector<8x384xf32>
    %cst_227 = arith.constant dense<0.000000e+00> : vector<8x384xf32>
    %710 = tpu.matmul %702, %523, %cst_227 {dimension_numbers = #tpu.dot_dimension_numbers<[1], [0], [0], [1], [0, 0, 1, 1], [], []>} : vector<8x128xf32>, vector<128x384xf32>, vector<8x384xf32> -> vector<8x384xf32>
    %711 = vector.extract_strided_slice %709 {offsets = [0, 0], sizes = [8, 256], strides = [1, 1]} : vector<8x384xf32> to vector<8x256xf32>
    %712 = vector.extract_strided_slice %710 {offsets = [0, 0], sizes = [8, 256], strides = [1, 1]} : vector<8x384xf32> to vector<8x256xf32>
    %713 = arith.addf %711, %712 : vector<8x256xf32>
    %714 = arith.negf %713 : vector<8x256xf32>
    %715 = math.exp %714 : vector<8x256xf32>
    %cst_228 = arith.constant 1.000000e+00 : f32
    %716 = vector.broadcast %cst_228 : f32 to vector<8x256xf32>
    %717 = arith.addf %716, %715 : vector<8x256xf32>
    %718 = arith.divf %716, %717 : vector<8x256xf32>
    %719 = vector.extract_strided_slice %718 {offsets = [0, 0], sizes = [8, 128], strides = [1, 1]} : vector<8x256xf32> to vector<8x128xf32>
    %720 = vector.extract_strided_slice %718 {offsets = [0, 128], sizes = [8, 128], strides = [1, 1]} : vector<8x256xf32> to vector<8x128xf32>
    %721 = vector.extract_strided_slice %709 {offsets = [0, 256], sizes = [8, 128], strides = [1, 1]} : vector<8x384xf32> to vector<8x128xf32>
    %722 = vector.extract_strided_slice %710 {offsets = [0, 256], sizes = [8, 128], strides = [1, 1]} : vector<8x384xf32> to vector<8x128xf32>
    %723 = vector.broadcast %525 : vector<1x128xf32> to vector<8x128xf32>
    %724 = arith.addf %722, %723 : vector<8x128xf32>
    %725 = arith.mulf %719, %724 : vector<8x128xf32>
    %726 = arith.addf %721, %725 : vector<8x128xf32>
    %727 = math.tanh %726 : vector<8x128xf32>
    %cst_229 = arith.constant 1.000000e+00 : f32
    %728 = vector.broadcast %cst_229 : f32 to vector<8x128xf32>
    %729 = arith.subf %728, %720 : vector<8x128xf32>
    %730 = arith.mulf %729, %727 : vector<8x128xf32>
    %731 = arith.mulf %720, %702 : vector<8x128xf32>
    %732 = arith.addf %730, %731 : vector<8x128xf32>
    %733 = arith.index_cast %c6_i32_224 : i32 to index
    %c0_230 = arith.constant 0 : index
    %c0_231 = arith.constant 0 : index
    %734 = vector.load %arg10[%733, %c0_230, %c0_231] : memref<8x8x128xf32, #tpu.memory_space<vmem>>, vector<1x8x128xf32>
    %735 = vector.shape_cast %734 : vector<1x8x128xf32> to vector<8x128xf32>
    %736 = vector.shape_cast %732 : vector<8x128xf32> to vector<1x8x128xf32>
    tpu.vector_store %arg10[%733, %c0_230, %c0_231], %736 {strides = array<i32>} : memref<8x8x128xf32, #tpu.memory_space<vmem>>, vector<1x8x128xf32>,
    %c7_i32_232 = arith.constant 7 : i32
    %737 = arith.index_cast %c7_i32_232 : i32 to index
    %c0_233 = arith.constant 0 : index
    %c0_234 = arith.constant 0 : index
    %738 = vector.load %arg11[%737, %c0_233, %c0_234] : memref<8x8x384xf32, #tpu.memory_space<vmem>>, vector<1x8x384xf32>
    %739 = vector.shape_cast %738 : vector<1x8x384xf32> to vector<8x384xf32>
    %cst_235 = arith.constant dense<0.000000e+00> : vector<8x384xf32>
    %740 = tpu.matmul %732, %523, %cst_235 {dimension_numbers = #tpu.dot_dimension_numbers<[1], [0], [0], [1], [0, 0, 1, 1], [], []>} : vector<8x128xf32>, vector<128x384xf32>, vector<8x384xf32> -> vector<8x384xf32>
    %741 = vector.extract_strided_slice %739 {offsets = [0, 0], sizes = [8, 256], strides = [1, 1]} : vector<8x384xf32> to vector<8x256xf32>
    %742 = vector.extract_strided_slice %740 {offsets = [0, 0], sizes = [8, 256], strides = [1, 1]} : vector<8x384xf32> to vector<8x256xf32>
    %743 = arith.addf %741, %742 : vector<8x256xf32>
    %744 = arith.negf %743 : vector<8x256xf32>
    %745 = math.exp %744 : vector<8x256xf32>
    %cst_236 = arith.constant 1.000000e+00 : f32
    %746 = vector.broadcast %cst_236 : f32 to vector<8x256xf32>
    %747 = arith.addf %746, %745 : vector<8x256xf32>
    %748 = arith.divf %746, %747 : vector<8x256xf32>
    %749 = vector.extract_strided_slice %748 {offsets = [0, 0], sizes = [8, 128], strides = [1, 1]} : vector<8x256xf32> to vector<8x128xf32>
    %750 = vector.extract_strided_slice %748 {offsets = [0, 128], sizes = [8, 128], strides = [1, 1]} : vector<8x256xf32> to vector<8x128xf32>
    %751 = vector.extract_strided_slice %739 {offsets = [0, 256], sizes = [8, 128], strides = [1, 1]} : vector<8x384xf32> to vector<8x128xf32>
    %752 = vector.extract_strided_slice %740 {offsets = [0, 256], sizes = [8, 128], strides = [1, 1]} : vector<8x384xf32> to vector<8x128xf32>
    %753 = vector.broadcast %525 : vector<1x128xf32> to vector<8x128xf32>
    %754 = arith.addf %752, %753 : vector<8x128xf32>
    %755 = arith.mulf %749, %754 : vector<8x128xf32>
    %756 = arith.addf %751, %755 : vector<8x128xf32>
    %757 = math.tanh %756 : vector<8x128xf32>
    %cst_237 = arith.constant 1.000000e+00 : f32
    %758 = vector.broadcast %cst_237 : f32 to vector<8x128xf32>
    %759 = arith.subf %758, %750 : vector<8x128xf32>
    %760 = arith.mulf %759, %757 : vector<8x128xf32>
    %761 = arith.mulf %750, %732 : vector<8x128xf32>
    %762 = arith.addf %760, %761 : vector<8x128xf32>
    %763 = arith.index_cast %c7_i32_232 : i32 to index
    %c0_238 = arith.constant 0 : index
    %c0_239 = arith.constant 0 : index
    %764 = vector.load %arg10[%763, %c0_238, %c0_239] : memref<8x8x128xf32, #tpu.memory_space<vmem>>, vector<1x8x128xf32>
    %765 = vector.shape_cast %764 : vector<1x8x128xf32> to vector<8x128xf32>
    %766 = vector.shape_cast %762 : vector<8x128xf32> to vector<1x8x128xf32>
    tpu.vector_store %arg10[%763, %c0_238, %c0_239], %766 {strides = array<i32>} : memref<8x8x128xf32, #tpu.memory_space<vmem>>, vector<1x8x128xf32>,
    %c8_i32_240 = arith.constant 8 : i32
    %c0_241 = arith.constant 0 : index
    %c0_242 = arith.constant 0 : index
    %c0_243 = arith.constant 0 : index
    %767 = vector.load %arg10[%c0_241, %c0_242, %c0_243] : memref<8x8x128xf32, #tpu.memory_space<vmem>>, vector<8x8x128xf32>
    %768 = vector.shape_cast %767 : vector<8x8x128xf32> to vector<64x128xf32>
    %c0_244 = arith.constant 0 : index
    %c0_245 = arith.constant 0 : index
    %769 = vector.load %arg7[%c0_244, %c0_245] : memref<128x128xf32, #tpu.memory_space<vmem>>, vector<128x128xf32>
    %cst_246 = arith.constant dense<0.000000e+00> : vector<64x128xf32>
    %770 = tpu.matmul %768, %769, %cst_246 {dimension_numbers = #tpu.dot_dimension_numbers<[1], [0], [0], [1], [0, 0, 1, 1], [], []>} : vector<64x128xf32>, vector<128x128xf32>, vector<64x128xf32> -> vector<64x128xf32>
    %c0_247 = arith.constant 0 : index
    %c0_248 = arith.constant 0 : index
    %771 = vector.load %arg8[%c0_247, %c0_248] : memref<1x128xf32, #tpu.memory_space<vmem>>, vector<1x128xf32>
    %772 = vector.broadcast %771 : vector<1x128xf32> to vector<64x128xf32>
    %773 = arith.addf %770, %772 : vector<64x128xf32>
    %774 = vector.shape_cast %773 : vector<64x128xf32> to vector<8x8x128xf32>
    %c0_249 = arith.constant 0 : index
    %c0_250 = arith.constant 0 : index
    %c0_251 = arith.constant 0 : index
    %775 = vector.load %arg9[%c0_249, %c0_250, %c0_251] : memref<8x8x128xf32, #tpu.memory_space<vmem>>, vector<8x8x128xf32>
    tpu.vector_store %arg9[%c0_249, %c0_250, %c0_251], %774 {strides = array<i32>} : memref<8x8x128xf32, #tpu.memory_space<vmem>>, vector<8x8x128xf32>,
    return
  }
  func.func @transform_0(%arg0: i32) -> (i32, i32, i32) {
    %c0_i32 = arith.constant 0 : i32
    %c0_i32_0 = arith.constant 0 : i32
    %c0_i32_1 = arith.constant 0 : i32
    return %c0_i32, %arg0, %c0_i32_0 : i32, i32, i32
  }
  func.func @transform_1(%arg0: i32) -> (i32, i32) {
    %c0_i32 = arith.constant 0 : i32
    %c0_i32_0 = arith.constant 0 : i32
    %c0_i32_1 = arith.constant 0 : i32
    return %c0_i32, %c0_i32_0 : i32, i32
  }
  func.func @transform_2(%arg0: i32) -> (i32, i32, i32) {
    %c0_i32 = arith.constant 0 : i32
    %c0_i32_0 = arith.constant 0 : i32
    %c0_i32_1 = arith.constant 0 : i32
    %c0_i32_2 = arith.constant 0 : i32
    return %c0_i32, %c0_i32_0, %c0_i32_1 : i32, i32, i32
  }
  func.func @transform_3(%arg0: i32) -> (i32, i32, i32) {
    %c0_i32 = arith.constant 0 : i32
    %c0_i32_0 = arith.constant 0 : i32
    %c0_i32_1 = arith.constant 0 : i32
    %c0_i32_2 = arith.constant 0 : i32
    return %c0_i32, %c0_i32_0, %c0_i32_1 : i32, i32, i32
  }
  func.func @transform_4(%arg0: i32) -> (i32, i32, i32) {
    %c0_i32 = arith.constant 0 : i32
    %c0_i32_0 = arith.constant 0 : i32
    %c0_i32_1 = arith.constant 0 : i32
    %c0_i32_2 = arith.constant 0 : i32
    return %c0_i32, %c0_i32_0, %c0_i32_1 : i32, i32, i32
  }
  func.func @transform_5(%arg0: i32) -> (i32, i32, i32) {
    %c0_i32 = arith.constant 0 : i32
    %c0_i32_0 = arith.constant 0 : i32
    %c0_i32_1 = arith.constant 0 : i32
    %c0_i32_2 = arith.constant 0 : i32
    return %c0_i32, %c0_i32_0, %c0_i32_1 : i32, i32, i32
  }
  func.func @transform_6(%arg0: i32) -> (i32, i32) {
    %c0_i32 = arith.constant 0 : i32
    %c0_i32_0 = arith.constant 0 : i32
    %c0_i32_1 = arith.constant 0 : i32
    return %c0_i32, %c0_i32_0 : i32, i32
  }
  func.func @transform_7(%arg0: i32) -> (i32, i32) {
    %c0_i32 = arith.constant 0 : i32
    %c0_i32_0 = arith.constant 0 : i32
    %c0_i32_1 = arith.constant 0 : i32
    return %c0_i32, %c0_i32_0 : i32, i32
  }
  func.func @transform_8(%arg0: i32) -> (i32, i32, i32) {
    %c0_i32 = arith.constant 0 : i32
    %c0_i32_0 = arith.constant 0 : i32
    %c0_i32_1 = arith.constant 0 : i32
    return %c0_i32, %arg0, %c0_i32_0 : i32, i32, i32
  }
}

</mosaic_0001>

<llo_original>
// kernel: recurrent_collaborative_forward.1
$region0: #{recurrent_collaborative_forward.1}
  #allocation0 [shape = 'u32[]', space=smem, size = 0x4, offset = 0x4, fixed_abs, tag = 'smem constant byte address 0x4 - core index']
  #allocation1 [shape = 'u32[72,128]{1,0:T(1,128)}', space=vmem, size = 0x9000, scoped, tag = 'internal scratch']
  #allocation2 [shape = 'f32[8,8,128]{2,1,0:T(8,128)}', space=vmem, size = 0x8000, scoped, tag = 'scratch operand']
  #allocation3 [shape = 'f32[8,8,384]{2,1,0:T(8,128)}', space=vmem, size = 0x18000, scoped, tag = 'scratch operand']
  %s0 = inlined_call_operand.vmem [shape: f32[8,8,128], index: 0, kind: input, shape index: {}]
  %s1 = inlined_call_operand.vmem [shape: f32[128,384], index: 1, kind: input, shape index: {}]
  %s2 = inlined_call_operand.vmem [shape: f32[2,128,384], index: 2, kind: input, shape index: {}]
  %s3 = inlined_call_operand.vmem [shape: f32[3,128,384], index: 3, kind: input, shape index: {}]
  %s4 = inlined_call_operand.vmem [shape: f32[3,1,384], index: 4, kind: input, shape index: {}]
  %s5 = inlined_call_operand.vmem [shape: f32[3,1,128], index: 5, kind: input, shape index: {}]
  %s6 = inlined_call_operand.vmem [shape: f32[128,128], index: 6, kind: input, shape index: {}]
  %s7 = inlined_call_operand.vmem [shape: f32[1,128], index: 7, kind: input, shape index: {}]
  %s8 = inlined_call_operand.vmem [shape: f32[8,8,128], index: 8, kind: output, shape index: {}]
  %s9 = sld [smem:[#allocation0]]
  $region42: #{recurrent_collaborative_forward.1} parent=0
    _
  %s11 = ssub.s32 1, %s9
  %s12 = scalar_select 0, %s11, %s9
  // Predicated region
  $region2: #{recurrent_collaborative_forward.1} parent=0 // pred_check
    _
  $region3: #{recurrent_collaborative_forward.1} parent=0 // pred_check_branch
    %14 = sbr.rel (0) target = $region5
  $region4: #{recurrent_collaborative_forward.1} parent=0 // pred_region
    _
  $region5: #{recurrent_collaborative_forward.1} parent=0 // pred_fallthru
    _
  // Predicated region
  $region6: #{recurrent_collaborative_forward.1} parent=0 // pred_check
    _
  $region7: #{recurrent_collaborative_forward.1} parent=0 // pred_check_branch
    %16 = sbr.rel (0) target = $region9
  $region8: #{recurrent_collaborative_forward.1} parent=0 // pred_region
    _
  $region9: #{recurrent_collaborative_forward.1} parent=0 // pred_fallthru
    _
  // Predicated region
  $region10: #{recurrent_collaborative_forward.1} parent=0 // pred_check
    _
  $region11: #{recurrent_collaborative_forward.1} parent=0 // pred_check_branch
    %18 = sbr.rel (0) target = $region13
  $region12: #{recurrent_collaborative_forward.1} parent=0 // pred_region
    _
  $region13: #{recurrent_collaborative_forward.1} parent=0 // pred_fallthru
    _
  // Predicated region
  $region14: #{recurrent_collaborative_forward.1} parent=0 // pred_check
    _
  $region15: #{recurrent_collaborative_forward.1} parent=0 // pred_check_branch
    %20 = sbr.rel (0) target = $region17
  $region16: #{recurrent_collaborative_forward.1} parent=0 // pred_region
    _
  $region17: #{recurrent_collaborative_forward.1} parent=0 // pred_fallthru
    _
  // Predicated region
  $region18: #{recurrent_collaborative_forward.1} parent=0 // pred_check
    _
  $region19: #{recurrent_collaborative_forward.1} parent=0 // pred_check_branch
    %22 = sbr.rel (0) target = $region21
  $region20: #{recurrent_collaborative_forward.1} parent=0 // pred_region
    _
  $region21: #{recurrent_collaborative_forward.1} parent=0 // pred_fallthru
    _
  // Predicated region
  $region22: #{recurrent_collaborative_forward.1} parent=0 // pred_check
    _
  $region23: #{recurrent_collaborative_forward.1} parent=0 // pred_check_branch
    %24 = sbr.rel (0) target = $region25
  $region24: #{recurrent_collaborative_forward.1} parent=0 // pred_region
    _
  $region25: #{recurrent_collaborative_forward.1} parent=0 // pred_fallthru
    _
  // Predicated region
  $region26: #{recurrent_collaborative_forward.1} parent=0 // pred_check
    _
  $region27: #{recurrent_collaborative_forward.1} parent=0 // pred_check_branch
    %26 = sbr.rel (0) target = $region29
  $region28: #{recurrent_collaborative_forward.1} parent=0 // pred_region
    _
  $region29: #{recurrent_collaborative_forward.1} parent=0 // pred_fallthru
    _
  // Predicated region
  $region30: #{recurrent_collaborative_forward.1} parent=0 // pred_check
    _
  $region31: #{recurrent_collaborative_forward.1} parent=0 // pred_check_branch
    %28 = sbr.rel (0) target = $region33
  $region32: #{recurrent_collaborative_forward.1} parent=0 // pred_region
    _
  $region33: #{recurrent_collaborative_forward.1} parent=0 // pred_fallthru
    _
  %v29 = vld [vmem:[%s0] sm:$0xff]
  %v30 = vld [vmem:[%s0 + $0x8] sm:$0xff]
  %v31 = vld [vmem:[%s0 + $0x10] sm:$0xff]
  %v32 = vld [vmem:[%s0 + $0x18] sm:$0xff]
  %v33 = vld [vmem:[%s0 + $0x20] sm:$0xff]
  %v34 = vld [vmem:[%s0 + $0x28] sm:$0xff]
  %v35 = vld [vmem:[%s0 + $0x30] sm:$0xff]
  %v36 = vld [vmem:[%s0 + $0x38] sm:$0xff]
  %v37 = vld [vmem:[%s1] sm:$0xff]
  %v38 = vld [vmem:[%s1 + $0x8] sm:$0xff]
  %v39 = vld [vmem:[%s1 + $0x10] sm:$0xff]
  %v40 = vld [vmem:[%s1 + $0x18] sm:$0xff]
  %v41 = vld [vmem:[%s1 + $0x20] sm:$0xff]
  %v42 = vld [vmem:[%s1 + $0x28] sm:$0xff]
  %v43 = vld [vmem:[%s1 + $0x30] sm:$0xff]
  %v44 = vld [vmem:[%s1 + $0x38] sm:$0xff]
  %v45 = vld [vmem:[%s1 + $0x40] sm:$0xff]
  %v46 = vld [vmem:[%s1 + $0x48] sm:$0xff]
  %v47 = vld [vmem:[%s1 + $0x50] sm:$0xff]
  %v48 = vld [vmem:[%s1 + $0x58] sm:$0xff]
  %v49 = vld [vmem:[%s1 + $0x60] sm:$0xff]
  %v50 = vld [vmem:[%s1 + $0x68] sm:$0xff]
  %v51 = vld [vmem:[%s1 + $0x70] sm:$0xff]
  %v52 = vld [vmem:[%s1 + $0x78] sm:$0xff]
  %v53 = vld [vmem:[%s1 + $0x80] sm:$0xff]
  %v54 = vld [vmem:[%s1 + $0x88] sm:$0xff]
  %v55 = vld [vmem:[%s1 + $0x90] sm:$0xff]
  %v56 = vld [vmem:[%s1 + $0x98] sm:$0xff]
  %v57 = vld [vmem:[%s1 + $0xa0] sm:$0xff]
  %v58 = vld [vmem:[%s1 + $0xa8] sm:$0xff]
  %v59 = vld [vmem:[%s1 + $0xb0] sm:$0xff]
  %v60 = vld [vmem:[%s1 + $0xb8] sm:$0xff]
  %v61 = vld [vmem:[%s1 + $0xc0] sm:$0xff]
  %v62 = vld [vmem:[%s1 + $0xc8] sm:$0xff]
  %v63 = vld [vmem:[%s1 + $0xd0] sm:$0xff]
  %v64 = vld [vmem:[%s1 + $0xd8] sm:$0xff]
  %v65 = vld [vmem:[%s1 + $0xe0] sm:$0xff]
  %v66 = vld [vmem:[%s1 + $0xe8] sm:$0xff]
  %v67 = vld [vmem:[%s1 + $0xf0] sm:$0xff]
  %v68 = vld [vmem:[%s1 + $0xf8] sm:$0xff]
  %v69 = vld [vmem:[%s1 + $0x100] sm:$0xff]
  %v70 = vld [vmem:[%s1 + $0x108] sm:$0xff]
  %v71 = vld [vmem:[%s1 + $0x110] sm:$0xff]
  %v72 = vld [vmem:[%s1 + $0x118] sm:$0xff]
  %v73 = vld [vmem:[%s1 + $0x120] sm:$0xff]
  %v74 = vld [vmem:[%s1 + $0x128] sm:$0xff]
  %v75 = vld [vmem:[%s1 + $0x130] sm:$0xff]
  %v76 = vld [vmem:[%s1 + $0x138] sm:$0xff]
  %v77 = vld [vmem:[%s1 + $0x140] sm:$0xff]
  %v78 = vld [vmem:[%s1 + $0x148] sm:$0xff]
  %v79 = vld [vmem:[%s1 + $0x150] sm:$0xff]
  %v80 = vld [vmem:[%s1 + $0x158] sm:$0xff]
  %v81 = vld [vmem:[%s1 + $0x160] sm:$0xff]
  %v82 = vld [vmem:[%s1 + $0x168] sm:$0xff]
  %v83 = vld [vmem:[%s1 + $0x170] sm:$0xff]
  %v84 = vld [vmem:[%s1 + $0x178] sm:$0xff]
  %v85 = vld [vmem:[%s4] sm:$0x7]
  %v87 = vperm.slane %v85, 0
  %v88 = vperm.slane %v85, 1
  %v89 = vperm.slane %v85, 2
  %93 = vmatpush.msra.mxu0 %v82
  %94 = vmatpush.msra.mxu0 %v79
  %95 = vmatpush.msra.mxu0 %v76
  %96 = vmatpush.msra.mxu0 %v73
  %97 = vmatpush.msra.mxu0 %v70
  %98 = vmatpush.msra.mxu0 %v67
  %99 = vmatpush.msra.mxu0 %v64
  %100 = vmatpush.msra.mxu0 %v61
  %101 = vmatpush.msra.mxu0 %v58
  %102 = vmatpush.msra.mxu0 %v55
  %103 = vmatpush.msra.mxu0 %v52
  %104 = vmatpush.msra.mxu0 %v49
  %105 = vmatpush.msra.mxu0 %v46
  %106 = vmatpush.msra.mxu0 %v43
  %107 = vmatpush.msra.mxu0 %v40
  %108 = vmatpush.msra.mxu0 %v37
  %109 = vmatmul.f32.gmra.mxu0 %v29
  %v110 = vpop.f32.mrf.mxu0
  %v111 = vadd.f32 %v87, %v110
  %112 = vmatmul.f32.gmra.mxu0 %v30
  %v113 = vpop.f32.mrf.mxu0
  %v114 = vadd.f32 %v87, %v113
  %115 = vmatmul.f32.gmra.mxu0 %v31
  %v116 = vpop.f32.mrf.mxu0
  %v117 = vadd.f32 %v87, %v116
  %118 = vmatmul.f32.gmra.mxu0 %v32
  %v119 = vpop.f32.mrf.mxu0
  %v120 = vadd.f32 %v87, %v119
  %121 = vmatmul.f32.gmra.mxu0 %v33
  %v122 = vpop.f32.mrf.mxu0
  %v123 = vadd.f32 %v87, %v122
  %124 = vmatmul.f32.gmra.mxu0 %v34
  %v125 = vpop.f32.mrf.mxu0
  %v126 = vadd.f32 %v87, %v125
  %127 = vmatmul.f32.gmra.mxu0 %v35
  %v128 = vpop.f32.mrf.mxu0
  %v129 = vadd.f32 %v87, %v128
  %130 = vmatmul.f32.gmra.mxu0 %v36
  %v131 = vpop.f32.mrf.mxu0
  %v132 = vadd.f32 %v87, %v131
  %133 = vdwg.mxu0
  %134 = vmatpush.msra.mxu0 %v83
  %135 = vmatpush.msra.mxu0 %v80
  %136 = vmatpush.msra.mxu0 %v77
  %137 = vmatpush.msra.mxu0 %v74
  %138 = vmatpush.msra.mxu0 %v71
  %139 = vmatpush.msra.mxu0 %v68
  %140 = vmatpush.msra.mxu0 %v65
  %141 = vmatpush.msra.mxu0 %v62
  %142 = vmatpush.msra.mxu0 %v59
  %143 = vmatpush.msra.mxu0 %v56
  %144 = vmatpush.msra.mxu0 %v53
  %145 = vmatpush.msra.mxu0 %v50
  %146 = vmatpush.msra.mxu0 %v47
  %147 = vmatpush.msra.mxu0 %v44
  %148 = vmatpush.msra.mxu0 %v41
  %149 = vmatpush.msra.mxu0 %v38
  %150 = vmatmul.f32.gmra.mxu0 %v29
  %v151 = vpop.f32.mrf.mxu0
  %v152 = vadd.f32 %v88, %v151
  %153 = vmatmul.f32.gmra.mxu0 %v30
  %v154 = vpop.f32.mrf.mxu0
  %v155 = vadd.f32 %v88, %v154
  %156 = vmatmul.f32.gmra.mxu0 %v31
  %v157 = vpop.f32.mrf.mxu0
  %v158 = vadd.f32 %v88, %v157
  %159 = vmatmul.f32.gmra.mxu0 %v32
  %v160 = vpop.f32.mrf.mxu0
  %v161 = vadd.f32 %v88, %v160
  %162 = vmatmul.f32.gmra.mxu0 %v33
  %v163 = vpop.f32.mrf.mxu0
  %v164 = vadd.f32 %v88, %v163
  %165 = vmatmul.f32.gmra.mxu0 %v34
  %v166 = vpop.f32.mrf.mxu0
  %v167 = vadd.f32 %v88, %v166
  %168 = vmatmul.f32.gmra.mxu0 %v35
  %v169 = vpop.f32.mrf.mxu0
  %v170 = vadd.f32 %v88, %v169
  %171 = vmatmul.f32.gmra.mxu0 %v36
  %v172 = vpop.f32.mrf.mxu0
  %v173 = vadd.f32 %v88, %v172
  %174 = vdwg.mxu0
  %175 = vmatpush.msra.mxu0 %v84
  %176 = vmatpush.msra.mxu0 %v81
  %177 = vmatpush.msra.mxu0 %v78
  %178 = vmatpush.msra.mxu0 %v75
  %179 = vmatpush.msra.mxu0 %v72
  %180 = vmatpush.msra.mxu0 %v69
  %181 = vmatpush.msra.mxu0 %v66
  %182 = vmatpush.msra.mxu0 %v63
  %183 = vmatpush.msra.mxu0 %v60
  %184 = vmatpush.msra.mxu0 %v57
  %185 = vmatpush.msra.mxu0 %v54
  %186 = vmatpush.msra.mxu0 %v51
  %187 = vmatpush.msra.mxu0 %v48
  %188 = vmatpush.msra.mxu0 %v45
  %189 = vmatpush.msra.mxu0 %v42
  %190 = vmatpush.msra.mxu0 %v39
  %191 = vmatmul.f32.gmra.mxu0 %v29
  %v192 = vpop.f32.mrf.mxu0
  %v193 = vadd.f32 %v89, %v192
  %194 = vmatmul.f32.gmra.mxu0 %v30
  %v195 = vpop.f32.mrf.mxu0
  %v196 = vadd.f32 %v89, %v195
  %197 = vmatmul.f32.gmra.mxu0 %v31
  %v198 = vpop.f32.mrf.mxu0
  %v199 = vadd.f32 %v89, %v198
  %200 = vmatmul.f32.gmra.mxu0 %v32
  %v201 = vpop.f32.mrf.mxu0
  %v202 = vadd.f32 %v89, %v201
  %203 = vmatmul.f32.gmra.mxu0 %v33
  %v204 = vpop.f32.mrf.mxu0
  %v205 = vadd.f32 %v89, %v204
  %206 = vmatmul.f32.gmra.mxu0 %v34
  %v207 = vpop.f32.mrf.mxu0
  %v208 = vadd.f32 %v89, %v207
  %209 = vmatmul.f32.gmra.mxu0 %v35
  %v210 = vpop.f32.mrf.mxu0
  %v211 = vadd.f32 %v89, %v210
  %212 = vmatmul.f32.gmra.mxu0 %v36
  %v213 = vpop.f32.mrf.mxu0
  %v214 = vadd.f32 %v89, %v213
  %215 = vdwg.mxu0
  %216 = vst [vmem:[#allocation3] sm:$0xff] %v111
  %217 = vst [vmem:[#allocation3 + $0x8] sm:$0xff] %v152
  %218 = vst [vmem:[#allocation3 + $0x10] sm:$0xff] %v193
  %219 = vst [vmem:[#allocation3 + $0x18] sm:$0xff] %v114
  %220 = vst [vmem:[#allocation3 + $0x20] sm:$0xff] %v155
  %221 = vst [vmem:[#allocation3 + $0x28] sm:$0xff] %v196
  %222 = vst [vmem:[#allocation3 + $0x30] sm:$0xff] %v117
  %223 = vst [vmem:[#allocation3 + $0x38] sm:$0xff] %v158
  %224 = vst [vmem:[#allocation3 + $0x40] sm:$0xff] %v199
  %225 = vst [vmem:[#allocation3 + $0x48] sm:$0xff] %v120
  %226 = vst [vmem:[#allocation3 + $0x50] sm:$0xff] %v161
  %227 = vst [vmem:[#allocation3 + $0x58] sm:$0xff] %v202
  %228 = vst [vmem:[#allocation3 + $0x60] sm:$0xff] %v123
  %229 = vst [vmem:[#allocation3 + $0x68] sm:$0xff] %v164
  %230 = vst [vmem:[#allocation3 + $0x70] sm:$0xff] %v205
  %231 = vst [vmem:[#allocation3 + $0x78] sm:$0xff] %v126
  %232 = vst [vmem:[#allocation3 + $0x80] sm:$0xff] %v167
  %233 = vst [vmem:[#allocation3 + $0x88] sm:$0xff] %v208
  %234 = vst [vmem:[#allocation3 + $0x90] sm:$0xff] %v129
  %235 = vst [vmem:[#allocation3 + $0x98] sm:$0xff] %v170
  %236 = vst [vmem:[#allocation3 + $0xa0] sm:$0xff] %v211
  %237 = vst [vmem:[#allocation3 + $0xa8] sm:$0xff] %v132
  %238 = vst [vmem:[#allocation3 + $0xb0] sm:$0xff] %v173
  %239 = vst [vmem:[#allocation3 + $0xb8] sm:$0xff] %v214
  %v240 = vld [vmem:[%s3] sm:$0xff]
  %v241 = vld [vmem:[%s3 + $0x8] sm:$0xff]
  %v242 = vld [vmem:[%s3 + $0x10] sm:$0xff]
  %v243 = vld [vmem:[%s3 + $0x18] sm:$0xff]
  %v244 = vld [vmem:[%s3 + $0x20] sm:$0xff]
  %v245 = vld [vmem:[%s3 + $0x28] sm:$0xff]
  %v246 = vld [vmem:[%s3 + $0x30] sm:$0xff]
  %v247 = vld [vmem:[%s3 + $0x38] sm:$0xff]
  %v248 = vld [vmem:[%s3 + $0x40] sm:$0xff]
  %v249 = vld [vmem:[%s3 + $0x48] sm:$0xff]
  %v250 = vld [vmem:[%s3 + $0x50] sm:$0xff]
  %v251 = vld [vmem:[%s3 + $0x58] sm:$0xff]
  %v252 = vld [vmem:[%s3 + $0x60] sm:$0xff]
  %v253 = vld [vmem:[%s3 + $0x68] sm:$0xff]
  %v254 = vld [vmem:[%s3 + $0x70] sm:$0xff]
  %v255 = vld [vmem:[%s3 + $0x78] sm:$0xff]
  %v256 = vld [vmem:[%s3 + $0x80] sm:$0xff]
  %v257 = vld [vmem:[%s3 + $0x88] sm:$0xff]
  %v258 = vld [vmem:[%s3 + $0x90] sm:$0xff]
  %v259 = vld [vmem:[%s3 + $0x98] sm:$0xff]
  %v260 = vld [vmem:[%s3 + $0xa0] sm:$0xff]
  %v261 = vld [vmem:[%s3 + $0xa8] sm:$0xff]
  %v262 = vld [vmem:[%s3 + $0xb0] sm:$0xff]
  %v263 = vld [vmem:[%s3 + $0xb8] sm:$0xff]
  %v264 = vld [vmem:[%s3 + $0xc0] sm:$0xff]
  %v265 = vld [vmem:[%s3 + $0xc8] sm:$0xff]
  %v266 = vld [vmem:[%s3 + $0xd0] sm:$0xff]
  %v267 = vld [vmem:[%s3 + $0xd8] sm:$0xff]
  %v268 = vld [vmem:[%s3 + $0xe0] sm:$0xff]
  %v269 = vld [vmem:[%s3 + $0xe8] sm:$0xff]
  %v270 = vld [vmem:[%s3 + $0xf0] sm:$0xff]
  %v271 = vld [vmem:[%s3 + $0xf8] sm:$0xff]
  %v272 = vld [vmem:[%s3 + $0x100] sm:$0xff]
  %v273 = vld [vmem:[%s3 + $0x108] sm:$0xff]
  %v274 = vld [vmem:[%s3 + $0x110] sm:$0xff]
  %v275 = vld [vmem:[%s3 + $0x118] sm:$0xff]
  %v276 = vld [vmem:[%s3 + $0x120] sm:$0xff]
  %v277 = vld [vmem:[%s3 + $0x128] sm:$0xff]
  %v278 = vld [vmem:[%s3 + $0x130] sm:$0xff]
  %v279 = vld [vmem:[%s3 + $0x138] sm:$0xff]
  %v280 = vld [vmem:[%s3 + $0x140] sm:$0xff]
  %v281 = vld [vmem:[%s3 + $0x148] sm:$0xff]
  %v282 = vld [vmem:[%s3 + $0x150] sm:$0xff]
  %v283 = vld [vmem:[%s3 + $0x158] sm:$0xff]
  %v284 = vld [vmem:[%s3 + $0x160] sm:$0xff]
  %v285 = vld [vmem:[%s3 + $0x168] sm:$0xff]
  %v286 = vld [vmem:[%s3 + $0x170] sm:$0xff]
  %v287 = vld [vmem:[%s3 + $0x178] sm:$0xff]
  %v288 = vld [vmem:[%s5] sm:$0x1]
  %v289 = vld [vmem:[#allocation3] sm:$0xff]
  %v290 = vld [vmem:[#allocation3 + $0x8] sm:$0xff]
  %v291 = vld [vmem:[#allocation3 + $0x10] sm:$0xff]
  %292 = vmatpush.msra.mxu0 %v285
  %293 = vmatpush.msra.mxu0 %v282
  %294 = vmatpush.msra.mxu0 %v279
  %295 = vmatpush.msra.mxu0 %v276
  %296 = vmatpush.msra.mxu0 %v273
  %297 = vmatpush.msra.mxu0 %v270
  %298 = vmatpush.msra.mxu0 %v267
  %299 = vmatpush.msra.mxu0 %v264
  %300 = vmatpush.msra.mxu0 %v261
  %301 = vmatpush.msra.mxu0 %v258
  %302 = vmatpush.msra.mxu0 %v255
  %303 = vmatpush.msra.mxu0 %v252
  %304 = vmatpush.msra.mxu0 %v249
  %305 = vmatpush.msra.mxu0 %v246
  %306 = vmatpush.msra.mxu0 %v243
  %307 = vmatpush.msra.mxu0 %v240
  %308 = vmatmul.f32.gmra.mxu0 0.0
  %v309 = vpop.f32.mrf.mxu0
  %v310 = vadd.f32 0.0, %v309
  %311 = vdwg.mxu0
  %312 = vmatpush.msra.mxu0 %v286
  %313 = vmatpush.msra.mxu0 %v283
  %314 = vmatpush.msra.mxu0 %v280
  %315 = vmatpush.msra.mxu0 %v277
  %316 = vmatpush.msra.mxu0 %v274
  %317 = vmatpush.msra.mxu0 %v271
  %318 = vmatpush.msra.mxu0 %v268
  %319 = vmatpush.msra.mxu0 %v265
  %320 = vmatpush.msra.mxu0 %v262
  %321 = vmatpush.msra.mxu0 %v259
  %322 = vmatpush.msra.mxu0 %v256
  %323 = vmatpush.msra.mxu0 %v253
  %324 = vmatpush.msra.mxu0 %v250
  %325 = vmatpush.msra.mxu0 %v247
  %326 = vmatpush.msra.mxu0 %v244
  %327 = vmatpush.msra.mxu0 %v241
  %328 = vmatmul.f32.gmra.mxu0 0.0
  %v329 = vpop.f32.mrf.mxu0
  %v330 = vadd.f32 0.0, %v329
  %331 = vdwg.mxu0
  %332 = vmatpush.msra.mxu0 %v287
  %333 = vmatpush.msra.mxu0 %v284
  %334 = vmatpush.msra.mxu0 %v281
  %335 = vmatpush.msra.mxu0 %v278
  %336 = vmatpush.msra.mxu0 %v275
  %337 = vmatpush.msra.mxu0 %v272
  %338 = vmatpush.msra.mxu0 %v269
  %339 = vmatpush.msra.mxu0 %v266
  %340 = vmatpush.msra.mxu0 %v263
  %341 = vmatpush.msra.mxu0 %v260
  %342 = vmatpush.msra.mxu0 %v257
  %343 = vmatpush.msra.mxu0 %v254
  %344 = vmatpush.msra.mxu0 %v251
  %345 = vmatpush.msra.mxu0 %v248
  %346 = vmatpush.msra.mxu0 %v245
  %347 = vmatpush.msra.mxu0 %v242
  %348 = vmatmul.f32.gmra.mxu0 0.0
  %v349 = vpop.f32.mrf.mxu0
  %v350 = vadd.f32 0.0, %v349
  %351 = vdwg.mxu0
  %v352 = vadd.f32 %v289, %v310
  %v353 = vadd.f32 %v290, %v330
  %v354 = vxor.u32 %v352, 2147483648
  %v355 = vxor.u32 %v353, 2147483648
  %v356 = vmul.f32 %v354, 1.442695
  %v357 = vpow.pop %v356
  %v358 = vmul.f32 %v355, 1.442695
  %v359 = vpow.pop %v358
  %v360 = vadd.f32 %v357, 1.0
  %v361 = vadd.f32 %v359, 1.0
  %v362 = vrcp.pop %v360
  %v363 = vmul.f32 %v360, %v362
  %v364 = vsub.f32 1.0, %v363
  %v365 = vmul.f32 %v362, %v364
  %v366 = vadd.f32 %v362, %v365
  %vm367 = vweird.f32 %v360
  %vm368 = vweird.f32 %v362
  %vm369 = vmor %vm367, %vm368
  %v370 = vsel %vm369, %v362, %v366
  %v371 = vand.u32 2147483647, %v360
  %vm372 = vcmp.eq.f32.partialorder %v371, 8.507059e+37
  %v373 = vand.u32 %v360, 2147483648
  %v374 = vor.u32 1.1754944e-38, %v373
  %v375 = vsel %vm372, %v374, %v370
  %v376 = vmul.f32 1.0, %v375
  %v377 = vrcp.pop %v361
  %v378 = vmul.f32 %v361, %v377
  %v379 = vsub.f32 1.0, %v378
  %v380 = vmul.f32 %v377, %v379
  %v381 = vadd.f32 %v377, %v380
  %vm382 = vweird.f32 %v361
  %vm383 = vweird.f32 %v377
  %vm384 = vmor %vm382, %vm383
  %v385 = vsel %vm384, %v377, %v381
  %v386 = vand.u32 2147483647, %v361
  %vm387 = vcmp.eq.f32.partialorder %v386, 8.507059e+37
  %v388 = vand.u32 %v361, 2147483648
  %v389 = vor.u32 1.1754944e-38, %v388
  %v390 = vsel %vm387, %v389, %v385
  %v391 = vmul.f32 1.0, %v390
  %v393 = vperm.slane %v288, 0
  %v395 = vadd.f32 %v350, %v393
  %v396 = vmul.f32 %v376, %v395
  %v397 = vadd.f32 %v291, %v396
  %v398 = vtanh.pop %v397
  %v399 = vsub.f32 1.0, %v391
  %v400 = vmul.f32 %v399, %v398
  %v401 = vmul.f32 %v391, 0.0
  %v402 = vadd.f32 %v400, %v401
  %403 = vst [vmem:[#allocation2] sm:$0xff] %v402
  %s404 = scalar_lea.vmem [#allocation3], 24
  %v405 = vld [vmem:[%s404] sm:$0xff]
  %v406 = vld [vmem:[%s404 + $0x8] sm:$0xff]
  %v407 = vld [vmem:[%s404 + $0x10] sm:$0xff]
  %408 = vmatpush.msra.mxu0 %v285
  %409 = vmatpush.msra.mxu0 %v282
  %410 = vmatpush.msra.mxu0 %v279
  %411 = vmatpush.msra.mxu0 %v276
  %412 = vmatpush.msra.mxu0 %v273
  %413 = vmatpush.msra.mxu0 %v270
  %414 = vmatpush.msra.mxu0 %v267
  %415 = vmatpush.msra.mxu0 %v264
  %416 = vmatpush.msra.mxu0 %v261
  %417 = vmatpush.msra.mxu0 %v258
  %418 = vmatpush.msra.mxu0 %v255
  %419 = vmatpush.msra.mxu0 %v252
  %420 = vmatpush.msra.mxu0 %v249
  %421 = vmatpush.msra.mxu0 %v246
  %422 = vmatpush.msra.mxu0 %v243
  %423 = vmatpush.msra.mxu0 %v240
  %424 = vmatmul.f32.gmra.mxu0 %v402
  %v425 = vpop.f32.mrf.mxu0
  %v426 = vadd.f32 0.0, %v425
  %427 = vdwg.mxu0
  %428 = vmatpush.msra.mxu0 %v286
  %429 = vmatpush.msra.mxu0 %v283
  %430 = vmatpush.msra.mxu0 %v280
  %431 = vmatpush.msra.mxu0 %v277
  %432 = vmatpush.msra.mxu0 %v274
  %433 = vmatpush.msra.mxu0 %v271
  %434 = vmatpush.msra.mxu0 %v268
  %435 = vmatpush.msra.mxu0 %v265
  %436 = vmatpush.msra.mxu0 %v262
  %437 = vmatpush.msra.mxu0 %v259
  %438 = vmatpush.msra.mxu0 %v256
  %439 = vmatpush.msra.mxu0 %v253
  %440 = vmatpush.msra.mxu0 %v250
  %441 = vmatpush.msra.mxu0 %v247
  %442 = vmatpush.msra.mxu0 %v244
  %443 = vmatpush.msra.mxu0 %v241
  %444 = vmatmul.f32.gmra.mxu0 %v402
  %v445 = vpop.f32.mrf.mxu0
  %v446 = vadd.f32 0.0, %v445
  %447 = vdwg.mxu0
  %448 = vmatpush.msra.mxu0 %v287
  %449 = vmatpush.msra.mxu0 %v284
  %450 = vmatpush.msra.mxu0 %v281
  %451 = vmatpush.msra.mxu0 %v278
  %452 = vmatpush.msra.mxu0 %v275
  %453 = vmatpush.msra.mxu0 %v272
  %454 = vmatpush.msra.mxu0 %v269
  %455 = vmatpush.msra.mxu0 %v266
  %456 = vmatpush.msra.mxu0 %v263
  %457 = vmatpush.msra.mxu0 %v260
  %458 = vmatpush.msra.mxu0 %v257
  %459 = vmatpush.msra.mxu0 %v254
  %460 = vmatpush.msra.mxu0 %v251
  %461 = vmatpush.msra.mxu0 %v248
  %462 = vmatpush.msra.mxu0 %v245
  %463 = vmatpush.msra.mxu0 %v242
  %464 = vmatmul.f32.gmra.mxu0 %v402
  %v465 = vpop.f32.mrf.mxu0
  %v466 = vadd.f32 0.0, %v465
  %467 = vdwg.mxu0
  %v468 = vadd.f32 %v405, %v426
  %v469 = vadd.f32 %v406, %v446
  %v470 = vxor.u32 %v468, 2147483648
  %v471 = vxor.u32 %v469, 2147483648
  %v472 = vmul.f32 %v470, 1.442695
  %v473 = vpow.pop %v472
  %v474 = vmul.f32 %v471, 1.442695
  %v475 = vpow.pop %v474
  %v476 = vadd.f32 %v473, 1.0
  %v477 = vadd.f32 %v475, 1.0
  %v478 = vrcp.pop %v476
  %v479 = vmul.f32 %v476, %v478
  %v480 = vsub.f32 1.0, %v479
  %v481 = vmul.f32 %v478, %v480
  %v482 = vadd.f32 %v478, %v481
  %vm483 = vweird.f32 %v476
  %vm484 = vweird.f32 %v478
  %vm485 = vmor %vm483, %vm484
  %v486 = vsel %vm485, %v478, %v482
  %v487 = vand.u32 2147483647, %v476
  %vm488 = vcmp.eq.f32.partialorder %v487, 8.507059e+37
  %v489 = vand.u32 %v476, 2147483648
  %v490 = vor.u32 1.1754944e-38, %v489
  %v491 = vsel %vm488, %v490, %v486
  %v492 = vmul.f32 1.0, %v491
  %v493 = vrcp.pop %v477
  %v494 = vmul.f32 %v477, %v493
  %v495 = vsub.f32 1.0, %v494
  %v496 = vmul.f32 %v493, %v495
  %v497 = vadd.f32 %v493, %v496
  %vm498 = vweird.f32 %v477
  %vm499 = vweird.f32 %v493
  %vm500 = vmor %vm498, %vm499
  %v501 = vsel %vm500, %v493, %v497
  %v502 = vand.u32 2147483647, %v477
  %vm503 = vcmp.eq.f32.partialorder %v502, 8.507059e+37
  %v504 = vand.u32 %v477, 2147483648
  %v505 = vor.u32 1.1754944e-38, %v504
  %v506 = vsel %vm503, %v505, %v501
  %v507 = vmul.f32 1.0, %v506
  %v508 = vadd.f32 %v466, %v393
  %v509 = vmul.f32 %v492, %v508
  %v510 = vadd.f32 %v407, %v509
  %v511 = vtanh.pop %v510
  %v512 = vsub.f32 1.0, %v507
  %v513 = vmul.f32 %v512, %v511
  %v514 = vmul.f32 %v507, %v402
  %v515 = vadd.f32 %v513, %v514
  %s516 = scalar_lea.vmem [#allocation2], 8
  %517 = vst [vmem:[%s516] sm:$0xff] %v515
  %s518 = scalar_lea.vmem [#allocation3], 48
  %v519 = vld [vmem:[%s518] sm:$0xff]
  %v520 = vld [vmem:[%s518 + $0x8] sm:$0xff]
  %v521 = vld [vmem:[%s518 + $0x10] sm:$0xff]
  %522 = vmatpush.msra.mxu0 %v285
  %523 = vmatpush.msra.mxu0 %v282
  %524 = vmatpush.msra.mxu0 %v279
  %525 = vmatpush.msra.mxu0 %v276
  %526 = vmatpush.msra.mxu0 %v273
  %527 = vmatpush.msra.mxu0 %v270
  %528 = vmatpush.msra.mxu0 %v267
  %529 = vmatpush.msra.mxu0 %v264
  %530 = vmatpush.msra.mxu0 %v261
  %531 = vmatpush.msra.mxu0 %v258
  %532 = vmatpush.msra.mxu0 %v255
  %533 = vmatpush.msra.mxu0 %v252
  %534 = vmatpush.msra.mxu0 %v249
  %535 = vmatpush.msra.mxu0 %v246
  %536 = vmatpush.msra.mxu0 %v243
  %537 = vmatpush.msra.mxu0 %v240
  %538 = vmatmul.f32.gmra.mxu0 %v515
  %v539 = vpop.f32.mrf.mxu0
  %v540 = vadd.f32 0.0, %v539
  %541 = vdwg.mxu0
  %542 = vmatpush.msra.mxu0 %v286
  %543 = vmatpush.msra.mxu0 %v283
  %544 = vmatpush.msra.mxu0 %v280
  %545 = vmatpush.msra.mxu0 %v277
  %546 = vmatpush.msra.mxu0 %v274
  %547 = vmatpush.msra.mxu0 %v271
  %548 = vmatpush.msra.mxu0 %v268
  %549 = vmatpush.msra.mxu0 %v265
  %550 = vmatpush.msra.mxu0 %v262
  %551 = vmatpush.msra.mxu0 %v259
  %552 = vmatpush.msra.mxu0 %v256
  %553 = vmatpush.msra.mxu0 %v253
  %554 = vmatpush.msra.mxu0 %v250
  %555 = vmatpush.msra.mxu0 %v247
  %556 = vmatpush.msra.mxu0 %v244
  %557 = vmatpush.msra.mxu0 %v241
  %558 = vmatmul.f32.gmra.mxu0 %v515
  %v559 = vpop.f32.mrf.mxu0
  %v560 = vadd.f32 0.0, %v559
  %561 = vdwg.mxu0
  %562 = vmatpush.msra.mxu0 %v287
  %563 = vmatpush.msra.mxu0 %v284
  %564 = vmatpush.msra.mxu0 %v281
  %565 = vmatpush.msra.mxu0 %v278
  %566 = vmatpush.msra.mxu0 %v275
  %567 = vmatpush.msra.mxu0 %v272
  %568 = vmatpush.msra.mxu0 %v269
  %569 = vmatpush.msra.mxu0 %v266
  %570 = vmatpush.msra.mxu0 %v263
  %571 = vmatpush.msra.mxu0 %v260
  %572 = vmatpush.msra.mxu0 %v257
  %573 = vmatpush.msra.mxu0 %v254
  %574 = vmatpush.msra.mxu0 %v251
  %575 = vmatpush.msra.mxu0 %v248
  %576 = vmatpush.msra.mxu0 %v245
  %577 = vmatpush.msra.mxu0 %v242
  %578 = vmatmul.f32.gmra.mxu0 %v515
  %v579 = vpop.f32.mrf.mxu0
  %v580 = vadd.f32 0.0, %v579
  %581 = vdwg.mxu0
  %v582 = vadd.f32 %v519, %v540
  %v583 = vadd.f32 %v520, %v560
  %v584 = vxor.u32 %v582, 2147483648
  %v585 = vxor.u32 %v583, 2147483648
  %v586 = vmul.f32 %v584, 1.442695
  %v587 = vpow.pop %v586
  %v588 = vmul.f32 %v585, 1.442695
  %v589 = vpow.pop %v588
  %v590 = vadd.f32 %v587, 1.0
  %v591 = vadd.f32 %v589, 1.0
  %v592 = vrcp.pop %v590
  %v593 = vmul.f32 %v590, %v592
  %v594 = vsub.f32 1.0, %v593
  %v595 = vmul.f32 %v592, %v594
  %v596 = vadd.f32 %v592, %v595
  %vm597 = vweird.f32 %v590
  %vm598 = vweird.f32 %v592
  %vm599 = vmor %vm597, %vm598
  %v600 = vsel %vm599, %v592, %v596
  %v601 = vand.u32 2147483647, %v590
  %vm602 = vcmp.eq.f32.partialorder %v601, 8.507059e+37
  %v603 = vand.u32 %v590, 2147483648
  %v604 = vor.u32 1.1754944e-38, %v603
  %v605 = vsel %vm602, %v604, %v600
  %v606 = vmul.f32 1.0, %v605
  %v607 = vrcp.pop %v591
  %v608 = vmul.f32 %v591, %v607
  %v609 = vsub.f32 1.0, %v608
  %v610 = vmul.f32 %v607, %v609
  %v611 = vadd.f32 %v607, %v610
  %vm612 = vweird.f32 %v591
  %vm613 = vweird.f32 %v607
  %vm614 = vmor %vm612, %vm613
  %v615 = vsel %vm614, %v607, %v611
  %v616 = vand.u32 2147483647, %v591
  %vm617 = vcmp.eq.f32.partialorder %v616, 8.507059e+37
  %v618 = vand.u32 %v591, 2147483648
  %v619 = vor.u32 1.1754944e-38, %v618
  %v620 = vsel %vm617, %v619, %v615
  %v621 = vmul.f32 1.0, %v620
  %v622 = vadd.f32 %v580, %v393
  %v623 = vmul.f32 %v606, %v622
  %v624 = vadd.f32 %v521, %v623
  %v625 = vtanh.pop %v624
  %v626 = vsub.f32 1.0, %v621
  %v627 = vmul.f32 %v626, %v625
  %v628 = vmul.f32 %v621, %v515
  %v629 = vadd.f32 %v627, %v628
  %s630 = scalar_lea.vmem [#allocation2], 16
  %631 = vst [vmem:[%s630] sm:$0xff] %v629
  %s632 = scalar_lea.vmem [#allocation3], 72
  %v633 = vld [vmem:[%s632] sm:$0xff]
  %v634 = vld [vmem:[%s632 + $0x8] sm:$0xff]
  %v635 = vld [vmem:[%s632 + $0x10] sm:$0xff]
  %636 = vmatpush.msra.mxu0 %v285
  %637 = vmatpush.msra.mxu0 %v282
  %638 = vmatpush.msra.mxu0 %v279
  %639 = vmatpush.msra.mxu0 %v276
  %640 = vmatpush.msra.mxu0 %v273
  %641 = vmatpush.msra.mxu0 %v270
  %642 = vmatpush.msra.mxu0 %v267
  %643 = vmatpush.msra.mxu0 %v264
  %644 = vmatpush.msra.mxu0 %v261
  %645 = vmatpush.msra.mxu0 %v258
  %646 = vmatpush.msra.mxu0 %v255
  %647 = vmatpush.msra.mxu0 %v252
  %648 = vmatpush.msra.mxu0 %v249
  %649 = vmatpush.msra.mxu0 %v246
  %650 = vmatpush.msra.mxu0 %v243
  %651 = vmatpush.msra.mxu0 %v240
  %652 = vmatmul.f32.gmra.mxu0 %v629
  %v653 = vpop.f32.mrf.mxu0
  %v654 = vadd.f32 0.0, %v653
  %655 = vdwg.mxu0
  %656 = vmatpush.msra.mxu0 %v286
  %657 = vmatpush.msra.mxu0 %v283
  %658 = vmatpush.msra.mxu0 %v280
  %659 = vmatpush.msra.mxu0 %v277
  %660 = vmatpush.msra.mxu0 %v274
  %661 = vmatpush.msra.mxu0 %v271
  %662 = vmatpush.msra.mxu0 %v268
  %663 = vmatpush.msra.mxu0 %v265
  %664 = vmatpush.msra.mxu0 %v262
  %665 = vmatpush.msra.mxu0 %v259
  %666 = vmatpush.msra.mxu0 %v256
  %667 = vmatpush.msra.mxu0 %v253
  %668 = vmatpush.msra.mxu0 %v250
  %669 = vmatpush.msra.mxu0 %v247
  %670 = vmatpush.msra.mxu0 %v244
  %671 = vmatpush.msra.mxu0 %v241
  %672 = vmatmul.f32.gmra.mxu0 %v629
  %v673 = vpop.f32.mrf.mxu0
  %v674 = vadd.f32 0.0, %v673
  %675 = vdwg.mxu0
  %676 = vmatpush.msra.mxu0 %v287
  %677 = vmatpush.msra.mxu0 %v284
  %678 = vmatpush.msra.mxu0 %v281
  %679 = vmatpush.msra.mxu0 %v278
  %680 = vmatpush.msra.mxu0 %v275
  %681 = vmatpush.msra.mxu0 %v272
  %682 = vmatpush.msra.mxu0 %v269
  %683 = vmatpush.msra.mxu0 %v266
  %684 = vmatpush.msra.mxu0 %v263
  %685 = vmatpush.msra.mxu0 %v260
  %686 = vmatpush.msra.mxu0 %v257
  %687 = vmatpush.msra.mxu0 %v254
  %688 = vmatpush.msra.mxu0 %v251
  %689 = vmatpush.msra.mxu0 %v248
  %690 = vmatpush.msra.mxu0 %v245
  %691 = vmatpush.msra.mxu0 %v242
  %692 = vmatmul.f32.gmra.mxu0 %v629
  %v693 = vpop.f32.mrf.mxu0
  %v694 = vadd.f32 0.0, %v693
  %695 = vdwg.mxu0
  %v696 = vadd.f32 %v633, %v654
  %v697 = vadd.f32 %v634, %v674
  %v698 = vxor.u32 %v696, 2147483648
  %v699 = vxor.u32 %v697, 2147483648
  %v700 = vmul.f32 %v698, 1.442695
  %v701 = vpow.pop %v700
  %v702 = vmul.f32 %v699, 1.442695
  %v703 = vpow.pop %v702
  %v704 = vadd.f32 %v701, 1.0
  %v705 = vadd.f32 %v703, 1.0
  %v706 = vrcp.pop %v704
  %v707 = vmul.f32 %v704, %v706
  %v708 = vsub.f32 1.0, %v707
  %v709 = vmul.f32 %v706, %v708
  %v710 = vadd.f32 %v706, %v709
  %vm711 = vweird.f32 %v704
  %vm712 = vweird.f32 %v706
  %vm713 = vmor %vm711, %vm712
  %v714 = vsel %vm713, %v706, %v710
  %v715 = vand.u32 2147483647, %v704
  %vm716 = vcmp.eq.f32.partialorder %v715, 8.507059e+37
  %v717 = vand.u32 %v704, 2147483648
  %v718 = vor.u32 1.1754944e-38, %v717
  %v719 = vsel %vm716, %v718, %v714
  %v720 = vmul.f32 1.0, %v719
  %v721 = vrcp.pop %v705
  %v722 = vmul.f32 %v705, %v721
  %v723 = vsub.f32 1.0, %v722
  %v724 = vmul.f32 %v721, %v723
  %v725 = vadd.f32 %v721, %v724
  %vm726 = vweird.f32 %v705
  %vm727 = vweird.f32 %v721
  %vm728 = vmor %vm726, %vm727
  %v729 = vsel %vm728, %v721, %v725
  %v730 = vand.u32 2147483647, %v705
  %vm731 = vcmp.eq.f32.partialorder %v730, 8.507059e+37
  %v732 = vand.u32 %v705, 2147483648
  %v733 = vor.u32 1.1754944e-38, %v732
  %v734 = vsel %vm731, %v733, %v729
  %v735 = vmul.f32 1.0, %v734
  %v736 = vadd.f32 %v694, %v393
  %v737 = vmul.f32 %v720, %v736
  %v738 = vadd.f32 %v635, %v737
  %v739 = vtanh.pop %v738
  %v740 = vsub.f32 1.0, %v735
  %v741 = vmul.f32 %v740, %v739
  %v742 = vmul.f32 %v735, %v629
  %v743 = vadd.f32 %v741, %v742
  %s744 = scalar_lea.vmem [#allocation2], 24
  %745 = vst [vmem:[%s744] sm:$0xff] %v743
  %s746 = scalar_lea.vmem [#allocation3], 96
  %v747 = vld [vmem:[%s746] sm:$0xff]
  %v748 = vld [vmem:[%s746 + $0x8] sm:$0xff]
  %v749 = vld [vmem:[%s746 + $0x10] sm:$0xff]
  %750 = vmatpush.msra.mxu0 %v285
  %751 = vmatpush.msra.mxu0 %v282
  %752 = vmatpush.msra.mxu0 %v279
  %753 = vmatpush.msra.mxu0 %v276
  %754 = vmatpush.msra.mxu0 %v273
  %755 = vmatpush.msra.mxu0 %v270
  %756 = vmatpush.msra.mxu0 %v267
  %757 = vmatpush.msra.mxu0 %v264
  %758 = vmatpush.msra.mxu0 %v261
  %759 = vmatpush.msra.mxu0 %v258
  %760 = vmatpush.msra.mxu0 %v255
  %761 = vmatpush.msra.mxu0 %v252
  %762 = vmatpush.msra.mxu0 %v249
  %763 = vmatpush.msra.mxu0 %v246
  %764 = vmatpush.msra.mxu0 %v243
  %765 = vmatpush.msra.mxu0 %v240
  %766 = vmatmul.f32.gmra.mxu0 %v743
  %v767 = vpop.f32.mrf.mxu0
  %v768 = vadd.f32 0.0, %v767
  %769 = vdwg.mxu0
  %770 = vmatpush.msra.mxu0 %v286
  %771 = vmatpush.msra.mxu0 %v283
  %772 = vmatpush.msra.mxu0 %v280
  %773 = vmatpush.msra.mxu0 %v277
  %774 = vmatpush.msra.mxu0 %v274
  %775 = vmatpush.msra.mxu0 %v271
  %776 = vmatpush.msra.mxu0 %v268
  %777 = vmatpush.msra.mxu0 %v265
  %778 = vmatpush.msra.mxu0 %v262
  %779 = vmatpush.msra.mxu0 %v259
  %780 = vmatpush.msra.mxu0 %v256
  %781 = vmatpush.msra.mxu0 %v253
  %782 = vmatpush.msra.mxu0 %v250
  %783 = vmatpush.msra.mxu0 %v247
  %784 = vmatpush.msra.mxu0 %v244
  %785 = vmatpush.msra.mxu0 %v241
  %786 = vmatmul.f32.gmra.mxu0 %v743
  %v787 = vpop.f32.mrf.mxu0
  %v788 = vadd.f32 0.0, %v787
  %789 = vdwg.mxu0
  %790 = vmatpush.msra.mxu0 %v287
  %791 = vmatpush.msra.mxu0 %v284
  %792 = vmatpush.msra.mxu0 %v281
  %793 = vmatpush.msra.mxu0 %v278
  %794 = vmatpush.msra.mxu0 %v275
  %795 = vmatpush.msra.mxu0 %v272
  %796 = vmatpush.msra.mxu0 %v269
  %797 = vmatpush.msra.mxu0 %v266
  %798 = vmatpush.msra.mxu0 %v263
  %799 = vmatpush.msra.mxu0 %v260
  %800 = vmatpush.msra.mxu0 %v257
  %801 = vmatpush.msra.mxu0 %v254
  %802 = vmatpush.msra.mxu0 %v251
  %803 = vmatpush.msra.mxu0 %v248
  %804 = vmatpush.msra.mxu0 %v245
  %805 = vmatpush.msra.mxu0 %v242
  %806 = vmatmul.f32.gmra.mxu0 %v743
  %v807 = vpop.f32.mrf.mxu0
  %v808 = vadd.f32 0.0, %v807
  %809 = vdwg.mxu0
  %v810 = vadd.f32 %v747, %v768
  %v811 = vadd.f32 %v748, %v788
  %v812 = vxor.u32 %v810, 2147483648
  %v813 = vxor.u32 %v811, 2147483648
  %v814 = vmul.f32 %v812, 1.442695
  %v815 = vpow.pop %v814
  %v816 = vmul.f32 %v813, 1.442695
  %v817 = vpow.pop %v816
  %v818 = vadd.f32 %v815, 1.0
  %v819 = vadd.f32 %v817, 1.0
  %v820 = vrcp.pop %v818
  %v821 = vmul.f32 %v818, %v820
  %v822 = vsub.f32 1.0, %v821
  %v823 = vmul.f32 %v820, %v822
  %v824 = vadd.f32 %v820, %v823
  %vm825 = vweird.f32 %v818
  %vm826 = vweird.f32 %v820
  %vm827 = vmor %vm825, %vm826
  %v828 = vsel %vm827, %v820, %v824
  %v829 = vand.u32 2147483647, %v818
  %vm830 = vcmp.eq.f32.partialorder %v829, 8.507059e+37
  %v831 = vand.u32 %v818, 2147483648
  %v832 = vor.u32 1.1754944e-38, %v831
  %v833 = vsel %vm830, %v832, %v828
  %v834 = vmul.f32 1.0, %v833
  %v835 = vrcp.pop %v819
  %v836 = vmul.f32 %v819, %v835
  %v837 = vsub.f32 1.0, %v836
  %v838 = vmul.f32 %v835, %v837
  %v839 = vadd.f32 %v835, %v838
  %vm840 = vweird.f32 %v819
  %vm841 = vweird.f32 %v835
  %vm842 = vmor %vm840, %vm841
  %v843 = vsel %vm842, %v835, %v839
  %v844 = vand.u32 2147483647, %v819
  %vm845 = vcmp.eq.f32.partialorder %v844, 8.507059e+37
  %v846 = vand.u32 %v819, 2147483648
  %v847 = vor.u32 1.1754944e-38, %v846
  %v848 = vsel %vm845, %v847, %v843
  %v849 = vmul.f32 1.0, %v848
  %v850 = vadd.f32 %v808, %v393
  %v851 = vmul.f32 %v834, %v850
  %v852 = vadd.f32 %v749, %v851
  %v853 = vtanh.pop %v852
  %v854 = vsub.f32 1.0, %v849
  %v855 = vmul.f32 %v854, %v853
  %v856 = vmul.f32 %v849, %v743
  %v857 = vadd.f32 %v855, %v856
  %s858 = scalar_lea.vmem [#allocation2], 32
  %859 = vst [vmem:[%s858] sm:$0xff] %v857
  %s860 = scalar_lea.vmem [#allocation3], 120
  %v861 = vld [vmem:[%s860] sm:$0xff]
  %v862 = vld [vmem:[%s860 + $0x8] sm:$0xff]
  %v863 = vld [vmem:[%s860 + $0x10] sm:$0xff]
  %864 = vmatpush.msra.mxu0 %v285
  %865 = vmatpush.msra.mxu0 %v282
  %866 = vmatpush.msra.mxu0 %v279
  %867 = vmatpush.msra.mxu0 %v276
  %868 = vmatpush.msra.mxu0 %v273
  %869 = vmatpush.msra.mxu0 %v270
  %870 = vmatpush.msra.mxu0 %v267
  %871 = vmatpush.msra.mxu0 %v264
  %872 = vmatpush.msra.mxu0 %v261
  %873 = vmatpush.msra.mxu0 %v258
  %874 = vmatpush.msra.mxu0 %v255
  %875 = vmatpush.msra.mxu0 %v252
  %876 = vmatpush.msra.mxu0 %v249
  %877 = vmatpush.msra.mxu0 %v246
  %878 = vmatpush.msra.mxu0 %v243
  %879 = vmatpush.msra.mxu0 %v240
  %880 = vmatmul.f32.gmra.mxu0 %v857
  %v881 = vpop.f32.mrf.mxu0
  %v882 = vadd.f32 0.0, %v881
  %883 = vdwg.mxu0
  %884 = vmatpush.msra.mxu0 %v286
  %885 = vmatpush.msra.mxu0 %v283
  %886 = vmatpush.msra.mxu0 %v280
  %887 = vmatpush.msra.mxu0 %v277
  %888 = vmatpush.msra.mxu0 %v274
  %889 = vmatpush.msra.mxu0 %v271
  %890 = vmatpush.msra.mxu0 %v268
  %891 = vmatpush.msra.mxu0 %v265
  %892 = vmatpush.msra.mxu0 %v262
  %893 = vmatpush.msra.mxu0 %v259
  %894 = vmatpush.msra.mxu0 %v256
  %895 = vmatpush.msra.mxu0 %v253
  %896 = vmatpush.msra.mxu0 %v250
  %897 = vmatpush.msra.mxu0 %v247
  %898 = vmatpush.msra.mxu0 %v244
  %899 = vmatpush.msra.mxu0 %v241
  %900 = vmatmul.f32.gmra.mxu0 %v857
  %v901 = vpop.f32.mrf.mxu0
  %v902 = vadd.f32 0.0, %v901
  %903 = vdwg.mxu0
  %904 = vmatpush.msra.mxu0 %v287
  %905 = vmatpush.msra.mxu0 %v284
  %906 = vmatpush.msra.mxu0 %v281
  %907 = vmatpush.msra.mxu0 %v278
  %908 = vmatpush.msra.mxu0 %v275
  %909 = vmatpush.msra.mxu0 %v272
  %910 = vmatpush.msra.mxu0 %v269
  %911 = vmatpush.msra.mxu0 %v266
  %912 = vmatpush.msra.mxu0 %v263
  %913 = vmatpush.msra.mxu0 %v260
  %914 = vmatpush.msra.mxu0 %v257
  %915 = vmatpush.msra.mxu0 %v254
  %916 = vmatpush.msra.mxu0 %v251
  %917 = vmatpush.msra.mxu0 %v248
  %918 = vmatpush.msra.mxu0 %v245
  %919 = vmatpush.msra.mxu0 %v242
  %920 = vmatmul.f32.gmra.mxu0 %v857
  %v921 = vpop.f32.mrf.mxu0
  %v922 = vadd.f32 0.0, %v921
  %923 = vdwg.mxu0
  %v924 = vadd.f32 %v861, %v882
  %v925 = vadd.f32 %v862, %v902
  %v926 = vxor.u32 %v924, 2147483648
  %v927 = vxor.u32 %v925, 2147483648
  %v928 = vmul.f32 %v926, 1.442695
  %v929 = vpow.pop %v928
  %v930 = vmul.f32 %v927, 1.442695
  %v931 = vpow.pop %v930
  %v932 = vadd.f32 %v929, 1.0
  %v933 = vadd.f32 %v931, 1.0
  %v934 = vrcp.pop %v932
  %v935 = vmul.f32 %v932, %v934
  %v936 = vsub.f32 1.0, %v935
  %v937 = vmul.f32 %v934, %v936
  %v938 = vadd.f32 %v934, %v937
  %vm939 = vweird.f32 %v932
  %vm940 = vweird.f32 %v934
  %vm941 = vmor %vm939, %vm940
  %v942 = vsel %vm941, %v934, %v938
  %v943 = vand.u32 2147483647, %v932
  %vm944 = vcmp.eq.f32.partialorder %v943, 8.507059e+37
  %v945 = vand.u32 %v932, 2147483648
  %v946 = vor.u32 1.1754944e-38, %v945
  %v947 = vsel %vm944, %v946, %v942
  %v948 = vmul.f32 1.0, %v947
  %v949 = vrcp.pop %v933
  %v950 = vmul.f32 %v933, %v949
  %v951 = vsub.f32 1.0, %v950
  %v952 = vmul.f32 %v949, %v951
  %v953 = vadd.f32 %v949, %v952
  %vm954 = vweird.f32 %v933
  %vm955 = vweird.f32 %v949
  %vm956 = vmor %vm954, %vm955
  %v957 = vsel %vm956, %v949, %v953
  %v958 = vand.u32 2147483647, %v933
  %vm959 = vcmp.eq.f32.partialorder %v958, 8.507059e+37
  %v960 = vand.u32 %v933, 2147483648
  %v961 = vor.u32 1.1754944e-38, %v960
  %v962 = vsel %vm959, %v961, %v957
  %v963 = vmul.f32 1.0, %v962
  %v964 = vadd.f32 %v922, %v393
  %v965 = vmul.f32 %v948, %v964
  %v966 = vadd.f32 %v863, %v965
  %v967 = vtanh.pop %v966
  %v968 = vsub.f32 1.0, %v963
  %v969 = vmul.f32 %v968, %v967
  %v970 = vmul.f32 %v963, %v857
  %v971 = vadd.f32 %v969, %v970
  %s972 = scalar_lea.vmem [#allocation2], 40
  %973 = vst [vmem:[%s972] sm:$0xff] %v971
  %s974 = scalar_lea.vmem [#allocation3], 144
  %v975 = vld [vmem:[%s974] sm:$0xff]
  %v976 = vld [vmem:[%s974 + $0x8] sm:$0xff]
  %v977 = vld [vmem:[%s974 + $0x10] sm:$0xff]
  %978 = vmatpush.msra.mxu0 %v285
  %979 = vmatpush.msra.mxu0 %v282
  %980 = vmatpush.msra.mxu0 %v279
  %981 = vmatpush.msra.mxu0 %v276
  %982 = vmatpush.msra.mxu0 %v273
  %983 = vmatpush.msra.mxu0 %v270
  %984 = vmatpush.msra.mxu0 %v267
  %985 = vmatpush.msra.mxu0 %v264
  %986 = vmatpush.msra.mxu0 %v261
  %987 = vmatpush.msra.mxu0 %v258
  %988 = vmatpush.msra.mxu0 %v255
  %989 = vmatpush.msra.mxu0 %v252
  %990 = vmatpush.msra.mxu0 %v249
  %991 = vmatpush.msra.mxu0 %v246
  %992 = vmatpush.msra.mxu0 %v243
  %993 = vmatpush.msra.mxu0 %v240
  %994 = vmatmul.f32.gmra.mxu0 %v971
  %v995 = vpop.f32.mrf.mxu0
  %v996 = vadd.f32 0.0, %v995
  %997 = vdwg.mxu0
  %998 = vmatpush.msra.mxu0 %v286
  %999 = vmatpush.msra.mxu0 %v283
  %1000 = vmatpush.msra.mxu0 %v280
  %1001 = vmatpush.msra.mxu0 %v277
  %1002 = vmatpush.msra.mxu0 %v274
  %1003 = vmatpush.msra.mxu0 %v271
  %1004 = vmatpush.msra.mxu0 %v268
  %1005 = vmatpush.msra.mxu0 %v265
  %1006 = vmatpush.msra.mxu0 %v262
  %1007 = vmatpush.msra.mxu0 %v259
  %1008 = vmatpush.msra.mxu0 %v256
  %1009 = vmatpush.msra.mxu0 %v253
  %1010 = vmatpush.msra.mxu0 %v250
  %1011 = vmatpush.msra.mxu0 %v247
  %1012 = vmatpush.msra.mxu0 %v244
  %1013 = vmatpush.msra.mxu0 %v241
  %1014 = vmatmul.f32.gmra.mxu0 %v971
  %v1015 = vpop.f32.mrf.mxu0
  %v1016 = vadd.f32 0.0, %v1015
  %1017 = vdwg.mxu0
  %1018 = vmatpush.msra.mxu0 %v287
  %1019 = vmatpush.msra.mxu0 %v284
  %1020 = vmatpush.msra.mxu0 %v281
  %1021 = vmatpush.msra.mxu0 %v278
  %1022 = vmatpush.msra.mxu0 %v275
  %1023 = vmatpush.msra.mxu0 %v272
  %1024 = vmatpush.msra.mxu0 %v269
  %1025 = vmatpush.msra.mxu0 %v266
  %1026 = vmatpush.msra.mxu0 %v263
  %1027 = vmatpush.msra.mxu0 %v260
  %1028 = vmatpush.msra.mxu0 %v257
  %1029 = vmatpush.msra.mxu0 %v254
  %1030 = vmatpush.msra.mxu0 %v251
  %1031 = vmatpush.msra.mxu0 %v248
  %1032 = vmatpush.msra.mxu0 %v245
  %1033 = vmatpush.msra.mxu0 %v242
  %1034 = vmatmul.f32.gmra.mxu0 %v971
  %v1035 = vpop.f32.mrf.mxu0
  %v1036 = vadd.f32 0.0, %v1035
  %1037 = vdwg.mxu0
  %v1038 = vadd.f32 %v975, %v996
  %v1039 = vadd.f32 %v976, %v1016
  %v1040 = vxor.u32 %v1038, 2147483648
  %v1041 = vxor.u32 %v1039, 2147483648
  %v1042 = vmul.f32 %v1040, 1.442695
  %v1043 = vpow.pop %v1042
  %v1044 = vmul.f32 %v1041, 1.442695
  %v1045 = vpow.pop %v1044
  %v1046 = vadd.f32 %v1043, 1.0
  %v1047 = vadd.f32 %v1045, 1.0
  %v1048 = vrcp.pop %v1046
  %v1049 = vmul.f32 %v1046, %v1048
  %v1050 = vsub.f32 1.0, %v1049
  %v1051 = vmul.f32 %v1048, %v1050
  %v1052 = vadd.f32 %v1048, %v1051
  %vm1053 = vweird.f32 %v1046
  %vm1054 = vweird.f32 %v1048
  %vm1055 = vmor %vm1053, %vm1054
  %v1056 = vsel %vm1055, %v1048, %v1052
  %v1057 = vand.u32 2147483647, %v1046
  %vm1058 = vcmp.eq.f32.partialorder %v1057, 8.507059e+37
  %v1059 = vand.u32 %v1046, 2147483648
  %v1060 = vor.u32 1.1754944e-38, %v1059
  %v1061 = vsel %vm1058, %v1060, %v1056
  %v1062 = vmul.f32 1.0, %v1061
  %v1063 = vrcp.pop %v1047
  %v1064 = vmul.f32 %v1047, %v1063
  %v1065 = vsub.f32 1.0, %v1064
  %v1066 = vmul.f32 %v1063, %v1065
  %v1067 = vadd.f32 %v1063, %v1066
  %vm1068 = vweird.f32 %v1047
  %vm1069 = vweird.f32 %v1063
  %vm1070 = vmor %vm1068, %vm1069
  %v1071 = vsel %vm1070, %v1063, %v1067
  %v1072 = vand.u32 2147483647, %v1047
  %vm1073 = vcmp.eq.f32.partialorder %v1072, 8.507059e+37
  %v1074 = vand.u32 %v1047, 2147483648
  %v1075 = vor.u32 1.1754944e-38, %v1074
  %v1076 = vsel %vm1073, %v1075, %v1071
  %v1077 = vmul.f32 1.0, %v1076
  %v1078 = vadd.f32 %v1036, %v393
  %v1079 = vmul.f32 %v1062, %v1078
  %v1080 = vadd.f32 %v977, %v1079
  %v1081 = vtanh.pop %v1080
  %v1082 = vsub.f32 1.0, %v1077
  %v1083 = vmul.f32 %v1082, %v1081
  %v1084 = vmul.f32 %v1077, %v971
  %v1085 = vadd.f32 %v1083, %v1084
  %s1086 = scalar_lea.vmem [#allocation2], 48
  %1087 = vst [vmem:[%s1086] sm:$0xff] %v1085
  %s1088 = scalar_lea.vmem [#allocation3], 168
  %v1089 = vld [vmem:[%s1088] sm:$0xff]
  %v1090 = vld [vmem:[%s1088 + $0x8] sm:$0xff]
  %v1091 = vld [vmem:[%s1088 + $0x10] sm:$0xff]
  %1092 = vmatpush.msra.mxu0 %v285
  %1093 = vmatpush.msra.mxu0 %v282
  %1094 = vmatpush.msra.mxu0 %v279
  %1095 = vmatpush.msra.mxu0 %v276
  %1096 = vmatpush.msra.mxu0 %v273
  %1097 = vmatpush.msra.mxu0 %v270
  %1098 = vmatpush.msra.mxu0 %v267
  %1099 = vmatpush.msra.mxu0 %v264
  %1100 = vmatpush.msra.mxu0 %v261
  %1101 = vmatpush.msra.mxu0 %v258
  %1102 = vmatpush.msra.mxu0 %v255
  %1103 = vmatpush.msra.mxu0 %v252
  %1104 = vmatpush.msra.mxu0 %v249
  %1105 = vmatpush.msra.mxu0 %v246
  %1106 = vmatpush.msra.mxu0 %v243
  %1107 = vmatpush.msra.mxu0 %v240
  %1108 = vmatmul.f32.gmra.mxu0 %v1085
  %v1109 = vpop.f32.mrf.mxu0
  %v1110 = vadd.f32 0.0, %v1109
  %1111 = vdwg.mxu0
  %1112 = vmatpush.msra.mxu0 %v286
  %1113 = vmatpush.msra.mxu0 %v283
  %1114 = vmatpush.msra.mxu0 %v280
  %1115 = vmatpush.msra.mxu0 %v277
  %1116 = vmatpush.msra.mxu0 %v274
  %1117 = vmatpush.msra.mxu0 %v271
  %1118 = vmatpush.msra.mxu0 %v268
  %1119 = vmatpush.msra.mxu0 %v265
  %1120 = vmatpush.msra.mxu0 %v262
  %1121 = vmatpush.msra.mxu0 %v259
  %1122 = vmatpush.msra.mxu0 %v256
  %1123 = vmatpush.msra.mxu0 %v253
  %1124 = vmatpush.msra.mxu0 %v250
  %1125 = vmatpush.msra.mxu0 %v247
  %1126 = vmatpush.msra.mxu0 %v244
  %1127 = vmatpush.msra.mxu0 %v241
  %1128 = vmatmul.f32.gmra.mxu0 %v1085
  %v1129 = vpop.f32.mrf.mxu0
  %v1130 = vadd.f32 0.0, %v1129
  %1131 = vdwg.mxu0
  %1132 = vmatpush.msra.mxu0 %v287
  %1133 = vmatpush.msra.mxu0 %v284
  %1134 = vmatpush.msra.mxu0 %v281
  %1135 = vmatpush.msra.mxu0 %v278
  %1136 = vmatpush.msra.mxu0 %v275
  %1137 = vmatpush.msra.mxu0 %v272
  %1138 = vmatpush.msra.mxu0 %v269
  %1139 = vmatpush.msra.mxu0 %v266
  %1140 = vmatpush.msra.mxu0 %v263
  %1141 = vmatpush.msra.mxu0 %v260
  %1142 = vmatpush.msra.mxu0 %v257
  %1143 = vmatpush.msra.mxu0 %v254
  %1144 = vmatpush.msra.mxu0 %v251
  %1145 = vmatpush.msra.mxu0 %v248
  %1146 = vmatpush.msra.mxu0 %v245
  %1147 = vmatpush.msra.mxu0 %v242
  %1148 = vmatmul.f32.gmra.mxu0 %v1085
  %v1149 = vpop.f32.mrf.mxu0
  %v1150 = vadd.f32 0.0, %v1149
  %1151 = vdwg.mxu0
  %v1152 = vadd.f32 %v1089, %v1110
  %v1153 = vadd.f32 %v1090, %v1130
  %v1154 = vxor.u32 %v1152, 2147483648
  %v1155 = vxor.u32 %v1153, 2147483648
  %v1156 = vmul.f32 %v1154, 1.442695
  %v1157 = vpow.pop %v1156
  %v1158 = vmul.f32 %v1155, 1.442695
  %v1159 = vpow.pop %v1158
  %v1160 = vadd.f32 %v1157, 1.0
  %v1161 = vadd.f32 %v1159, 1.0
  %v1162 = vrcp.pop %v1160
  %v1163 = vmul.f32 %v1160, %v1162
  %v1164 = vsub.f32 1.0, %v1163
  %v1165 = vmul.f32 %v1162, %v1164
  %v1166 = vadd.f32 %v1162, %v1165
  %vm1167 = vweird.f32 %v1160
  %vm1168 = vweird.f32 %v1162
  %vm1169 = vmor %vm1167, %vm1168
  %v1170 = vsel %vm1169, %v1162, %v1166
  %v1171 = vand.u32 2147483647, %v1160
  %vm1172 = vcmp.eq.f32.partialorder %v1171, 8.507059e+37
  %v1173 = vand.u32 %v1160, 2147483648
  %v1174 = vor.u32 1.1754944e-38, %v1173
  %v1175 = vsel %vm1172, %v1174, %v1170
  %v1176 = vmul.f32 1.0, %v1175
  %v1177 = vrcp.pop %v1161
  %v1178 = vmul.f32 %v1161, %v1177
  %v1179 = vsub.f32 1.0, %v1178
  %v1180 = vmul.f32 %v1177, %v1179
  %v1181 = vadd.f32 %v1177, %v1180
  %vm1182 = vweird.f32 %v1161
  %vm1183 = vweird.f32 %v1177
  %vm1184 = vmor %vm1182, %vm1183
  %v1185 = vsel %vm1184, %v1177, %v1181
  %v1186 = vand.u32 2147483647, %v1161
  %vm1187 = vcmp.eq.f32.partialorder %v1186, 8.507059e+37
  %v1188 = vand.u32 %v1161, 2147483648
  %v1189 = vor.u32 1.1754944e-38, %v1188
  %v1190 = vsel %vm1187, %v1189, %v1185
  %v1191 = vmul.f32 1.0, %v1190
  %v1192 = vadd.f32 %v1150, %v393
  %v1193 = vmul.f32 %v1176, %v1192
  %v1194 = vadd.f32 %v1091, %v1193
  %v1195 = vtanh.pop %v1194
  %v1196 = vsub.f32 1.0, %v1191
  %v1197 = vmul.f32 %v1196, %v1195
  %v1198 = vmul.f32 %v1191, %v1085
  %v1199 = vadd.f32 %v1197, %v1198
  %s1200 = scalar_lea.vmem [#allocation2], 56
  %1201 = vst [vmem:[%s1200] sm:$0xff] %v1199
  %v1202 = vld [vmem:[#allocation2] sm:$0xff]
  %v1203 = vld [vmem:[#allocation2 + $0x8] sm:$0xff]
  %v1204 = vld [vmem:[#allocation2 + $0x10] sm:$0xff]
  %v1205 = vld [vmem:[#allocation2 + $0x18] sm:$0xff]
  %v1206 = vld [vmem:[#allocation2 + $0x20] sm:$0xff]
  %v1207 = vld [vmem:[#allocation2 + $0x28] sm:$0xff]
  %v1208 = vld [vmem:[#allocation2 + $0x30] sm:$0xff]
  %v1209 = vld [vmem:[#allocation2 + $0x38] sm:$0xff]
  %v1210 = vld [vmem:[%s2] sm:$0xff]
  %v1211 = vld [vmem:[%s2 + $0x8] sm:$0xff]
  %v1212 = vld [vmem:[%s2 + $0x10] sm:$0xff]
  %v1213 = vld [vmem:[%s2 + $0x18] sm:$0xff]
  %v1214 = vld [vmem:[%s2 + $0x20] sm:$0xff]
  %v1215 = vld [vmem:[%s2 + $0x28] sm:$0xff]
  %v1216 = vld [vmem:[%s2 + $0x30] sm:$0xff]
  %v1217 = vld [vmem:[%s2 + $0x38] sm:$0xff]
  %v1218 = vld [vmem:[%s2 + $0x40] sm:$0xff]
  %v1219 = vld [vmem:[%s2 + $0x48] sm:$0xff]
  %v1220 = vld [vmem:[%s2 + $0x50] sm:$0xff]
  %v1221 = vld [vmem:[%s2 + $0x58] sm:$0xff]
  %v1222 = vld [vmem:[%s2 + $0x60] sm:$0xff]
  %v1223 = vld [vmem:[%s2 + $0x68] sm:$0xff]
  %v1224 = vld [vmem:[%s2 + $0x70] sm:$0xff]
  %v1225 = vld [vmem:[%s2 + $0x78] sm:$0xff]
  %v1226 = vld [vmem:[%s2 + $0x80] sm:$0xff]
  %v1227 = vld [vmem:[%s2 + $0x88] sm:$0xff]
  %v1228 = vld [vmem:[%s2 + $0x90] sm:$0xff]
  %v1229 = vld [vmem:[%s2 + $0x98] sm:$0xff]
  %v1230 = vld [vmem:[%s2 + $0xa0] sm:$0xff]
  %v1231 = vld [vmem:[%s2 + $0xa8] sm:$0xff]
  %v1232 = vld [vmem:[%s2 + $0xb0] sm:$0xff]
  %v1233 = vld [vmem:[%s2 + $0xb8] sm:$0xff]
  %v1234 = vld [vmem:[%s2 + $0xc0] sm:$0xff]
  %v1235 = vld [vmem:[%s2 + $0xc8] sm:$0xff]
  %v1236 = vld [vmem:[%s2 + $0xd0] sm:$0xff]
  %v1237 = vld [vmem:[%s2 + $0xd8] sm:$0xff]
  %v1238 = vld [vmem:[%s2 + $0xe0] sm:$0xff]
  %v1239 = vld [vmem:[%s2 + $0xe8] sm:$0xff]
  %v1240 = vld [vmem:[%s2 + $0xf0] sm:$0xff]
  %v1241 = vld [vmem:[%s2 + $0xf8] sm:$0xff]
  %v1242 = vld [vmem:[%s2 + $0x100] sm:$0xff]
  %v1243 = vld [vmem:[%s2 + $0x108] sm:$0xff]
  %v1244 = vld [vmem:[%s2 + $0x110] sm:$0xff]
  %v1245 = vld [vmem:[%s2 + $0x118] sm:$0xff]
  %v1246 = vld [vmem:[%s2 + $0x120] sm:$0xff]
  %v1247 = vld [vmem:[%s2 + $0x128] sm:$0xff]
  %v1248 = vld [vmem:[%s2 + $0x130] sm:$0xff]
  %v1249 = vld [vmem:[%s2 + $0x138] sm:$0xff]
  %v1250 = vld [vmem:[%s2 + $0x140] sm:$0xff]
  %v1251 = vld [vmem:[%s2 + $0x148] sm:$0xff]
  %v1252 = vld [vmem:[%s2 + $0x150] sm:$0xff]
  %v1253 = vld [vmem:[%s2 + $0x158] sm:$0xff]
  %v1254 = vld [vmem:[%s2 + $0x160] sm:$0xff]
  %v1255 = vld [vmem:[%s2 + $0x168] sm:$0xff]
  %v1256 = vld [vmem:[%s2 + $0x170] sm:$0xff]
  %v1257 = vld [vmem:[%s2 + $0x178] sm:$0xff]
  %s1258 = scalar_lea.vmem %s4, 3
  %v1259 = vld [vmem:[%s1258] sm:$0x7]
  %v1261 = vperm.slane %v1259, 0
  %v1262 = vperm.slane %v1259, 1
  %v1263 = vperm.slane %v1259, 2
  %1267 = vmatpush.msra.mxu0 %v1255
  %1268 = vmatpush.msra.mxu0 %v1252
  %1269 = vmatpush.msra.mxu0 %v1249
  %1270 = vmatpush.msra.mxu0 %v1246
  %1271 = vmatpush.msra.mxu0 %v1243
  %1272 = vmatpush.msra.mxu0 %v1240
  %1273 = vmatpush.msra.mxu0 %v1237
  %1274 = vmatpush.msra.mxu0 %v1234
  %1275 = vmatpush.msra.mxu0 %v1231
  %1276 = vmatpush.msra.mxu0 %v1228
  %1277 = vmatpush.msra.mxu0 %v1225
  %1278 = vmatpush.msra.mxu0 %v1222
  %1279 = vmatpush.msra.mxu0 %v1219
  %1280 = vmatpush.msra.mxu0 %v1216
  %1281 = vmatpush.msra.mxu0 %v1213
  %1282 = vmatpush.msra.mxu0 %v1210
  %1283 = vmatmul.f32.gmra.mxu0 %v1202
  %v1284 = vpop.f32.mrf.mxu0
  %v1285 = vadd.f32 %v1261, %v1284
  %1286 = vmatmul.f32.gmra.mxu0 %v1203
  %v1287 = vpop.f32.mrf.mxu0
  %v1288 = vadd.f32 %v1261, %v1287
  %1289 = vmatmul.f32.gmra.mxu0 %v1204
  %v1290 = vpop.f32.mrf.mxu0
  %v1291 = vadd.f32 %v1261, %v1290
  %1292 = vmatmul.f32.gmra.mxu0 %v1205
  %v1293 = vpop.f32.mrf.mxu0
  %v1294 = vadd.f32 %v1261, %v1293
  %1295 = vmatmul.f32.gmra.mxu0 %v1206
  %v1296 = vpop.f32.mrf.mxu0
  %v1297 = vadd.f32 %v1261, %v1296
  %1298 = vmatmul.f32.gmra.mxu0 %v1207
  %v1299 = vpop.f32.mrf.mxu0
  %v1300 = vadd.f32 %v1261, %v1299
  %1301 = vmatmul.f32.gmra.mxu0 %v1208
  %v1302 = vpop.f32.mrf.mxu0
  %v1303 = vadd.f32 %v1261, %v1302
  %1304 = vmatmul.f32.gmra.mxu0 %v1209
  %v1305 = vpop.f32.mrf.mxu0
  %v1306 = vadd.f32 %v1261, %v1305
  %1307 = vdwg.mxu0
  %1308 = vmatpush.msra.mxu0 %v1256
  %1309 = vmatpush.msra.mxu0 %v1253
  %1310 = vmatpush.msra.mxu0 %v1250
  %1311 = vmatpush.msra.mxu0 %v1247
  %1312 = vmatpush.msra.mxu0 %v1244
  %1313 = vmatpush.msra.mxu0 %v1241
  %1314 = vmatpush.msra.mxu0 %v1238
  %1315 = vmatpush.msra.mxu0 %v1235
  %1316 = vmatpush.msra.mxu0 %v1232
  %1317 = vmatpush.msra.mxu0 %v1229
  %1318 = vmatpush.msra.mxu0 %v1226
  %1319 = vmatpush.msra.mxu0 %v1223
  %1320 = vmatpush.msra.mxu0 %v1220
  %1321 = vmatpush.msra.mxu0 %v1217
  %1322 = vmatpush.msra.mxu0 %v1214
  %1323 = vmatpush.msra.mxu0 %v1211
  %1324 = vmatmul.f32.gmra.mxu0 %v1202
  %v1325 = vpop.f32.mrf.mxu0
  %v1326 = vadd.f32 %v1262, %v1325
  %1327 = vmatmul.f32.gmra.mxu0 %v1203
  %v1328 = vpop.f32.mrf.mxu0
  %v1329 = vadd.f32 %v1262, %v1328
  %1330 = vmatmul.f32.gmra.mxu0 %v1204
  %v1331 = vpop.f32.mrf.mxu0
  %v1332 = vadd.f32 %v1262, %v1331
  %1333 = vmatmul.f32.gmra.mxu0 %v1205
  %v1334 = vpop.f32.mrf.mxu0
  %v1335 = vadd.f32 %v1262, %v1334
  %1336 = vmatmul.f32.gmra.mxu0 %v1206
  %v1337 = vpop.f32.mrf.mxu0
  %v1338 = vadd.f32 %v1262, %v1337
  %1339 = vmatmul.f32.gmra.mxu0 %v1207
  %v1340 = vpop.f32.mrf.mxu0
  %v1341 = vadd.f32 %v1262, %v1340
  %1342 = vmatmul.f32.gmra.mxu0 %v1208
  %v1343 = vpop.f32.mrf.mxu0
  %v1344 = vadd.f32 %v1262, %v1343
  %1345 = vmatmul.f32.gmra.mxu0 %v1209
  %v1346 = vpop.f32.mrf.mxu0
  %v1347 = vadd.f32 %v1262, %v1346
  %1348 = vdwg.mxu0
  %1349 = vmatpush.msra.mxu0 %v1257
  %1350 = vmatpush.msra.mxu0 %v1254
  %1351 = vmatpush.msra.mxu0 %v1251
  %1352 = vmatpush.msra.mxu0 %v1248
  %1353 = vmatpush.msra.mxu0 %v1245
  %1354 = vmatpush.msra.mxu0 %v1242
  %1355 = vmatpush.msra.mxu0 %v1239
  %1356 = vmatpush.msra.mxu0 %v1236
  %1357 = vmatpush.msra.mxu0 %v1233
  %1358 = vmatpush.msra.mxu0 %v1230
  %1359 = vmatpush.msra.mxu0 %v1227
  %1360 = vmatpush.msra.mxu0 %v1224
  %1361 = vmatpush.msra.mxu0 %v1221
  %1362 = vmatpush.msra.mxu0 %v1218
  %1363 = vmatpush.msra.mxu0 %v1215
  %1364 = vmatpush.msra.mxu0 %v1212
  %1365 = vmatmul.f32.gmra.mxu0 %v1202
  %v1366 = vpop.f32.mrf.mxu0
  %v1367 = vadd.f32 %v1263, %v1366
  %1368 = vmatmul.f32.gmra.mxu0 %v1203
  %v1369 = vpop.f32.mrf.mxu0
  %v1370 = vadd.f32 %v1263, %v1369
  %1371 = vmatmul.f32.gmra.mxu0 %v1204
  %v1372 = vpop.f32.mrf.mxu0
  %v1373 = vadd.f32 %v1263, %v1372
  %1374 = vmatmul.f32.gmra.mxu0 %v1205
  %v1375 = vpop.f32.mrf.mxu0
  %v1376 = vadd.f32 %v1263, %v1375
  %1377 = vmatmul.f32.gmra.mxu0 %v1206
  %v1378 = vpop.f32.mrf.mxu0
  %v1379 = vadd.f32 %v1263, %v1378
  %1380 = vmatmul.f32.gmra.mxu0 %v1207
  %v1381 = vpop.f32.mrf.mxu0
  %v1382 = vadd.f32 %v1263, %v1381
  %1383 = vmatmul.f32.gmra.mxu0 %v1208
  %v1384 = vpop.f32.mrf.mxu0
  %v1385 = vadd.f32 %v1263, %v1384
  %1386 = vmatmul.f32.gmra.mxu0 %v1209
  %v1387 = vpop.f32.mrf.mxu0
  %v1388 = vadd.f32 %v1263, %v1387
  %1389 = vdwg.mxu0
  %1390 = vst [vmem:[#allocation3] sm:$0xff] %v1285
  %1391 = vst [vmem:[#allocation3 + $0x8] sm:$0xff] %v1326
  %1392 = vst [vmem:[#allocation3 + $0x10] sm:$0xff] %v1367
  %1393 = vst [vmem:[#allocation3 + $0x18] sm:$0xff] %v1288
  %1394 = vst [vmem:[#allocation3 + $0x20] sm:$0xff] %v1329
  %1395 = vst [vmem:[#allocation3 + $0x28] sm:$0xff] %v1370
  %1396 = vst [vmem:[#allocation3 + $0x30] sm:$0xff] %v1291
  %1397 = vst [vmem:[#allocation3 + $0x38] sm:$0xff] %v1332
  %1398 = vst [vmem:[#allocation3 + $0x40] sm:$0xff] %v1373
  %1399 = vst [vmem:[#allocation3 + $0x48] sm:$0xff] %v1294
  %1400 = vst [vmem:[#allocation3 + $0x50] sm:$0xff] %v1335
  %1401 = vst [vmem:[#allocation3 + $0x58] sm:$0xff] %v1376
  %1402 = vst [vmem:[#allocation3 + $0x60] sm:$0xff] %v1297
  %1403 = vst [vmem:[#allocation3 + $0x68] sm:$0xff] %v1338
  %1404 = vst [vmem:[#allocation3 + $0x70] sm:$0xff] %v1379
  %1405 = vst [vmem:[#allocation3 + $0x78] sm:$0xff] %v1300
  %1406 = vst [vmem:[#allocation3 + $0x80] sm:$0xff] %v1341
  %1407 = vst [vmem:[#allocation3 + $0x88] sm:$0xff] %v1382
  %1408 = vst [vmem:[#allocation3 + $0x90] sm:$0xff] %v1303
  %1409 = vst [vmem:[#allocation3 + $0x98] sm:$0xff] %v1344
  %1410 = vst [vmem:[#allocation3 + $0xa0] sm:$0xff] %v1385
  %1411 = vst [vmem:[#allocation3 + $0xa8] sm:$0xff] %v1306
  %1412 = vst [vmem:[#allocation3 + $0xb0] sm:$0xff] %v1347
  %1413 = vst [vmem:[#allocation3 + $0xb8] sm:$0xff] %v1388
  %s1414 = scalar_lea.vmem %s3, 384
  %v1415 = vld [vmem:[%s1414] sm:$0xff]
  %v1416 = vld [vmem:[%s1414 + $0x8] sm:$0xff]
  %v1417 = vld [vmem:[%s1414 + $0x10] sm:$0xff]
  %v1418 = vld [vmem:[%s1414 + $0x18] sm:$0xff]
  %v1419 = vld [vmem:[%s1414 + $0x20] sm:$0xff]
  %v1420 = vld [vmem:[%s1414 + $0x28] sm:$0xff]
  %v1421 = vld [vmem:[%s1414 + $0x30] sm:$0xff]
  %v1422 = vld [vmem:[%s1414 + $0x38] sm:$0xff]
  %v1423 = vld [vmem:[%s1414 + $0x40] sm:$0xff]
  %v1424 = vld [vmem:[%s1414 + $0x48] sm:$0xff]
  %v1425 = vld [vmem:[%s1414 + $0x50] sm:$0xff]
  %v1426 = vld [vmem:[%s1414 + $0x58] sm:$0xff]
  %v1427 = vld [vmem:[%s1414 + $0x60] sm:$0xff]
  %v1428 = vld [vmem:[%s1414 + $0x68] sm:$0xff]
  %v1429 = vld [vmem:[%s1414 + $0x70] sm:$0xff]
  %v1430 = vld [vmem:[%s1414 + $0x78] sm:$0xff]
  %v1431 = vld [vmem:[%s1414 + $0x80] sm:$0xff]
  %v1432 = vld [vmem:[%s1414 + $0x88] sm:$0xff]
  %v1433 = vld [vmem:[%s1414 + $0x90] sm:$0xff]
  %v1434 = vld [vmem:[%s1414 + $0x98] sm:$0xff]
  %v1435 = vld [vmem:[%s1414 + $0xa0] sm:$0xff]
  %v1436 = vld [vmem:[%s1414 + $0xa8] sm:$0xff]
  %v1437 = vld [vmem:[%s1414 + $0xb0] sm:$0xff]
  %v1438 = vld [vmem:[%s1414 + $0xb8] sm:$0xff]
  %v1439 = vld [vmem:[%s1414 + $0xc0] sm:$0xff]
  %v1440 = vld [vmem:[%s1414 + $0xc8] sm:$0xff]
  %v1441 = vld [vmem:[%s1414 + $0xd0] sm:$0xff]
  %v1442 = vld [vmem:[%s1414 + $0xd8] sm:$0xff]
  %v1443 = vld [vmem:[%s1414 + $0xe0] sm:$0xff]
  %v1444 = vld [vmem:[%s1414 + $0xe8] sm:$0xff]
  %v1445 = vld [vmem:[%s1414 + $0xf0] sm:$0xff]
  %v1446 = vld [vmem:[%s1414 + $0xf8] sm:$0xff]
  %v1447 = vld [vmem:[%s1414 + $0x100] sm:$0xff]
  %v1448 = vld [vmem:[%s1414 + $0x108] sm:$0xff]
  %v1449 = vld [vmem:[%s1414 + $0x110] sm:$0xff]
  %v1450 = vld [vmem:[%s1414 + $0x118] sm:$0xff]
  %v1451 = vld [vmem:[%s1414 + $0x120] sm:$0xff]
  %v1452 = vld [vmem:[%s1414 + $0x128] sm:$0xff]
  %v1453 = vld [vmem:[%s1414 + $0x130] sm:$0xff]
  %v1454 = vld [vmem:[%s1414 + $0x138] sm:$0xff]
  %v1455 = vld [vmem:[%s1414 + $0x140] sm:$0xff]
  %v1456 = vld [vmem:[%s1414 + $0x148] sm:$0xff]
  %v1457 = vld [vmem:[%s1414 + $0x150] sm:$0xff]
  %v1458 = vld [vmem:[%s1414 + $0x158] sm:$0xff]
  %v1459 = vld [vmem:[%s1414 + $0x160] sm:$0xff]
  %v1460 = vld [vmem:[%s1414 + $0x168] sm:$0xff]
  %v1461 = vld [vmem:[%s1414 + $0x170] sm:$0xff]
  %v1462 = vld [vmem:[%s1414 + $0x178] sm:$0xff]
  %s1463 = scalar_lea.vmem %s5, 1
  %v1464 = vld [vmem:[%s1463] sm:$0x1]
  %v1465 = vld [vmem:[#allocation3] sm:$0xff]
  %v1466 = vld [vmem:[#allocation3 + $0x8] sm:$0xff]
  %v1467 = vld [vmem:[#allocation3 + $0x10] sm:$0xff]
  %1468 = vmatpush.msra.mxu0 %v1460
  %1469 = vmatpush.msra.mxu0 %v1457
  %1470 = vmatpush.msra.mxu0 %v1454
  %1471 = vmatpush.msra.mxu0 %v1451
  %1472 = vmatpush.msra.mxu0 %v1448
  %1473 = vmatpush.msra.mxu0 %v1445
  %1474 = vmatpush.msra.mxu0 %v1442
  %1475 = vmatpush.msra.mxu0 %v1439
  %1476 = vmatpush.msra.mxu0 %v1436
  %1477 = vmatpush.msra.mxu0 %v1433
  %1478 = vmatpush.msra.mxu0 %v1430
  %1479 = vmatpush.msra.mxu0 %v1427
  %1480 = vmatpush.msra.mxu0 %v1424
  %1481 = vmatpush.msra.mxu0 %v1421
  %1482 = vmatpush.msra.mxu0 %v1418
  %1483 = vmatpush.msra.mxu0 %v1415
  %1484 = vmatmul.f32.gmra.mxu0 0.0
  %v1485 = vpop.f32.mrf.mxu0
  %v1486 = vadd.f32 0.0, %v1485
  %1487 = vdwg.mxu0
  %1488 = vmatpush.msra.mxu0 %v1461
  %1489 = vmatpush.msra.mxu0 %v1458
  %1490 = vmatpush.msra.mxu0 %v1455
  %1491 = vmatpush.msra.mxu0 %v1452
  %1492 = vmatpush.msra.mxu0 %v1449
  %1493 = vmatpush.msra.mxu0 %v1446
  %1494 = vmatpush.msra.mxu0 %v1443
  %1495 = vmatpush.msra.mxu0 %v1440
  %1496 = vmatpush.msra.mxu0 %v1437
  %1497 = vmatpush.msra.mxu0 %v1434
  %1498 = vmatpush.msra.mxu0 %v1431
  %1499 = vmatpush.msra.mxu0 %v1428
  %1500 = vmatpush.msra.mxu0 %v1425
  %1501 = vmatpush.msra.mxu0 %v1422
  %1502 = vmatpush.msra.mxu0 %v1419
  %1503 = vmatpush.msra.mxu0 %v1416
  %1504 = vmatmul.f32.gmra.mxu0 0.0
  %v1505 = vpop.f32.mrf.mxu0
  %v1506 = vadd.f32 0.0, %v1505
  %1507 = vdwg.mxu0
  %1508 = vmatpush.msra.mxu0 %v1462
  %1509 = vmatpush.msra.mxu0 %v1459
  %1510 = vmatpush.msra.mxu0 %v1456
  %1511 = vmatpush.msra.mxu0 %v1453
  %1512 = vmatpush.msra.mxu0 %v1450
  %1513 = vmatpush.msra.mxu0 %v1447
  %1514 = vmatpush.msra.mxu0 %v1444
  %1515 = vmatpush.msra.mxu0 %v1441
  %1516 = vmatpush.msra.mxu0 %v1438
  %1517 = vmatpush.msra.mxu0 %v1435
  %1518 = vmatpush.msra.mxu0 %v1432
  %1519 = vmatpush.msra.mxu0 %v1429
  %1520 = vmatpush.msra.mxu0 %v1426
  %1521 = vmatpush.msra.mxu0 %v1423
  %1522 = vmatpush.msra.mxu0 %v1420
  %1523 = vmatpush.msra.mxu0 %v1417
  %1524 = vmatmul.f32.gmra.mxu0 0.0
  %v1525 = vpop.f32.mrf.mxu0
  %v1526 = vadd.f32 0.0, %v1525
  %1527 = vdwg.mxu0
  %v1528 = vadd.f32 %v1465, %v1486
  %v1529 = vadd.f32 %v1466, %v1506
  %v1530 = vxor.u32 %v1528, 2147483648
  %v1531 = vxor.u32 %v1529, 2147483648
  %v1532 = vmul.f32 %v1530, 1.442695
  %v1533 = vpow.pop %v1532
  %v1534 = vmul.f32 %v1531, 1.442695
  %v1535 = vpow.pop %v1534
  %v1536 = vadd.f32 %v1533, 1.0
  %v1537 = vadd.f32 %v1535, 1.0
  %v1538 = vrcp.pop %v1536
  %v1539 = vmul.f32 %v1536, %v1538
  %v1540 = vsub.f32 1.0, %v1539
  %v1541 = vmul.f32 %v1538, %v1540
  %v1542 = vadd.f32 %v1538, %v1541
  %vm1543 = vweird.f32 %v1536
  %vm1544 = vweird.f32 %v1538
  %vm1545 = vmor %vm1543, %vm1544
  %v1546 = vsel %vm1545, %v1538, %v1542
  %v1547 = vand.u32 2147483647, %v1536
  %vm1548 = vcmp.eq.f32.partialorder %v1547, 8.507059e+37
  %v1549 = vand.u32 %v1536, 2147483648
  %v1550 = vor.u32 1.1754944e-38, %v1549
  %v1551 = vsel %vm1548, %v1550, %v1546
  %v1552 = vmul.f32 1.0, %v1551
  %v1553 = vrcp.pop %v1537
  %v1554 = vmul.f32 %v1537, %v1553
  %v1555 = vsub.f32 1.0, %v1554
  %v1556 = vmul.f32 %v1553, %v1555
  %v1557 = vadd.f32 %v1553, %v1556
  %vm1558 = vweird.f32 %v1537
  %vm1559 = vweird.f32 %v1553
  %vm1560 = vmor %vm1558, %vm1559
  %v1561 = vsel %vm1560, %v1553, %v1557
  %v1562 = vand.u32 2147483647, %v1537
  %vm1563 = vcmp.eq.f32.partialorder %v1562, 8.507059e+37
  %v1564 = vand.u32 %v1537, 2147483648
  %v1565 = vor.u32 1.1754944e-38, %v1564
  %v1566 = vsel %vm1563, %v1565, %v1561
  %v1567 = vmul.f32 1.0, %v1566
  %v1569 = vperm.slane %v1464, 0
  %v1571 = vadd.f32 %v1526, %v1569
  %v1572 = vmul.f32 %v1552, %v1571
  %v1573 = vadd.f32 %v1467, %v1572
  %v1574 = vtanh.pop %v1573
  %v1575 = vsub.f32 1.0, %v1567
  %v1576 = vmul.f32 %v1575, %v1574
  %v1577 = vmul.f32 %v1567, 0.0
  %v1578 = vadd.f32 %v1576, %v1577
  %1579 = vst [vmem:[#allocation2] sm:$0xff] %v1578
  %v1580 = vld [vmem:[%s404] sm:$0xff]
  %v1581 = vld [vmem:[%s404 + $0x8] sm:$0xff]
  %v1582 = vld [vmem:[%s404 + $0x10] sm:$0xff]
  %1583 = vmatpush.msra.mxu0 %v1460
  %1584 = vmatpush.msra.mxu0 %v1457
  %1585 = vmatpush.msra.mxu0 %v1454
  %1586 = vmatpush.msra.mxu0 %v1451
  %1587 = vmatpush.msra.mxu0 %v1448
  %1588 = vmatpush.msra.mxu0 %v1445
  %1589 = vmatpush.msra.mxu0 %v1442
  %1590 = vmatpush.msra.mxu0 %v1439
  %1591 = vmatpush.msra.mxu0 %v1436
  %1592 = vmatpush.msra.mxu0 %v1433
  %1593 = vmatpush.msra.mxu0 %v1430
  %1594 = vmatpush.msra.mxu0 %v1427
  %1595 = vmatpush.msra.mxu0 %v1424
  %1596 = vmatpush.msra.mxu0 %v1421
  %1597 = vmatpush.msra.mxu0 %v1418
  %1598 = vmatpush.msra.mxu0 %v1415
  %1599 = vmatmul.f32.gmra.mxu0 %v1578
  %v1600 = vpop.f32.mrf.mxu0
  %v1601 = vadd.f32 0.0, %v1600
  %1602 = vdwg.mxu0
  %1603 = vmatpush.msra.mxu0 %v1461
  %1604 = vmatpush.msra.mxu0 %v1458
  %1605 = vmatpush.msra.mxu0 %v1455
  %1606 = vmatpush.msra.mxu0 %v1452
  %1607 = vmatpush.msra.mxu0 %v1449
  %1608 = vmatpush.msra.mxu0 %v1446
  %1609 = vmatpush.msra.mxu0 %v1443
  %1610 = vmatpush.msra.mxu0 %v1440
  %1611 = vmatpush.msra.mxu0 %v1437
  %1612 = vmatpush.msra.mxu0 %v1434
  %1613 = vmatpush.msra.mxu0 %v1431
  %1614 = vmatpush.msra.mxu0 %v1428
  %1615 = vmatpush.msra.mxu0 %v1425
  %1616 = vmatpush.msra.mxu0 %v1422
  %1617 = vmatpush.msra.mxu0 %v1419
  %1618 = vmatpush.msra.mxu0 %v1416
  %1619 = vmatmul.f32.gmra.mxu0 %v1578
  %v1620 = vpop.f32.mrf.mxu0
  %v1621 = vadd.f32 0.0, %v1620
  %1622 = vdwg.mxu0
  %1623 = vmatpush.msra.mxu0 %v1462
  %1624 = vmatpush.msra.mxu0 %v1459
  %1625 = vmatpush.msra.mxu0 %v1456
  %1626 = vmatpush.msra.mxu0 %v1453
  %1627 = vmatpush.msra.mxu0 %v1450
  %1628 = vmatpush.msra.mxu0 %v1447
  %1629 = vmatpush.msra.mxu0 %v1444
  %1630 = vmatpush.msra.mxu0 %v1441
  %1631 = vmatpush.msra.mxu0 %v1438
  %1632 = vmatpush.msra.mxu0 %v1435
  %1633 = vmatpush.msra.mxu0 %v1432
  %1634 = vmatpush.msra.mxu0 %v1429
  %1635 = vmatpush.msra.mxu0 %v1426
  %1636 = vmatpush.msra.mxu0 %v1423
  %1637 = vmatpush.msra.mxu0 %v1420
  %1638 = vmatpush.msra.mxu0 %v1417
  %1639 = vmatmul.f32.gmra.mxu0 %v1578
  %v1640 = vpop.f32.mrf.mxu0
  %v1641 = vadd.f32 0.0, %v1640
  %1642 = vdwg.mxu0
  %v1643 = vadd.f32 %v1580, %v1601
  %v1644 = vadd.f32 %v1581, %v1621
  %v1645 = vxor.u32 %v1643, 2147483648
  %v1646 = vxor.u32 %v1644, 2147483648
  %v1647 = vmul.f32 %v1645, 1.442695
  %v1648 = vpow.pop %v1647
  %v1649 = vmul.f32 %v1646, 1.442695
  %v1650 = vpow.pop %v1649
  %v1651 = vadd.f32 %v1648, 1.0
  %v1652 = vadd.f32 %v1650, 1.0
  %v1653 = vrcp.pop %v1651
  %v1654 = vmul.f32 %v1651, %v1653
  %v1655 = vsub.f32 1.0, %v1654
  %v1656 = vmul.f32 %v1653, %v1655
  %v1657 = vadd.f32 %v1653, %v1656
  %vm1658 = vweird.f32 %v1651
  %vm1659 = vweird.f32 %v1653
  %vm1660 = vmor %vm1658, %vm1659
  %v1661 = vsel %vm1660, %v1653, %v1657
  %v1662 = vand.u32 2147483647, %v1651
  %vm1663 = vcmp.eq.f32.partialorder %v1662, 8.507059e+37
  %v1664 = vand.u32 %v1651, 2147483648
  %v1665 = vor.u32 1.1754944e-38, %v1664
  %v1666 = vsel %vm1663, %v1665, %v1661
  %v1667 = vmul.f32 1.0, %v1666
  %v1668 = vrcp.pop %v1652
  %v1669 = vmul.f32 %v1652, %v1668
  %v1670 = vsub.f32 1.0, %v1669
  %v1671 = vmul.f32 %v1668, %v1670
  %v1672 = vadd.f32 %v1668, %v1671
  %vm1673 = vweird.f32 %v1652
  %vm1674 = vweird.f32 %v1668
  %vm1675 = vmor %vm1673, %vm1674
  %v1676 = vsel %vm1675, %v1668, %v1672
  %v1677 = vand.u32 2147483647, %v1652
  %vm1678 = vcmp.eq.f32.partialorder %v1677, 8.507059e+37
  %v1679 = vand.u32 %v1652, 2147483648
  %v1680 = vor.u32 1.1754944e-38, %v1679
  %v1681 = vsel %vm1678, %v1680, %v1676
  %v1682 = vmul.f32 1.0, %v1681
  %v1683 = vadd.f32 %v1641, %v1569
  %v1684 = vmul.f32 %v1667, %v1683
  %v1685 = vadd.f32 %v1582, %v1684
  %v1686 = vtanh.pop %v1685
  %v1687 = vsub.f32 1.0, %v1682
  %v1688 = vmul.f32 %v1687, %v1686
  %v1689 = vmul.f32 %v1682, %v1578
  %v1690 = vadd.f32 %v1688, %v1689
  %1691 = vst [vmem:[%s516] sm:$0xff] %v1690
  %v1692 = vld [vmem:[%s518] sm:$0xff]
  %v1693 = vld [vmem:[%s518 + $0x8] sm:$0xff]
  %v1694 = vld [vmem:[%s518 + $0x10] sm:$0xff]
  %1695 = vmatpush.msra.mxu0 %v1460
  %1696 = vmatpush.msra.mxu0 %v1457
  %1697 = vmatpush.msra.mxu0 %v1454
  %1698 = vmatpush.msra.mxu0 %v1451
  %1699 = vmatpush.msra.mxu0 %v1448
  %1700 = vmatpush.msra.mxu0 %v1445
  %1701 = vmatpush.msra.mxu0 %v1442
  %1702 = vmatpush.msra.mxu0 %v1439
  %1703 = vmatpush.msra.mxu0 %v1436
  %1704 = vmatpush.msra.mxu0 %v1433
  %1705 = vmatpush.msra.mxu0 %v1430
  %1706 = vmatpush.msra.mxu0 %v1427
  %1707 = vmatpush.msra.mxu0 %v1424
  %1708 = vmatpush.msra.mxu0 %v1421
  %1709 = vmatpush.msra.mxu0 %v1418
  %1710 = vmatpush.msra.mxu0 %v1415
  %1711 = vmatmul.f32.gmra.mxu0 %v1690
  %v1712 = vpop.f32.mrf.mxu0
  %v1713 = vadd.f32 0.0, %v1712
  %1714 = vdwg.mxu0
  %1715 = vmatpush.msra.mxu0 %v1461
  %1716 = vmatpush.msra.mxu0 %v1458
  %1717 = vmatpush.msra.mxu0 %v1455
  %1718 = vmatpush.msra.mxu0 %v1452
  %1719 = vmatpush.msra.mxu0 %v1449
  %1720 = vmatpush.msra.mxu0 %v1446
  %1721 = vmatpush.msra.mxu0 %v1443
  %1722 = vmatpush.msra.mxu0 %v1440
  %1723 = vmatpush.msra.mxu0 %v1437
  %1724 = vmatpush.msra.mxu0 %v1434
  %1725 = vmatpush.msra.mxu0 %v1431
  %1726 = vmatpush.msra.mxu0 %v1428
  %1727 = vmatpush.msra.mxu0 %v1425
  %1728 = vmatpush.msra.mxu0 %v1422
  %1729 = vmatpush.msra.mxu0 %v1419
  %1730 = vmatpush.msra.mxu0 %v1416
  %1731 = vmatmul.f32.gmra.mxu0 %v1690
  %v1732 = vpop.f32.mrf.mxu0
  %v1733 = vadd.f32 0.0, %v1732
  %1734 = vdwg.mxu0
  %1735 = vmatpush.msra.mxu0 %v1462
  %1736 = vmatpush.msra.mxu0 %v1459
  %1737 = vmatpush.msra.mxu0 %v1456
  %1738 = vmatpush.msra.mxu0 %v1453
  %1739 = vmatpush.msra.mxu0 %v1450
  %1740 = vmatpush.msra.mxu0 %v1447
  %1741 = vmatpush.msra.mxu0 %v1444
  %1742 = vmatpush.msra.mxu0 %v1441
  %1743 = vmatpush.msra.mxu0 %v1438
  %1744 = vmatpush.msra.mxu0 %v1435
  %1745 = vmatpush.msra.mxu0 %v1432
  %1746 = vmatpush.msra.mxu0 %v1429
  %1747 = vmatpush.msra.mxu0 %v1426
  %1748 = vmatpush.msra.mxu0 %v1423
  %1749 = vmatpush.msra.mxu0 %v1420
  %1750 = vmatpush.msra.mxu0 %v1417
  %1751 = vmatmul.f32.gmra.mxu0 %v1690
  %v1752 = vpop.f32.mrf.mxu0
  %v1753 = vadd.f32 0.0, %v1752
  %1754 = vdwg.mxu0
  %v1755 = vadd.f32 %v1692, %v1713
  %v1756 = vadd.f32 %v1693, %v1733
  %v1757 = vxor.u32 %v1755, 2147483648
  %v1758 = vxor.u32 %v1756, 2147483648
  %v1759 = vmul.f32 %v1757, 1.442695
  %v1760 = vpow.pop %v1759
  %v1761 = vmul.f32 %v1758, 1.442695
  %v1762 = vpow.pop %v1761
  %v1763 = vadd.f32 %v1760, 1.0
  %v1764 = vadd.f32 %v1762, 1.0
  %v1765 = vrcp.pop %v1763
  %v1766 = vmul.f32 %v1763, %v1765
  %v1767 = vsub.f32 1.0, %v1766
  %v1768 = vmul.f32 %v1765, %v1767
  %v1769 = vadd.f32 %v1765, %v1768
  %vm1770 = vweird.f32 %v1763
  %vm1771 = vweird.f32 %v1765
  %vm1772 = vmor %vm1770, %vm1771
  %v1773 = vsel %vm1772, %v1765, %v1769
  %v1774 = vand.u32 2147483647, %v1763
  %vm1775 = vcmp.eq.f32.partialorder %v1774, 8.507059e+37
  %v1776 = vand.u32 %v1763, 2147483648
  %v1777 = vor.u32 1.1754944e-38, %v1776
  %v1778 = vsel %vm1775, %v1777, %v1773
  %v1779 = vmul.f32 1.0, %v1778
  %v1780 = vrcp.pop %v1764
  %v1781 = vmul.f32 %v1764, %v1780
  %v1782 = vsub.f32 1.0, %v1781
  %v1783 = vmul.f32 %v1780, %v1782
  %v1784 = vadd.f32 %v1780, %v1783
  %vm1785 = vweird.f32 %v1764
  %vm1786 = vweird.f32 %v1780
  %vm1787 = vmor %vm1785, %vm1786
  %v1788 = vsel %vm1787, %v1780, %v1784
  %v1789 = vand.u32 2147483647, %v1764
  %vm1790 = vcmp.eq.f32.partialorder %v1789, 8.507059e+37
  %v1791 = vand.u32 %v1764, 2147483648
  %v1792 = vor.u32 1.1754944e-38, %v1791
  %v1793 = vsel %vm1790, %v1792, %v1788
  %v1794 = vmul.f32 1.0, %v1793
  %v1795 = vadd.f32 %v1753, %v1569
  %v1796 = vmul.f32 %v1779, %v1795
  %v1797 = vadd.f32 %v1694, %v1796
  %v1798 = vtanh.pop %v1797
  %v1799 = vsub.f32 1.0, %v1794
  %v1800 = vmul.f32 %v1799, %v1798
  %v1801 = vmul.f32 %v1794, %v1690
  %v1802 = vadd.f32 %v1800, %v1801
  %1803 = vst [vmem:[%s630] sm:$0xff] %v1802
  %v1804 = vld [vmem:[%s632] sm:$0xff]
  %v1805 = vld [vmem:[%s632 + $0x8] sm:$0xff]
  %v1806 = vld [vmem:[%s632 + $0x10] sm:$0xff]
  %1807 = vmatpush.msra.mxu0 %v1460
  %1808 = vmatpush.msra.mxu0 %v1457
  %1809 = vmatpush.msra.mxu0 %v1454
  %1810 = vmatpush.msra.mxu0 %v1451
  %1811 = vmatpush.msra.mxu0 %v1448
  %1812 = vmatpush.msra.mxu0 %v1445
  %1813 = vmatpush.msra.mxu0 %v1442
  %1814 = vmatpush.msra.mxu0 %v1439
  %1815 = vmatpush.msra.mxu0 %v1436
  %1816 = vmatpush.msra.mxu0 %v1433
  %1817 = vmatpush.msra.mxu0 %v1430
  %1818 = vmatpush.msra.mxu0 %v1427
  %1819 = vmatpush.msra.mxu0 %v1424
  %1820 = vmatpush.msra.mxu0 %v1421
  %1821 = vmatpush.msra.mxu0 %v1418
  %1822 = vmatpush.msra.mxu0 %v1415
  %1823 = vmatmul.f32.gmra.mxu0 %v1802
  %v1824 = vpop.f32.mrf.mxu0
  %v1825 = vadd.f32 0.0, %v1824
  %1826 = vdwg.mxu0
  %1827 = vmatpush.msra.mxu0 %v1461
  %1828 = vmatpush.msra.mxu0 %v1458
  %1829 = vmatpush.msra.mxu0 %v1455
  %1830 = vmatpush.msra.mxu0 %v1452
  %1831 = vmatpush.msra.mxu0 %v1449
  %1832 = vmatpush.msra.mxu0 %v1446
  %1833 = vmatpush.msra.mxu0 %v1443
  %1834 = vmatpush.msra.mxu0 %v1440
  %1835 = vmatpush.msra.mxu0 %v1437
  %1836 = vmatpush.msra.mxu0 %v1434
  %1837 = vmatpush.msra.mxu0 %v1431
  %1838 = vmatpush.msra.mxu0 %v1428
  %1839 = vmatpush.msra.mxu0 %v1425
  %1840 = vmatpush.msra.mxu0 %v1422
  %1841 = vmatpush.msra.mxu0 %v1419
  %1842 = vmatpush.msra.mxu0 %v1416
  %1843 = vmatmul.f32.gmra.mxu0 %v1802
  %v1844 = vpop.f32.mrf.mxu0
  %v1845 = vadd.f32 0.0, %v1844
  %1846 = vdwg.mxu0
  %1847 = vmatpush.msra.mxu0 %v1462
  %1848 = vmatpush.msra.mxu0 %v1459
  %1849 = vmatpush.msra.mxu0 %v1456
  %1850 = vmatpush.msra.mxu0 %v1453
  %1851 = vmatpush.msra.mxu0 %v1450
  %1852 = vmatpush.msra.mxu0 %v1447
  %1853 = vmatpush.msra.mxu0 %v1444
  %1854 = vmatpush.msra.mxu0 %v1441
  %1855 = vmatpush.msra.mxu0 %v1438
  %1856 = vmatpush.msra.mxu0 %v1435
  %1857 = vmatpush.msra.mxu0 %v1432
  %1858 = vmatpush.msra.mxu0 %v1429
  %1859 = vmatpush.msra.mxu0 %v1426
  %1860 = vmatpush.msra.mxu0 %v1423
  %1861 = vmatpush.msra.mxu0 %v1420
  %1862 = vmatpush.msra.mxu0 %v1417
  %1863 = vmatmul.f32.gmra.mxu0 %v1802
  %v1864 = vpop.f32.mrf.mxu0
  %v1865 = vadd.f32 0.0, %v1864
  %1866 = vdwg.mxu0
  %v1867 = vadd.f32 %v1804, %v1825
  %v1868 = vadd.f32 %v1805, %v1845
  %v1869 = vxor.u32 %v1867, 2147483648
  %v1870 = vxor.u32 %v1868, 2147483648
  %v1871 = vmul.f32 %v1869, 1.442695
  %v1872 = vpow.pop %v1871
  %v1873 = vmul.f32 %v1870, 1.442695
  %v1874 = vpow.pop %v1873
  %v1875 = vadd.f32 %v1872, 1.0
  %v1876 = vadd.f32 %v1874, 1.0
  %v1877 = vrcp.pop %v1875
  %v1878 = vmul.f32 %v1875, %v1877
  %v1879 = vsub.f32 1.0, %v1878
  %v1880 = vmul.f32 %v1877, %v1879
  %v1881 = vadd.f32 %v1877, %v1880
  %vm1882 = vweird.f32 %v1875
  %vm1883 = vweird.f32 %v1877
  %vm1884 = vmor %vm1882, %vm1883
  %v1885 = vsel %vm1884, %v1877, %v1881
  %v1886 = vand.u32 2147483647, %v1875
  %vm1887 = vcmp.eq.f32.partialorder %v1886, 8.507059e+37
  %v1888 = vand.u32 %v1875, 2147483648
  %v1889 = vor.u32 1.1754944e-38, %v1888
  %v1890 = vsel %vm1887, %v1889, %v1885
  %v1891 = vmul.f32 1.0, %v1890
  %v1892 = vrcp.pop %v1876
  %v1893 = vmul.f32 %v1876, %v1892
  %v1894 = vsub.f32 1.0, %v1893
  %v1895 = vmul.f32 %v1892, %v1894
  %v1896 = vadd.f32 %v1892, %v1895
  %vm1897 = vweird.f32 %v1876
  %vm1898 = vweird.f32 %v1892
  %vm1899 = vmor %vm1897, %vm1898
  %v1900 = vsel %vm1899, %v1892, %v1896
  %v1901 = vand.u32 2147483647, %v1876
  %vm1902 = vcmp.eq.f32.partialorder %v1901, 8.507059e+37
  %v1903 = vand.u32 %v1876, 2147483648
  %v1904 = vor.u32 1.1754944e-38, %v1903
  %v1905 = vsel %vm1902, %v1904, %v1900
  %v1906 = vmul.f32 1.0, %v1905
  %v1907 = vadd.f32 %v1865, %v1569
  %v1908 = vmul.f32 %v1891, %v1907
  %v1909 = vadd.f32 %v1806, %v1908
  %v1910 = vtanh.pop %v1909
  %v1911 = vsub.f32 1.0, %v1906
  %v1912 = vmul.f32 %v1911, %v1910
  %v1913 = vmul.f32 %v1906, %v1802
  %v1914 = vadd.f32 %v1912, %v1913
  %1915 = vst [vmem:[%s744] sm:$0xff] %v1914
  %v1916 = vld [vmem:[%s746] sm:$0xff]
  %v1917 = vld [vmem:[%s746 + $0x8] sm:$0xff]
  %v1918 = vld [vmem:[%s746 + $0x10] sm:$0xff]
  %1919 = vmatpush.msra.mxu0 %v1460
  %1920 = vmatpush.msra.mxu0 %v1457
  %1921 = vmatpush.msra.mxu0 %v1454
  %1922 = vmatpush.msra.mxu0 %v1451
  %1923 = vmatpush.msra.mxu0 %v1448
  %1924 = vmatpush.msra.mxu0 %v1445
  %1925 = vmatpush.msra.mxu0 %v1442
  %1926 = vmatpush.msra.mxu0 %v1439
  %1927 = vmatpush.msra.mxu0 %v1436
  %1928 = vmatpush.msra.mxu0 %v1433
  %1929 = vmatpush.msra.mxu0 %v1430
  %1930 = vmatpush.msra.mxu0 %v1427
  %1931 = vmatpush.msra.mxu0 %v1424
  %1932 = vmatpush.msra.mxu0 %v1421
  %1933 = vmatpush.msra.mxu0 %v1418
  %1934 = vmatpush.msra.mxu0 %v1415
  %1935 = vmatmul.f32.gmra.mxu0 %v1914
  %v1936 = vpop.f32.mrf.mxu0
  %v1937 = vadd.f32 0.0, %v1936
  %1938 = vdwg.mxu0
  %1939 = vmatpush.msra.mxu0 %v1461
  %1940 = vmatpush.msra.mxu0 %v1458
  %1941 = vmatpush.msra.mxu0 %v1455
  %1942 = vmatpush.msra.mxu0 %v1452
  %1943 = vmatpush.msra.mxu0 %v1449
  %1944 = vmatpush.msra.mxu0 %v1446
  %1945 = vmatpush.msra.mxu0 %v1443
  %1946 = vmatpush.msra.mxu0 %v1440
  %1947 = vmatpush.msra.mxu0 %v1437
  %1948 = vmatpush.msra.mxu0 %v1434
  %1949 = vmatpush.msra.mxu0 %v1431
  %1950 = vmatpush.msra.mxu0 %v1428
  %1951 = vmatpush.msra.mxu0 %v1425
  %1952 = vmatpush.msra.mxu0 %v1422
  %1953 = vmatpush.msra.mxu0 %v1419
  %1954 = vmatpush.msra.mxu0 %v1416
  %1955 = vmatmul.f32.gmra.mxu0 %v1914
  %v1956 = vpop.f32.mrf.mxu0
  %v1957 = vadd.f32 0.0, %v1956
  %1958 = vdwg.mxu0
  %1959 = vmatpush.msra.mxu0 %v1462
  %1960 = vmatpush.msra.mxu0 %v1459
  %1961 = vmatpush.msra.mxu0 %v1456
  %1962 = vmatpush.msra.mxu0 %v1453
  %1963 = vmatpush.msra.mxu0 %v1450
  %1964 = vmatpush.msra.mxu0 %v1447
  %1965 = vmatpush.msra.mxu0 %v1444
  %1966 = vmatpush.msra.mxu0 %v1441
  %1967 = vmatpush.msra.mxu0 %v1438
  %1968 = vmatpush.msra.mxu0 %v1435
  %1969 = vmatpush.msra.mxu0 %v1432
  %1970 = vmatpush.msra.mxu0 %v1429
  %1971 = vmatpush.msra.mxu0 %v1426
  %1972 = vmatpush.msra.mxu0 %v1423
  %1973 = vmatpush.msra.mxu0 %v1420
  %1974 = vmatpush.msra.mxu0 %v1417
  %1975 = vmatmul.f32.gmra.mxu0 %v1914
  %v1976 = vpop.f32.mrf.mxu0
  %v1977 = vadd.f32 0.0, %v1976
  %1978 = vdwg.mxu0
  %v1979 = vadd.f32 %v1916, %v1937
  %v1980 = vadd.f32 %v1917, %v1957
  %v1981 = vxor.u32 %v1979, 2147483648
  %v1982 = vxor.u32 %v1980, 2147483648
  %v1983 = vmul.f32 %v1981, 1.442695
  %v1984 = vpow.pop %v1983
  %v1985 = vmul.f32 %v1982, 1.442695
  %v1986 = vpow.pop %v1985
  %v1987 = vadd.f32 %v1984, 1.0
  %v1988 = vadd.f32 %v1986, 1.0
  %v1989 = vrcp.pop %v1987
  %v1990 = vmul.f32 %v1987, %v1989
  %v1991 = vsub.f32 1.0, %v1990
  %v1992 = vmul.f32 %v1989, %v1991
  %v1993 = vadd.f32 %v1989, %v1992
  %vm1994 = vweird.f32 %v1987
  %vm1995 = vweird.f32 %v1989
  %vm1996 = vmor %vm1994, %vm1995
  %v1997 = vsel %vm1996, %v1989, %v1993
  %v1998 = vand.u32 2147483647, %v1987
  %vm1999 = vcmp.eq.f32.partialorder %v1998, 8.507059e+37
  %v2000 = vand.u32 %v1987, 2147483648
  %v2001 = vor.u32 1.1754944e-38, %v2000
  %v2002 = vsel %vm1999, %v2001, %v1997
  %v2003 = vmul.f32 1.0, %v2002
  %v2004 = vrcp.pop %v1988
  %v2005 = vmul.f32 %v1988, %v2004
  %v2006 = vsub.f32 1.0, %v2005
  %v2007 = vmul.f32 %v2004, %v2006
  %v2008 = vadd.f32 %v2004, %v2007
  %vm2009 = vweird.f32 %v1988
  %vm2010 = vweird.f32 %v2004
  %vm2011 = vmor %vm2009, %vm2010
  %v2012 = vsel %vm2011, %v2004, %v2008
  %v2013 = vand.u32 2147483647, %v1988
  %vm2014 = vcmp.eq.f32.partialorder %v2013, 8.507059e+37
  %v2015 = vand.u32 %v1988, 2147483648
  %v2016 = vor.u32 1.1754944e-38, %v2015
  %v2017 = vsel %vm2014, %v2016, %v2012
  %v2018 = vmul.f32 1.0, %v2017
  %v2019 = vadd.f32 %v1977, %v1569
  %v2020 = vmul.f32 %v2003, %v2019
  %v2021 = vadd.f32 %v1918, %v2020
  %v2022 = vtanh.pop %v2021
  %v2023 = vsub.f32 1.0, %v2018
  %v2024 = vmul.f32 %v2023, %v2022
  %v2025 = vmul.f32 %v2018, %v1914
  %v2026 = vadd.f32 %v2024, %v2025
  %2027 = vst [vmem:[%s858] sm:$0xff] %v2026
  %v2028 = vld [vmem:[%s860] sm:$0xff]
  %v2029 = vld [vmem:[%s860 + $0x8] sm:$0xff]
  %v2030 = vld [vmem:[%s860 + $0x10] sm:$0xff]
  %2031 = vmatpush.msra.mxu0 %v1460
  %2032 = vmatpush.msra.mxu0 %v1457
  %2033 = vmatpush.msra.mxu0 %v1454
  %2034 = vmatpush.msra.mxu0 %v1451
  %2035 = vmatpush.msra.mxu0 %v1448
  %2036 = vmatpush.msra.mxu0 %v1445
  %2037 = vmatpush.msra.mxu0 %v1442
  %2038 = vmatpush.msra.mxu0 %v1439
  %2039 = vmatpush.msra.mxu0 %v1436
  %2040 = vmatpush.msra.mxu0 %v1433
  %2041 = vmatpush.msra.mxu0 %v1430
  %2042 = vmatpush.msra.mxu0 %v1427
  %2043 = vmatpush.msra.mxu0 %v1424
  %2044 = vmatpush.msra.mxu0 %v1421
  %2045 = vmatpush.msra.mxu0 %v1418
  %2046 = vmatpush.msra.mxu0 %v1415
  %2047 = vmatmul.f32.gmra.mxu0 %v2026
  %v2048 = vpop.f32.mrf.mxu0
  %v2049 = vadd.f32 0.0, %v2048
  %2050 = vdwg.mxu0
  %2051 = vmatpush.msra.mxu0 %v1461
  %2052 = vmatpush.msra.mxu0 %v1458
  %2053 = vmatpush.msra.mxu0 %v1455
  %2054 = vmatpush.msra.mxu0 %v1452
  %2055 = vmatpush.msra.mxu0 %v1449
  %2056 = vmatpush.msra.mxu0 %v1446
  %2057 = vmatpush.msra.mxu0 %v1443
  %2058 = vmatpush.msra.mxu0 %v1440
  %2059 = vmatpush.msra.mxu0 %v1437
  %2060 = vmatpush.msra.mxu0 %v1434
  %2061 = vmatpush.msra.mxu0 %v1431
  %2062 = vmatpush.msra.mxu0 %v1428
  %2063 = vmatpush.msra.mxu0 %v1425
  %2064 = vmatpush.msra.mxu0 %v1422
  %2065 = vmatpush.msra.mxu0 %v1419
  %2066 = vmatpush.msra.mxu0 %v1416
  %2067 = vmatmul.f32.gmra.mxu0 %v2026
  %v2068 = vpop.f32.mrf.mxu0
  %v2069 = vadd.f32 0.0, %v2068
  %2070 = vdwg.mxu0
  %2071 = vmatpush.msra.mxu0 %v1462
  %2072 = vmatpush.msra.mxu0 %v1459
  %2073 = vmatpush.msra.mxu0 %v1456
  %2074 = vmatpush.msra.mxu0 %v1453
  %2075 = vmatpush.msra.mxu0 %v1450
  %2076 = vmatpush.msra.mxu0 %v1447
  %2077 = vmatpush.msra.mxu0 %v1444
  %2078 = vmatpush.msra.mxu0 %v1441
  %2079 = vmatpush.msra.mxu0 %v1438
  %2080 = vmatpush.msra.mxu0 %v1435
  %2081 = vmatpush.msra.mxu0 %v1432
  %2082 = vmatpush.msra.mxu0 %v1429
  %2083 = vmatpush.msra.mxu0 %v1426
  %2084 = vmatpush.msra.mxu0 %v1423
  %2085 = vmatpush.msra.mxu0 %v1420
  %2086 = vmatpush.msra.mxu0 %v1417
  %2087 = vmatmul.f32.gmra.mxu0 %v2026
  %v2088 = vpop.f32.mrf.mxu0
  %v2089 = vadd.f32 0.0, %v2088
  %2090 = vdwg.mxu0
  %v2091 = vadd.f32 %v2028, %v2049
  %v2092 = vadd.f32 %v2029, %v2069
  %v2093 = vxor.u32 %v2091, 2147483648
  %v2094 = vxor.u32 %v2092, 2147483648
  %v2095 = vmul.f32 %v2093, 1.442695
  %v2096 = vpow.pop %v2095
  %v2097 = vmul.f32 %v2094, 1.442695
  %v2098 = vpow.pop %v2097
  %v2099 = vadd.f32 %v2096, 1.0
  %v2100 = vadd.f32 %v2098, 1.0
  %v2101 = vrcp.pop %v2099
  %v2102 = vmul.f32 %v2099, %v2101
  %v2103 = vsub.f32 1.0, %v2102
  %v2104 = vmul.f32 %v2101, %v2103
  %v2105 = vadd.f32 %v2101, %v2104
  %vm2106 = vweird.f32 %v2099
  %vm2107 = vweird.f32 %v2101
  %vm2108 = vmor %vm2106, %vm2107
  %v2109 = vsel %vm2108, %v2101, %v2105
  %v2110 = vand.u32 2147483647, %v2099
  %vm2111 = vcmp.eq.f32.partialorder %v2110, 8.507059e+37
  %v2112 = vand.u32 %v2099, 2147483648
  %v2113 = vor.u32 1.1754944e-38, %v2112
  %v2114 = vsel %vm2111, %v2113, %v2109
  %v2115 = vmul.f32 1.0, %v2114
  %v2116 = vrcp.pop %v2100
  %v2117 = vmul.f32 %v2100, %v2116
  %v2118 = vsub.f32 1.0, %v2117
  %v2119 = vmul.f32 %v2116, %v2118
  %v2120 = vadd.f32 %v2116, %v2119
  %vm2121 = vweird.f32 %v2100
  %vm2122 = vweird.f32 %v2116
  %vm2123 = vmor %vm2121, %vm2122
  %v2124 = vsel %vm2123, %v2116, %v2120
  %v2125 = vand.u32 2147483647, %v2100
  %vm2126 = vcmp.eq.f32.partialorder %v2125, 8.507059e+37
  %v2127 = vand.u32 %v2100, 2147483648
  %v2128 = vor.u32 1.1754944e-38, %v2127
  %v2129 = vsel %vm2126, %v2128, %v2124
  %v2130 = vmul.f32 1.0, %v2129
  %v2131 = vadd.f32 %v2089, %v1569
  %v2132 = vmul.f32 %v2115, %v2131
  %v2133 = vadd.f32 %v2030, %v2132
  %v2134 = vtanh.pop %v2133
  %v2135 = vsub.f32 1.0, %v2130
  %v2136 = vmul.f32 %v2135, %v2134
  %v2137 = vmul.f32 %v2130, %v2026
  %v2138 = vadd.f32 %v2136, %v2137
  %2139 = vst [vmem:[%s972] sm:$0xff] %v2138
  %v2140 = vld [vmem:[%s974] sm:$0xff]
  %v2141 = vld [vmem:[%s974 + $0x8] sm:$0xff]
  %v2142 = vld [vmem:[%s974 + $0x10] sm:$0xff]
  %2143 = vmatpush.msra.mxu0 %v1460
  %2144 = vmatpush.msra.mxu0 %v1457
  %2145 = vmatpush.msra.mxu0 %v1454
  %2146 = vmatpush.msra.mxu0 %v1451
  %2147 = vmatpush.msra.mxu0 %v1448
  %2148 = vmatpush.msra.mxu0 %v1445
  %2149 = vmatpush.msra.mxu0 %v1442
  %2150 = vmatpush.msra.mxu0 %v1439
  %2151 = vmatpush.msra.mxu0 %v1436
  %2152 = vmatpush.msra.mxu0 %v1433
  %2153 = vmatpush.msra.mxu0 %v1430
  %2154 = vmatpush.msra.mxu0 %v1427
  %2155 = vmatpush.msra.mxu0 %v1424
  %2156 = vmatpush.msra.mxu0 %v1421
  %2157 = vmatpush.msra.mxu0 %v1418
  %2158 = vmatpush.msra.mxu0 %v1415
  %2159 = vmatmul.f32.gmra.mxu0 %v2138
  %v2160 = vpop.f32.mrf.mxu0
  %v2161 = vadd.f32 0.0, %v2160
  %2162 = vdwg.mxu0
  %2163 = vmatpush.msra.mxu0 %v1461
  %2164 = vmatpush.msra.mxu0 %v1458
  %2165 = vmatpush.msra.mxu0 %v1455
  %2166 = vmatpush.msra.mxu0 %v1452
  %2167 = vmatpush.msra.mxu0 %v1449
  %2168 = vmatpush.msra.mxu0 %v1446
  %2169 = vmatpush.msra.mxu0 %v1443
  %2170 = vmatpush.msra.mxu0 %v1440
  %2171 = vmatpush.msra.mxu0 %v1437
  %2172 = vmatpush.msra.mxu0 %v1434
  %2173 = vmatpush.msra.mxu0 %v1431
  %2174 = vmatpush.msra.mxu0 %v1428
  %2175 = vmatpush.msra.mxu0 %v1425
  %2176 = vmatpush.msra.mxu0 %v1422
  %2177 = vmatpush.msra.mxu0 %v1419
  %2178 = vmatpush.msra.mxu0 %v1416
  %2179 = vmatmul.f32.gmra.mxu0 %v2138
  %v2180 = vpop.f32.mrf.mxu0
  %v2181 = vadd.f32 0.0, %v2180
  %2182 = vdwg.mxu0
  %2183 = vmatpush.msra.mxu0 %v1462
  %2184 = vmatpush.msra.mxu0 %v1459
  %2185 = vmatpush.msra.mxu0 %v1456
  %2186 = vmatpush.msra.mxu0 %v1453
  %2187 = vmatpush.msra.mxu0 %v1450
  %2188 = vmatpush.msra.mxu0 %v1447
  %2189 = vmatpush.msra.mxu0 %v1444
  %2190 = vmatpush.msra.mxu0 %v1441
  %2191 = vmatpush.msra.mxu0 %v1438
  %2192 = vmatpush.msra.mxu0 %v1435
  %2193 = vmatpush.msra.mxu0 %v1432
  %2194 = vmatpush.msra.mxu0 %v1429
  %2195 = vmatpush.msra.mxu0 %v1426
  %2196 = vmatpush.msra.mxu0 %v1423
  %2197 = vmatpush.msra.mxu0 %v1420
  %2198 = vmatpush.msra.mxu0 %v1417
  %2199 = vmatmul.f32.gmra.mxu0 %v2138
  %v2200 = vpop.f32.mrf.mxu0
  %v2201 = vadd.f32 0.0, %v2200
  %2202 = vdwg.mxu0
  %v2203 = vadd.f32 %v2140, %v2161
  %v2204 = vadd.f32 %v2141, %v2181
  %v2205 = vxor.u32 %v2203, 2147483648
  %v2206 = vxor.u32 %v2204, 2147483648
  %v2207 = vmul.f32 %v2205, 1.442695
  %v2208 = vpow.pop %v2207
  %v2209 = vmul.f32 %v2206, 1.442695
  %v2210 = vpow.pop %v2209
  %v2211 = vadd.f32 %v2208, 1.0
  %v2212 = vadd.f32 %v2210, 1.0
  %v2213 = vrcp.pop %v2211
  %v2214 = vmul.f32 %v2211, %v2213
  %v2215 = vsub.f32 1.0, %v2214
  %v2216 = vmul.f32 %v2213, %v2215
  %v2217 = vadd.f32 %v2213, %v2216
  %vm2218 = vweird.f32 %v2211
  %vm2219 = vweird.f32 %v2213
  %vm2220 = vmor %vm2218, %vm2219
  %v2221 = vsel %vm2220, %v2213, %v2217
  %v2222 = vand.u32 2147483647, %v2211
  %vm2223 = vcmp.eq.f32.partialorder %v2222, 8.507059e+37
  %v2224 = vand.u32 %v2211, 2147483648
  %v2225 = vor.u32 1.1754944e-38, %v2224
  %v2226 = vsel %vm2223, %v2225, %v2221
  %v2227 = vmul.f32 1.0, %v2226
  %v2228 = vrcp.pop %v2212
  %v2229 = vmul.f32 %v2212, %v2228
  %v2230 = vsub.f32 1.0, %v2229
  %v2231 = vmul.f32 %v2228, %v2230
  %v2232 = vadd.f32 %v2228, %v2231
  %vm2233 = vweird.f32 %v2212
  %vm2234 = vweird.f32 %v2228
  %vm2235 = vmor %vm2233, %vm2234
  %v2236 = vsel %vm2235, %v2228, %v2232
  %v2237 = vand.u32 2147483647, %v2212
  %vm2238 = vcmp.eq.f32.partialorder %v2237, 8.507059e+37
  %v2239 = vand.u32 %v2212, 2147483648
  %v2240 = vor.u32 1.1754944e-38, %v2239
  %v2241 = vsel %vm2238, %v2240, %v2236
  %v2242 = vmul.f32 1.0, %v2241
  %v2243 = vadd.f32 %v2201, %v1569
  %v2244 = vmul.f32 %v2227, %v2243
  %v2245 = vadd.f32 %v2142, %v2244
  %v2246 = vtanh.pop %v2245
  %v2247 = vsub.f32 1.0, %v2242
  %v2248 = vmul.f32 %v2247, %v2246
  %v2249 = vmul.f32 %v2242, %v2138
  %v2250 = vadd.f32 %v2248, %v2249
  %2251 = vst [vmem:[%s1086] sm:$0xff] %v2250
  %v2252 = vld [vmem:[%s1088] sm:$0xff]
  %v2253 = vld [vmem:[%s1088 + $0x8] sm:$0xff]
  %v2254 = vld [vmem:[%s1088 + $0x10] sm:$0xff]
  %2255 = vmatpush.msra.mxu0 %v1460
  %2256 = vmatpush.msra.mxu0 %v1457
  %2257 = vmatpush.msra.mxu0 %v1454
  %2258 = vmatpush.msra.mxu0 %v1451
  %2259 = vmatpush.msra.mxu0 %v1448
  %2260 = vmatpush.msra.mxu0 %v1445
  %2261 = vmatpush.msra.mxu0 %v1442
  %2262 = vmatpush.msra.mxu0 %v1439
  %2263 = vmatpush.msra.mxu0 %v1436
  %2264 = vmatpush.msra.mxu0 %v1433
  %2265 = vmatpush.msra.mxu0 %v1430
  %2266 = vmatpush.msra.mxu0 %v1427
  %2267 = vmatpush.msra.mxu0 %v1424
  %2268 = vmatpush.msra.mxu0 %v1421
  %2269 = vmatpush.msra.mxu0 %v1418
  %2270 = vmatpush.msra.mxu0 %v1415
  %2271 = vmatmul.f32.gmra.mxu0 %v2250
  %v2272 = vpop.f32.mrf.mxu0
  %v2273 = vadd.f32 0.0, %v2272
  %2274 = vdwg.mxu0
  %2275 = vmatpush.msra.mxu0 %v1461
  %2276 = vmatpush.msra.mxu0 %v1458
  %2277 = vmatpush.msra.mxu0 %v1455
  %2278 = vmatpush.msra.mxu0 %v1452
  %2279 = vmatpush.msra.mxu0 %v1449
  %2280 = vmatpush.msra.mxu0 %v1446
  %2281 = vmatpush.msra.mxu0 %v1443
  %2282 = vmatpush.msra.mxu0 %v1440
  %2283 = vmatpush.msra.mxu0 %v1437
  %2284 = vmatpush.msra.mxu0 %v1434
  %2285 = vmatpush.msra.mxu0 %v1431
  %2286 = vmatpush.msra.mxu0 %v1428
  %2287 = vmatpush.msra.mxu0 %v1425
  %2288 = vmatpush.msra.mxu0 %v1422
  %2289 = vmatpush.msra.mxu0 %v1419
  %2290 = vmatpush.msra.mxu0 %v1416
  %2291 = vmatmul.f32.gmra.mxu0 %v2250
  %v2292 = vpop.f32.mrf.mxu0
  %v2293 = vadd.f32 0.0, %v2292
  %2294 = vdwg.mxu0
  %2295 = vmatpush.msra.mxu0 %v1462
  %2296 = vmatpush.msra.mxu0 %v1459
  %2297 = vmatpush.msra.mxu0 %v1456
  %2298 = vmatpush.msra.mxu0 %v1453
  %2299 = vmatpush.msra.mxu0 %v1450
  %2300 = vmatpush.msra.mxu0 %v1447
  %2301 = vmatpush.msra.mxu0 %v1444
  %2302 = vmatpush.msra.mxu0 %v1441
  %2303 = vmatpush.msra.mxu0 %v1438
  %2304 = vmatpush.msra.mxu0 %v1435
  %2305 = vmatpush.msra.mxu0 %v1432
  %2306 = vmatpush.msra.mxu0 %v1429
  %2307 = vmatpush.msra.mxu0 %v1426
  %2308 = vmatpush.msra.mxu0 %v1423
  %2309 = vmatpush.msra.mxu0 %v1420
  %2310 = vmatpush.msra.mxu0 %v1417
  %2311 = vmatmul.f32.gmra.mxu0 %v2250
  %v2312 = vpop.f32.mrf.mxu0
  %v2313 = vadd.f32 0.0, %v2312
  %2314 = vdwg.mxu0
  %v2315 = vadd.f32 %v2252, %v2273
  %v2316 = vadd.f32 %v2253, %v2293
  %v2317 = vxor.u32 %v2315, 2147483648
  %v2318 = vxor.u32 %v2316, 2147483648
  %v2319 = vmul.f32 %v2317, 1.442695
  %v2320 = vpow.pop %v2319
  %v2321 = vmul.f32 %v2318, 1.442695
  %v2322 = vpow.pop %v2321
  %v2323 = vadd.f32 %v2320, 1.0
  %v2324 = vadd.f32 %v2322, 1.0
  %v2325 = vrcp.pop %v2323
  %v2326 = vmul.f32 %v2323, %v2325
  %v2327 = vsub.f32 1.0, %v2326
  %v2328 = vmul.f32 %v2325, %v2327
  %v2329 = vadd.f32 %v2325, %v2328
  %vm2330 = vweird.f32 %v2323
  %vm2331 = vweird.f32 %v2325
  %vm2332 = vmor %vm2330, %vm2331
  %v2333 = vsel %vm2332, %v2325, %v2329
  %v2334 = vand.u32 2147483647, %v2323
  %vm2335 = vcmp.eq.f32.partialorder %v2334, 8.507059e+37
  %v2336 = vand.u32 %v2323, 2147483648
  %v2337 = vor.u32 1.1754944e-38, %v2336
  %v2338 = vsel %vm2335, %v2337, %v2333
  %v2339 = vmul.f32 1.0, %v2338
  %v2340 = vrcp.pop %v2324
  %v2341 = vmul.f32 %v2324, %v2340
  %v2342 = vsub.f32 1.0, %v2341
  %v2343 = vmul.f32 %v2340, %v2342
  %v2344 = vadd.f32 %v2340, %v2343
  %vm2345 = vweird.f32 %v2324
  %vm2346 = vweird.f32 %v2340
  %vm2347 = vmor %vm2345, %vm2346
  %v2348 = vsel %vm2347, %v2340, %v2344
  %v2349 = vand.u32 2147483647, %v2324
  %vm2350 = vcmp.eq.f32.partialorder %v2349, 8.507059e+37
  %v2351 = vand.u32 %v2324, 2147483648
  %v2352 = vor.u32 1.1754944e-38, %v2351
  %v2353 = vsel %vm2350, %v2352, %v2348
  %v2354 = vmul.f32 1.0, %v2353
  %v2355 = vadd.f32 %v2313, %v1569
  %v2356 = vmul.f32 %v2339, %v2355
  %v2357 = vadd.f32 %v2254, %v2356
  %v2358 = vtanh.pop %v2357
  %v2359 = vsub.f32 1.0, %v2354
  %v2360 = vmul.f32 %v2359, %v2358
  %v2361 = vmul.f32 %v2354, %v2250
  %v2362 = vadd.f32 %v2360, %v2361
  %2363 = vst [vmem:[%s1200] sm:$0xff] %v2362
  %v2364 = vld [vmem:[#allocation2] sm:$0xff]
  %v2365 = vld [vmem:[#allocation2 + $0x8] sm:$0xff]
  %v2366 = vld [vmem:[#allocation2 + $0x10] sm:$0xff]
  %v2367 = vld [vmem:[#allocation2 + $0x18] sm:$0xff]
  %v2368 = vld [vmem:[#allocation2 + $0x20] sm:$0xff]
  %v2369 = vld [vmem:[#allocation2 + $0x28] sm:$0xff]
  %v2370 = vld [vmem:[#allocation2 + $0x30] sm:$0xff]
  %v2371 = vld [vmem:[#allocation2 + $0x38] sm:$0xff]
  %s2372 = scalar_lea.vmem %s2, 384
  %v2373 = vld [vmem:[%s2372] sm:$0xff]
  %v2374 = vld [vmem:[%s2372 + $0x8] sm:$0xff]
  %v2375 = vld [vmem:[%s2372 + $0x10] sm:$0xff]
  %v2376 = vld [vmem:[%s2372 + $0x18] sm:$0xff]
  %v2377 = vld [vmem:[%s2372 + $0x20] sm:$0xff]
  %v2378 = vld [vmem:[%s2372 + $0x28] sm:$0xff]
  %v2379 = vld [vmem:[%s2372 + $0x30] sm:$0xff]
  %v2380 = vld [vmem:[%s2372 + $0x38] sm:$0xff]
  %v2381 = vld [vmem:[%s2372 + $0x40] sm:$0xff]
  %v2382 = vld [vmem:[%s2372 + $0x48] sm:$0xff]
  %v2383 = vld [vmem:[%s2372 + $0x50] sm:$0xff]
  %v2384 = vld [vmem:[%s2372 + $0x58] sm:$0xff]
  %v2385 = vld [vmem:[%s2372 + $0x60] sm:$0xff]
  %v2386 = vld [vmem:[%s2372 + $0x68] sm:$0xff]
  %v2387 = vld [vmem:[%s2372 + $0x70] sm:$0xff]
  %v2388 = vld [vmem:[%s2372 + $0x78] sm:$0xff]
  %v2389 = vld [vmem:[%s2372 + $0x80] sm:$0xff]
  %v2390 = vld [vmem:[%s2372 + $0x88] sm:$0xff]
  %v2391 = vld [vmem:[%s2372 + $0x90] sm:$0xff]
  %v2392 = vld [vmem:[%s2372 + $0x98] sm:$0xff]
  %v2393 = vld [vmem:[%s2372 + $0xa0] sm:$0xff]
  %v2394 = vld [vmem:[%s2372 + $0xa8] sm:$0xff]
  %v2395 = vld [vmem:[%s2372 + $0xb0] sm:$0xff]
  %v2396 = vld [vmem:[%s2372 + $0xb8] sm:$0xff]
  %v2397 = vld [vmem:[%s2372 + $0xc0] sm:$0xff]
  %v2398 = vld [vmem:[%s2372 + $0xc8] sm:$0xff]
  %v2399 = vld [vmem:[%s2372 + $0xd0] sm:$0xff]
  %v2400 = vld [vmem:[%s2372 + $0xd8] sm:$0xff]
  %v2401 = vld [vmem:[%s2372 + $0xe0] sm:$0xff]
  %v2402 = vld [vmem:[%s2372 + $0xe8] sm:$0xff]
  %v2403 = vld [vmem:[%s2372 + $0xf0] sm:$0xff]
  %v2404 = vld [vmem:[%s2372 + $0xf8] sm:$0xff]
  %v2405 = vld [vmem:[%s2372 + $0x100] sm:$0xff]
  %v2406 = vld [vmem:[%s2372 + $0x108] sm:$0xff]
  %v2407 = vld [vmem:[%s2372 + $0x110] sm:$0xff]
  %v2408 = vld [vmem:[%s2372 + $0x118] sm:$0xff]
  %v2409 = vld [vmem:[%s2372 + $0x120] sm:$0xff]
  %v2410 = vld [vmem:[%s2372 + $0x128] sm:$0xff]
  %v2411 = vld [vmem:[%s2372 + $0x130] sm:$0xff]
  %v2412 = vld [vmem:[%s2372 + $0x138] sm:$0xff]
  %v2413 = vld [vmem:[%s2372 + $0x140] sm:$0xff]
  %v2414 = vld [vmem:[%s2372 + $0x148] sm:$0xff]
  %v2415 = vld [vmem:[%s2372 + $0x150] sm:$0xff]
  %v2416 = vld [vmem:[%s2372 + $0x158] sm:$0xff]
  %v2417 = vld [vmem:[%s2372 + $0x160] sm:$0xff]
  %v2418 = vld [vmem:[%s2372 + $0x168] sm:$0xff]
  %v2419 = vld [vmem:[%s2372 + $0x170] sm:$0xff]
  %v2420 = vld [vmem:[%s2372 + $0x178] sm:$0xff]
  %s2421 = scalar_lea.vmem %s4, 6
  %v2422 = vld [vmem:[%s2421] sm:$0x7]
  %v2424 = vperm.slane %v2422, 0
  %v2425 = vperm.slane %v2422, 1
  %v2426 = vperm.slane %v2422, 2
  %2430 = vmatpush.msra.mxu0 %v2418
  %2431 = vmatpush.msra.mxu0 %v2415
  %2432 = vmatpush.msra.mxu0 %v2412
  %2433 = vmatpush.msra.mxu0 %v2409
  %2434 = vmatpush.msra.mxu0 %v2406
  %2435 = vmatpush.msra.mxu0 %v2403
  %2436 = vmatpush.msra.mxu0 %v2400
  %2437 = vmatpush.msra.mxu0 %v2397
  %2438 = vmatpush.msra.mxu0 %v2394
  %2439 = vmatpush.msra.mxu0 %v2391
  %2440 = vmatpush.msra.mxu0 %v2388
  %2441 = vmatpush.msra.mxu0 %v2385
  %2442 = vmatpush.msra.mxu0 %v2382
  %2443 = vmatpush.msra.mxu0 %v2379
  %2444 = vmatpush.msra.mxu0 %v2376
  %2445 = vmatpush.msra.mxu0 %v2373
  %2446 = vmatmul.f32.gmra.mxu0 %v2364
  %v2447 = vpop.f32.mrf.mxu0
  %v2448 = vadd.f32 %v2424, %v2447
  %2449 = vmatmul.f32.gmra.mxu0 %v2365
  %v2450 = vpop.f32.mrf.mxu0
  %v2451 = vadd.f32 %v2424, %v2450
  %2452 = vmatmul.f32.gmra.mxu0 %v2366
  %v2453 = vpop.f32.mrf.mxu0
  %v2454 = vadd.f32 %v2424, %v2453
  %2455 = vmatmul.f32.gmra.mxu0 %v2367
  %v2456 = vpop.f32.mrf.mxu0
  %v2457 = vadd.f32 %v2424, %v2456
  %2458 = vmatmul.f32.gmra.mxu0 %v2368
  %v2459 = vpop.f32.mrf.mxu0
  %v2460 = vadd.f32 %v2424, %v2459
  %2461 = vmatmul.f32.gmra.mxu0 %v2369
  %v2462 = vpop.f32.mrf.mxu0
  %v2463 = vadd.f32 %v2424, %v2462
  %2464 = vmatmul.f32.gmra.mxu0 %v2370
  %v2465 = vpop.f32.mrf.mxu0
  %v2466 = vadd.f32 %v2424, %v2465
  %2467 = vmatmul.f32.gmra.mxu0 %v2371
  %v2468 = vpop.f32.mrf.mxu0
  %v2469 = vadd.f32 %v2424, %v2468
  %2470 = vdwg.mxu0
  %2471 = vmatpush.msra.mxu0 %v2419
  %2472 = vmatpush.msra.mxu0 %v2416
  %2473 = vmatpush.msra.mxu0 %v2413
  %2474 = vmatpush.msra.mxu0 %v2410
  %2475 = vmatpush.msra.mxu0 %v2407
  %2476 = vmatpush.msra.mxu0 %v2404
  %2477 = vmatpush.msra.mxu0 %v2401
  %2478 = vmatpush.msra.mxu0 %v2398
  %2479 = vmatpush.msra.mxu0 %v2395
  %2480 = vmatpush.msra.mxu0 %v2392
  %2481 = vmatpush.msra.mxu0 %v2389
  %2482 = vmatpush.msra.mxu0 %v2386
  %2483 = vmatpush.msra.mxu0 %v2383
  %2484 = vmatpush.msra.mxu0 %v2380
  %2485 = vmatpush.msra.mxu0 %v2377
  %2486 = vmatpush.msra.mxu0 %v2374
  %2487 = vmatmul.f32.gmra.mxu0 %v2364
  %v2488 = vpop.f32.mrf.mxu0
  %v2489 = vadd.f32 %v2425, %v2488
  %2490 = vmatmul.f32.gmra.mxu0 %v2365
  %v2491 = vpop.f32.mrf.mxu0
  %v2492 = vadd.f32 %v2425, %v2491
  %2493 = vmatmul.f32.gmra.mxu0 %v2366
  %v2494 = vpop.f32.mrf.mxu0
  %v2495 = vadd.f32 %v2425, %v2494
  %2496 = vmatmul.f32.gmra.mxu0 %v2367
  %v2497 = vpop.f32.mrf.mxu0
  %v2498 = vadd.f32 %v2425, %v2497
  %2499 = vmatmul.f32.gmra.mxu0 %v2368
  %v2500 = vpop.f32.mrf.mxu0
  %v2501 = vadd.f32 %v2425, %v2500
  %2502 = vmatmul.f32.gmra.mxu0 %v2369
  %v2503 = vpop.f32.mrf.mxu0
  %v2504 = vadd.f32 %v2425, %v2503
  %2505 = vmatmul.f32.gmra.mxu0 %v2370
  %v2506 = vpop.f32.mrf.mxu0
  %v2507 = vadd.f32 %v2425, %v2506
  %2508 = vmatmul.f32.gmra.mxu0 %v2371
  %v2509 = vpop.f32.mrf.mxu0
  %v2510 = vadd.f32 %v2425, %v2509
  %2511 = vdwg.mxu0
  %2512 = vmatpush.msra.mxu0 %v2420
  %2513 = vmatpush.msra.mxu0 %v2417
  %2514 = vmatpush.msra.mxu0 %v2414
  %2515 = vmatpush.msra.mxu0 %v2411
  %2516 = vmatpush.msra.mxu0 %v2408
  %2517 = vmatpush.msra.mxu0 %v2405
  %2518 = vmatpush.msra.mxu0 %v2402
  %2519 = vmatpush.msra.mxu0 %v2399
  %2520 = vmatpush.msra.mxu0 %v2396
  %2521 = vmatpush.msra.mxu0 %v2393
  %2522 = vmatpush.msra.mxu0 %v2390
  %2523 = vmatpush.msra.mxu0 %v2387
  %2524 = vmatpush.msra.mxu0 %v2384
  %2525 = vmatpush.msra.mxu0 %v2381
  %2526 = vmatpush.msra.mxu0 %v2378
  %2527 = vmatpush.msra.mxu0 %v2375
  %2528 = vmatmul.f32.gmra.mxu0 %v2364
  %v2529 = vpop.f32.mrf.mxu0
  %v2530 = vadd.f32 %v2426, %v2529
  %2531 = vmatmul.f32.gmra.mxu0 %v2365
  %v2532 = vpop.f32.mrf.mxu0
  %v2533 = vadd.f32 %v2426, %v2532
  %2534 = vmatmul.f32.gmra.mxu0 %v2366
  %v2535 = vpop.f32.mrf.mxu0
  %v2536 = vadd.f32 %v2426, %v2535
  %2537 = vmatmul.f32.gmra.mxu0 %v2367
  %v2538 = vpop.f32.mrf.mxu0
  %v2539 = vadd.f32 %v2426, %v2538
  %2540 = vmatmul.f32.gmra.mxu0 %v2368
  %v2541 = vpop.f32.mrf.mxu0
  %v2542 = vadd.f32 %v2426, %v2541
  %2543 = vmatmul.f32.gmra.mxu0 %v2369
  %v2544 = vpop.f32.mrf.mxu0
  %v2545 = vadd.f32 %v2426, %v2544
  %2546 = vmatmul.f32.gmra.mxu0 %v2370
  %v2547 = vpop.f32.mrf.mxu0
  %v2548 = vadd.f32 %v2426, %v2547
  %2549 = vmatmul.f32.gmra.mxu0 %v2371
  %v2550 = vpop.f32.mrf.mxu0
  %v2551 = vadd.f32 %v2426, %v2550
  %2552 = vdwg.mxu0
  %2553 = vst [vmem:[#allocation3] sm:$0xff] %v2448
  %2554 = vst [vmem:[#allocation3 + $0x8] sm:$0xff] %v2489
  %2555 = vst [vmem:[#allocation3 + $0x10] sm:$0xff] %v2530
  %2556 = vst [vmem:[#allocation3 + $0x18] sm:$0xff] %v2451
  %2557 = vst [vmem:[#allocation3 + $0x20] sm:$0xff] %v2492
  %2558 = vst [vmem:[#allocation3 + $0x28] sm:$0xff] %v2533
  %2559 = vst [vmem:[#allocation3 + $0x30] sm:$0xff] %v2454
  %2560 = vst [vmem:[#allocation3 + $0x38] sm:$0xff] %v2495
  %2561 = vst [vmem:[#allocation3 + $0x40] sm:$0xff] %v2536
  %2562 = vst [vmem:[#allocation3 + $0x48] sm:$0xff] %v2457
  %2563 = vst [vmem:[#allocation3 + $0x50] sm:$0xff] %v2498
  %2564 = vst [vmem:[#allocation3 + $0x58] sm:$0xff] %v2539
  %2565 = vst [vmem:[#allocation3 + $0x60] sm:$0xff] %v2460
  %2566 = vst [vmem:[#allocation3 + $0x68] sm:$0xff] %v2501
  %2567 = vst [vmem:[#allocation3 + $0x70] sm:$0xff] %v2542
  %2568 = vst [vmem:[#allocation3 + $0x78] sm:$0xff] %v2463
  %2569 = vst [vmem:[#allocation3 + $0x80] sm:$0xff] %v2504
  %2570 = vst [vmem:[#allocation3 + $0x88] sm:$0xff] %v2545
  %2571 = vst [vmem:[#allocation3 + $0x90] sm:$0xff] %v2466
  %2572 = vst [vmem:[#allocation3 + $0x98] sm:$0xff] %v2507
  %2573 = vst [vmem:[#allocation3 + $0xa0] sm:$0xff] %v2548
  %2574 = vst [vmem:[#allocation3 + $0xa8] sm:$0xff] %v2469
  %2575 = vst [vmem:[#allocation3 + $0xb0] sm:$0xff] %v2510
  %2576 = vst [vmem:[#allocation3 + $0xb8] sm:$0xff] %v2551
  %s2577 = scalar_lea.vmem %s3, 768
  %v2578 = vld [vmem:[%s2577] sm:$0xff]
  %v2579 = vld [vmem:[%s2577 + $0x8] sm:$0xff]
  %v2580 = vld [vmem:[%s2577 + $0x10] sm:$0xff]
  %v2581 = vld [vmem:[%s2577 + $0x18] sm:$0xff]
  %v2582 = vld [vmem:[%s2577 + $0x20] sm:$0xff]
  %v2583 = vld [vmem:[%s2577 + $0x28] sm:$0xff]
  %v2584 = vld [vmem:[%s2577 + $0x30] sm:$0xff]
  %v2585 = vld [vmem:[%s2577 + $0x38] sm:$0xff]
  %v2586 = vld [vmem:[%s2577 + $0x40] sm:$0xff]
  %v2587 = vld [vmem:[%s2577 + $0x48] sm:$0xff]
  %v2588 = vld [vmem:[%s2577 + $0x50] sm:$0xff]
  %v2589 = vld [vmem:[%s2577 + $0x58] sm:$0xff]
  %v2590 = vld [vmem:[%s2577 + $0x60] sm:$0xff]
  %v2591 = vld [vmem:[%s2577 + $0x68] sm:$0xff]
  %v2592 = vld [vmem:[%s2577 + $0x70] sm:$0xff]
  %v2593 = vld [vmem:[%s2577 + $0x78] sm:$0xff]
  %v2594 = vld [vmem:[%s2577 + $0x80] sm:$0xff]
  %v2595 = vld [vmem:[%s2577 + $0x88] sm:$0xff]
  %v2596 = vld [vmem:[%s2577 + $0x90] sm:$0xff]
  %v2597 = vld [vmem:[%s2577 + $0x98] sm:$0xff]
  %v2598 = vld [vmem:[%s2577 + $0xa0] sm:$0xff]
  %v2599 = vld [vmem:[%s2577 + $0xa8] sm:$0xff]
  %v2600 = vld [vmem:[%s2577 + $0xb0] sm:$0xff]
  %v2601 = vld [vmem:[%s2577 + $0xb8] sm:$0xff]
  %v2602 = vld [vmem:[%s2577 + $0xc0] sm:$0xff]
  %v2603 = vld [vmem:[%s2577 + $0xc8] sm:$0xff]
  %v2604 = vld [vmem:[%s2577 + $0xd0] sm:$0xff]
  %v2605 = vld [vmem:[%s2577 + $0xd8] sm:$0xff]
  %v2606 = vld [vmem:[%s2577 + $0xe0] sm:$0xff]
  %v2607 = vld [vmem:[%s2577 + $0xe8] sm:$0xff]
  %v2608 = vld [vmem:[%s2577 + $0xf0] sm:$0xff]
  %v2609 = vld [vmem:[%s2577 + $0xf8] sm:$0xff]
  %v2610 = vld [vmem:[%s2577 + $0x100] sm:$0xff]
  %v2611 = vld [vmem:[%s2577 + $0x108] sm:$0xff]
  %v2612 = vld [vmem:[%s2577 + $0x110] sm:$0xff]
  %v2613 = vld [vmem:[%s2577 + $0x118] sm:$0xff]
  %v2614 = vld [vmem:[%s2577 + $0x120] sm:$0xff]
  %v2615 = vld [vmem:[%s2577 + $0x128] sm:$0xff]
  %v2616 = vld [vmem:[%s2577 + $0x130] sm:$0xff]
  %v2617 = vld [vmem:[%s2577 + $0x138] sm:$0xff]
  %v2618 = vld [vmem:[%s2577 + $0x140] sm:$0xff]
  %v2619 = vld [vmem:[%s2577 + $0x148] sm:$0xff]
  %v2620 = vld [vmem:[%s2577 + $0x150] sm:$0xff]
  %v2621 = vld [vmem:[%s2577 + $0x158] sm:$0xff]
  %v2622 = vld [vmem:[%s2577 + $0x160] sm:$0xff]
  %v2623 = vld [vmem:[%s2577 + $0x168] sm:$0xff]
  %v2624 = vld [vmem:[%s2577 + $0x170] sm:$0xff]
  %v2625 = vld [vmem:[%s2577 + $0x178] sm:$0xff]
  %s2626 = scalar_lea.vmem %s5, 2
  %v2627 = vld [vmem:[%s2626] sm:$0x1]
  %v2628 = vld [vmem:[#allocation3] sm:$0xff]
  %v2629 = vld [vmem:[#allocation3 + $0x8] sm:$0xff]
  %v2630 = vld [vmem:[#allocation3 + $0x10] sm:$0xff]
  %2631 = vmatpush.msra.mxu0 %v2623
  %2632 = vmatpush.msra.mxu0 %v2620
  %2633 = vmatpush.msra.mxu0 %v2617
  %2634 = vmatpush.msra.mxu0 %v2614
  %2635 = vmatpush.msra.mxu0 %v2611
  %2636 = vmatpush.msra.mxu0 %v2608
  %2637 = vmatpush.msra.mxu0 %v2605
  %2638 = vmatpush.msra.mxu0 %v2602
  %2639 = vmatpush.msra.mxu0 %v2599
  %2640 = vmatpush.msra.mxu0 %v2596
  %2641 = vmatpush.msra.mxu0 %v2593
  %2642 = vmatpush.msra.mxu0 %v2590
  %2643 = vmatpush.msra.mxu0 %v2587
  %2644 = vmatpush.msra.mxu0 %v2584
  %2645 = vmatpush.msra.mxu0 %v2581
  %2646 = vmatpush.msra.mxu0 %v2578
  %2647 = vmatmul.f32.gmra.mxu0 0.0
  %v2648 = vpop.f32.mrf.mxu0
  %v2649 = vadd.f32 0.0, %v2648
  %2650 = vdwg.mxu0
  %2651 = vmatpush.msra.mxu0 %v2624
  %2652 = vmatpush.msra.mxu0 %v2621
  %2653 = vmatpush.msra.mxu0 %v2618
  %2654 = vmatpush.msra.mxu0 %v2615
  %2655 = vmatpush.msra.mxu0 %v2612
  %2656 = vmatpush.msra.mxu0 %v2609
  %2657 = vmatpush.msra.mxu0 %v2606
  %2658 = vmatpush.msra.mxu0 %v2603
  %2659 = vmatpush.msra.mxu0 %v2600
  %2660 = vmatpush.msra.mxu0 %v2597
  %2661 = vmatpush.msra.mxu0 %v2594
  %2662 = vmatpush.msra.mxu0 %v2591
  %2663 = vmatpush.msra.mxu0 %v2588
  %2664 = vmatpush.msra.mxu0 %v2585
  %2665 = vmatpush.msra.mxu0 %v2582
  %2666 = vmatpush.msra.mxu0 %v2579
  %2667 = vmatmul.f32.gmra.mxu0 0.0
  %v2668 = vpop.f32.mrf.mxu0
  %v2669 = vadd.f32 0.0, %v2668
  %2670 = vdwg.mxu0
  %2671 = vmatpush.msra.mxu0 %v2625
  %2672 = vmatpush.msra.mxu0 %v2622
  %2673 = vmatpush.msra.mxu0 %v2619
  %2674 = vmatpush.msra.mxu0 %v2616
  %2675 = vmatpush.msra.mxu0 %v2613
  %2676 = vmatpush.msra.mxu0 %v2610
  %2677 = vmatpush.msra.mxu0 %v2607
  %2678 = vmatpush.msra.mxu0 %v2604
  %2679 = vmatpush.msra.mxu0 %v2601
  %2680 = vmatpush.msra.mxu0 %v2598
  %2681 = vmatpush.msra.mxu0 %v2595
  %2682 = vmatpush.msra.mxu0 %v2592
  %2683 = vmatpush.msra.mxu0 %v2589
  %2684 = vmatpush.msra.mxu0 %v2586
  %2685 = vmatpush.msra.mxu0 %v2583
  %2686 = vmatpush.msra.mxu0 %v2580
  %2687 = vmatmul.f32.gmra.mxu0 0.0
  %v2688 = vpop.f32.mrf.mxu0
  %v2689 = vadd.f32 0.0, %v2688
  %2690 = vdwg.mxu0
  %v2691 = vadd.f32 %v2628, %v2649
  %v2692 = vadd.f32 %v2629, %v2669
  %v2693 = vxor.u32 %v2691, 2147483648
  %v2694 = vxor.u32 %v2692, 2147483648
  %v2695 = vmul.f32 %v2693, 1.442695
  %v2696 = vpow.pop %v2695
  %v2697 = vmul.f32 %v2694, 1.442695
  %v2698 = vpow.pop %v2697
  %v2699 = vadd.f32 %v2696, 1.0
  %v2700 = vadd.f32 %v2698, 1.0
  %v2701 = vrcp.pop %v2699
  %v2702 = vmul.f32 %v2699, %v2701
  %v2703 = vsub.f32 1.0, %v2702
  %v2704 = vmul.f32 %v2701, %v2703
  %v2705 = vadd.f32 %v2701, %v2704
  %vm2706 = vweird.f32 %v2699
  %vm2707 = vweird.f32 %v2701
  %vm2708 = vmor %vm2706, %vm2707
  %v2709 = vsel %vm2708, %v2701, %v2705
  %v2710 = vand.u32 2147483647, %v2699
  %vm2711 = vcmp.eq.f32.partialorder %v2710, 8.507059e+37
  %v2712 = vand.u32 %v2699, 2147483648
  %v2713 = vor.u32 1.1754944e-38, %v2712
  %v2714 = vsel %vm2711, %v2713, %v2709
  %v2715 = vmul.f32 1.0, %v2714
  %v2716 = vrcp.pop %v2700
  %v2717 = vmul.f32 %v2700, %v2716
  %v2718 = vsub.f32 1.0, %v2717
  %v2719 = vmul.f32 %v2716, %v2718
  %v2720 = vadd.f32 %v2716, %v2719
  %vm2721 = vweird.f32 %v2700
  %vm2722 = vweird.f32 %v2716
  %vm2723 = vmor %vm2721, %vm2722
  %v2724 = vsel %vm2723, %v2716, %v2720
  %v2725 = vand.u32 2147483647, %v2700
  %vm2726 = vcmp.eq.f32.partialorder %v2725, 8.507059e+37
  %v2727 = vand.u32 %v2700, 2147483648
  %v2728 = vor.u32 1.1754944e-38, %v2727
  %v2729 = vsel %vm2726, %v2728, %v2724
  %v2730 = vmul.f32 1.0, %v2729
  %v2732 = vperm.slane %v2627, 0
  %v2734 = vadd.f32 %v2689, %v2732
  %v2735 = vmul.f32 %v2715, %v2734
  %v2736 = vadd.f32 %v2630, %v2735
  %v2737 = vtanh.pop %v2736
  %v2738 = vsub.f32 1.0, %v2730
  %v2739 = vmul.f32 %v2738, %v2737
  %v2740 = vmul.f32 %v2730, 0.0
  %v2741 = vadd.f32 %v2739, %v2740
  %2742 = vst [vmem:[#allocation2] sm:$0xff] %v2741
  %v2743 = vld [vmem:[%s404] sm:$0xff]
  %v2744 = vld [vmem:[%s404 + $0x8] sm:$0xff]
  %v2745 = vld [vmem:[%s404 + $0x10] sm:$0xff]
  %2746 = vmatpush.msra.mxu0 %v2623
  %2747 = vmatpush.msra.mxu0 %v2620
  %2748 = vmatpush.msra.mxu0 %v2617
  %2749 = vmatpush.msra.mxu0 %v2614
  %2750 = vmatpush.msra.mxu0 %v2611
  %2751 = vmatpush.msra.mxu0 %v2608
  %2752 = vmatpush.msra.mxu0 %v2605
  %2753 = vmatpush.msra.mxu0 %v2602
  %2754 = vmatpush.msra.mxu0 %v2599
  %2755 = vmatpush.msra.mxu0 %v2596
  %2756 = vmatpush.msra.mxu0 %v2593
  %2757 = vmatpush.msra.mxu0 %v2590
  %2758 = vmatpush.msra.mxu0 %v2587
  %2759 = vmatpush.msra.mxu0 %v2584
  %2760 = vmatpush.msra.mxu0 %v2581
  %2761 = vmatpush.msra.mxu0 %v2578
  %2762 = vmatmul.f32.gmra.mxu0 %v2741
  %v2763 = vpop.f32.mrf.mxu0
  %v2764 = vadd.f32 0.0, %v2763
  %2765 = vdwg.mxu0
  %2766 = vmatpush.msra.mxu0 %v2624
  %2767 = vmatpush.msra.mxu0 %v2621
  %2768 = vmatpush.msra.mxu0 %v2618
  %2769 = vmatpush.msra.mxu0 %v2615
  %2770 = vmatpush.msra.mxu0 %v2612
  %2771 = vmatpush.msra.mxu0 %v2609
  %2772 = vmatpush.msra.mxu0 %v2606
  %2773 = vmatpush.msra.mxu0 %v2603
  %2774 = vmatpush.msra.mxu0 %v2600
  %2775 = vmatpush.msra.mxu0 %v2597
  %2776 = vmatpush.msra.mxu0 %v2594
  %2777 = vmatpush.msra.mxu0 %v2591
  %2778 = vmatpush.msra.mxu0 %v2588
  %2779 = vmatpush.msra.mxu0 %v2585
  %2780 = vmatpush.msra.mxu0 %v2582
  %2781 = vmatpush.msra.mxu0 %v2579
  %2782 = vmatmul.f32.gmra.mxu0 %v2741
  %v2783 = vpop.f32.mrf.mxu0
  %v2784 = vadd.f32 0.0, %v2783
  %2785 = vdwg.mxu0
  %2786 = vmatpush.msra.mxu0 %v2625
  %2787 = vmatpush.msra.mxu0 %v2622
  %2788 = vmatpush.msra.mxu0 %v2619
  %2789 = vmatpush.msra.mxu0 %v2616
  %2790 = vmatpush.msra.mxu0 %v2613
  %2791 = vmatpush.msra.mxu0 %v2610
  %2792 = vmatpush.msra.mxu0 %v2607
  %2793 = vmatpush.msra.mxu0 %v2604
  %2794 = vmatpush.msra.mxu0 %v2601
  %2795 = vmatpush.msra.mxu0 %v2598
  %2796 = vmatpush.msra.mxu0 %v2595
  %2797 = vmatpush.msra.mxu0 %v2592
  %2798 = vmatpush.msra.mxu0 %v2589
  %2799 = vmatpush.msra.mxu0 %v2586
  %2800 = vmatpush.msra.mxu0 %v2583
  %2801 = vmatpush.msra.mxu0 %v2580
  %2802 = vmatmul.f32.gmra.mxu0 %v2741
  %v2803 = vpop.f32.mrf.mxu0
  %v2804 = vadd.f32 0.0, %v2803
  %2805 = vdwg.mxu0
  %v2806 = vadd.f32 %v2743, %v2764
  %v2807 = vadd.f32 %v2744, %v2784
  %v2808 = vxor.u32 %v2806, 2147483648
  %v2809 = vxor.u32 %v2807, 2147483648
  %v2810 = vmul.f32 %v2808, 1.442695
  %v2811 = vpow.pop %v2810
  %v2812 = vmul.f32 %v2809, 1.442695
  %v2813 = vpow.pop %v2812
  %v2814 = vadd.f32 %v2811, 1.0
  %v2815 = vadd.f32 %v2813, 1.0
  %v2816 = vrcp.pop %v2814
  %v2817 = vmul.f32 %v2814, %v2816
  %v2818 = vsub.f32 1.0, %v2817
  %v2819 = vmul.f32 %v2816, %v2818
  %v2820 = vadd.f32 %v2816, %v2819
  %vm2821 = vweird.f32 %v2814
  %vm2822 = vweird.f32 %v2816
  %vm2823 = vmor %vm2821, %vm2822
  %v2824 = vsel %vm2823, %v2816, %v2820
  %v2825 = vand.u32 2147483647, %v2814
  %vm2826 = vcmp.eq.f32.partialorder %v2825, 8.507059e+37
  %v2827 = vand.u32 %v2814, 2147483648
  %v2828 = vor.u32 1.1754944e-38, %v2827
  %v2829 = vsel %vm2826, %v2828, %v2824
  %v2830 = vmul.f32 1.0, %v2829
  %v2831 = vrcp.pop %v2815
  %v2832 = vmul.f32 %v2815, %v2831
  %v2833 = vsub.f32 1.0, %v2832
  %v2834 = vmul.f32 %v2831, %v2833
  %v2835 = vadd.f32 %v2831, %v2834
  %vm2836 = vweird.f32 %v2815
  %vm2837 = vweird.f32 %v2831
  %vm2838 = vmor %vm2836, %vm2837
  %v2839 = vsel %vm2838, %v2831, %v2835
  %v2840 = vand.u32 2147483647, %v2815
  %vm2841 = vcmp.eq.f32.partialorder %v2840, 8.507059e+37
  %v2842 = vand.u32 %v2815, 2147483648
  %v2843 = vor.u32 1.1754944e-38, %v2842
  %v2844 = vsel %vm2841, %v2843, %v2839
  %v2845 = vmul.f32 1.0, %v2844
  %v2846 = vadd.f32 %v2804, %v2732
  %v2847 = vmul.f32 %v2830, %v2846
  %v2848 = vadd.f32 %v2745, %v2847
  %v2849 = vtanh.pop %v2848
  %v2850 = vsub.f32 1.0, %v2845
  %v2851 = vmul.f32 %v2850, %v2849
  %v2852 = vmul.f32 %v2845, %v2741
  %v2853 = vadd.f32 %v2851, %v2852
  %2854 = vst [vmem:[%s516] sm:$0xff] %v2853
  %v2855 = vld [vmem:[%s518] sm:$0xff]
  %v2856 = vld [vmem:[%s518 + $0x8] sm:$0xff]
  %v2857 = vld [vmem:[%s518 + $0x10] sm:$0xff]
  %2858 = vmatpush.msra.mxu0 %v2623
  %2859 = vmatpush.msra.mxu0 %v2620
  %2860 = vmatpush.msra.mxu0 %v2617
  %2861 = vmatpush.msra.mxu0 %v2614
  %2862 = vmatpush.msra.mxu0 %v2611
  %2863 = vmatpush.msra.mxu0 %v2608
  %2864 = vmatpush.msra.mxu0 %v2605
  %2865 = vmatpush.msra.mxu0 %v2602
  %2866 = vmatpush.msra.mxu0 %v2599
  %2867 = vmatpush.msra.mxu0 %v2596
  %2868 = vmatpush.msra.mxu0 %v2593
  %2869 = vmatpush.msra.mxu0 %v2590
  %2870 = vmatpush.msra.mxu0 %v2587
  %2871 = vmatpush.msra.mxu0 %v2584
  %2872 = vmatpush.msra.mxu0 %v2581
  %2873 = vmatpush.msra.mxu0 %v2578
  %2874 = vmatmul.f32.gmra.mxu0 %v2853
  %v2875 = vpop.f32.mrf.mxu0
  %v2876 = vadd.f32 0.0, %v2875
  %2877 = vdwg.mxu0
  %2878 = vmatpush.msra.mxu0 %v2624
  %2879 = vmatpush.msra.mxu0 %v2621
  %2880 = vmatpush.msra.mxu0 %v2618
  %2881 = vmatpush.msra.mxu0 %v2615
  %2882 = vmatpush.msra.mxu0 %v2612
  %2883 = vmatpush.msra.mxu0 %v2609
  %2884 = vmatpush.msra.mxu0 %v2606
  %2885 = vmatpush.msra.mxu0 %v2603
  %2886 = vmatpush.msra.mxu0 %v2600
  %2887 = vmatpush.msra.mxu0 %v2597
  %2888 = vmatpush.msra.mxu0 %v2594
  %2889 = vmatpush.msra.mxu0 %v2591
  %2890 = vmatpush.msra.mxu0 %v2588
  %2891 = vmatpush.msra.mxu0 %v2585
  %2892 = vmatpush.msra.mxu0 %v2582
  %2893 = vmatpush.msra.mxu0 %v2579
  %2894 = vmatmul.f32.gmra.mxu0 %v2853
  %v2895 = vpop.f32.mrf.mxu0
  %v2896 = vadd.f32 0.0, %v2895
  %2897 = vdwg.mxu0
  %2898 = vmatpush.msra.mxu0 %v2625
  %2899 = vmatpush.msra.mxu0 %v2622
  %2900 = vmatpush.msra.mxu0 %v2619
  %2901 = vmatpush.msra.mxu0 %v2616
  %2902 = vmatpush.msra.mxu0 %v2613
  %2903 = vmatpush.msra.mxu0 %v2610
  %2904 = vmatpush.msra.mxu0 %v2607
  %2905 = vmatpush.msra.mxu0 %v2604
  %2906 = vmatpush.msra.mxu0 %v2601
  %2907 = vmatpush.msra.mxu0 %v2598
  %2908 = vmatpush.msra.mxu0 %v2595
  %2909 = vmatpush.msra.mxu0 %v2592
  %2910 = vmatpush.msra.mxu0 %v2589
  %2911 = vmatpush.msra.mxu0 %v2586
  %2912 = vmatpush.msra.mxu0 %v2583
  %2913 = vmatpush.msra.mxu0 %v2580
  %2914 = vmatmul.f32.gmra.mxu0 %v2853
  %v2915 = vpop.f32.mrf.mxu0
  %v2916 = vadd.f32 0.0, %v2915
  %2917 = vdwg.mxu0
  %v2918 = vadd.f32 %v2855, %v2876
  %v2919 = vadd.f32 %v2856, %v2896
  %v2920 = vxor.u32 %v2918, 2147483648
  %v2921 = vxor.u32 %v2919, 2147483648
  %v2922 = vmul.f32 %v2920, 1.442695
  %v2923 = vpow.pop %v2922
  %v2924 = vmul.f32 %v2921, 1.442695
  %v2925 = vpow.pop %v2924
  %v2926 = vadd.f32 %v2923, 1.0
  %v2927 = vadd.f32 %v2925, 1.0
  %v2928 = vrcp.pop %v2926
  %v2929 = vmul.f32 %v2926, %v2928
  %v2930 = vsub.f32 1.0, %v2929
  %v2931 = vmul.f32 %v2928, %v2930
  %v2932 = vadd.f32 %v2928, %v2931
  %vm2933 = vweird.f32 %v2926
  %vm2934 = vweird.f32 %v2928
  %vm2935 = vmor %vm2933, %vm2934
  %v2936 = vsel %vm2935, %v2928, %v2932
  %v2937 = vand.u32 2147483647, %v2926
  %vm2938 = vcmp.eq.f32.partialorder %v2937, 8.507059e+37
  %v2939 = vand.u32 %v2926, 2147483648
  %v2940 = vor.u32 1.1754944e-38, %v2939
  %v2941 = vsel %vm2938, %v2940, %v2936
  %v2942 = vmul.f32 1.0, %v2941
  %v2943 = vrcp.pop %v2927
  %v2944 = vmul.f32 %v2927, %v2943
  %v2945 = vsub.f32 1.0, %v2944
  %v2946 = vmul.f32 %v2943, %v2945
  %v2947 = vadd.f32 %v2943, %v2946
  %vm2948 = vweird.f32 %v2927
  %vm2949 = vweird.f32 %v2943
  %vm2950 = vmor %vm2948, %vm2949
  %v2951 = vsel %vm2950, %v2943, %v2947
  %v2952 = vand.u32 2147483647, %v2927
  %vm2953 = vcmp.eq.f32.partialorder %v2952, 8.507059e+37
  %v2954 = vand.u32 %v2927, 2147483648
  %v2955 = vor.u32 1.1754944e-38, %v2954
  %v2956 = vsel %vm2953, %v2955, %v2951
  %v2957 = vmul.f32 1.0, %v2956
  %v2958 = vadd.f32 %v2916, %v2732
  %v2959 = vmul.f32 %v2942, %v2958
  %v2960 = vadd.f32 %v2857, %v2959
  %v2961 = vtanh.pop %v2960
  %v2962 = vsub.f32 1.0, %v2957
  %v2963 = vmul.f32 %v2962, %v2961
  %v2964 = vmul.f32 %v2957, %v2853
  %v2965 = vadd.f32 %v2963, %v2964
  %2966 = vst [vmem:[%s630] sm:$0xff] %v2965
  %v2967 = vld [vmem:[%s632] sm:$0xff]
  %v2968 = vld [vmem:[%s632 + $0x8] sm:$0xff]
  %v2969 = vld [vmem:[%s632 + $0x10] sm:$0xff]
  %2970 = vmatpush.msra.mxu0 %v2623
  %2971 = vmatpush.msra.mxu0 %v2620
  %2972 = vmatpush.msra.mxu0 %v2617
  %2973 = vmatpush.msra.mxu0 %v2614
  %2974 = vmatpush.msra.mxu0 %v2611
  %2975 = vmatpush.msra.mxu0 %v2608
  %2976 = vmatpush.msra.mxu0 %v2605
  %2977 = vmatpush.msra.mxu0 %v2602
  %2978 = vmatpush.msra.mxu0 %v2599
  %2979 = vmatpush.msra.mxu0 %v2596
  %2980 = vmatpush.msra.mxu0 %v2593
  %2981 = vmatpush.msra.mxu0 %v2590
  %2982 = vmatpush.msra.mxu0 %v2587
  %2983 = vmatpush.msra.mxu0 %v2584
  %2984 = vmatpush.msra.mxu0 %v2581
  %2985 = vmatpush.msra.mxu0 %v2578
  %2986 = vmatmul.f32.gmra.mxu0 %v2965
  %v2987 = vpop.f32.mrf.mxu0
  %v2988 = vadd.f32 0.0, %v2987
  %2989 = vdwg.mxu0
  %2990 = vmatpush.msra.mxu0 %v2624
  %2991 = vmatpush.msra.mxu0 %v2621
  %2992 = vmatpush.msra.mxu0 %v2618
  %2993 = vmatpush.msra.mxu0 %v2615
  %2994 = vmatpush.msra.mxu0 %v2612
  %2995 = vmatpush.msra.mxu0 %v2609
  %2996 = vmatpush.msra.mxu0 %v2606
  %2997 = vmatpush.msra.mxu0 %v2603
  %2998 = vmatpush.msra.mxu0 %v2600
  %2999 = vmatpush.msra.mxu0 %v2597
  %3000 = vmatpush.msra.mxu0 %v2594
  %3001 = vmatpush.msra.mxu0 %v2591
  %3002 = vmatpush.msra.mxu0 %v2588
  %3003 = vmatpush.msra.mxu0 %v2585
  %3004 = vmatpush.msra.mxu0 %v2582
  %3005 = vmatpush.msra.mxu0 %v2579
  %3006 = vmatmul.f32.gmra.mxu0 %v2965
  %v3007 = vpop.f32.mrf.mxu0
  %v3008 = vadd.f32 0.0, %v3007
  %3009 = vdwg.mxu0
  %3010 = vmatpush.msra.mxu0 %v2625
  %3011 = vmatpush.msra.mxu0 %v2622
  %3012 = vmatpush.msra.mxu0 %v2619
  %3013 = vmatpush.msra.mxu0 %v2616
  %3014 = vmatpush.msra.mxu0 %v2613
  %3015 = vmatpush.msra.mxu0 %v2610
  %3016 = vmatpush.msra.mxu0 %v2607
  %3017 = vmatpush.msra.mxu0 %v2604
  %3018 = vmatpush.msra.mxu0 %v2601
  %3019 = vmatpush.msra.mxu0 %v2598
  %3020 = vmatpush.msra.mxu0 %v2595
  %3021 = vmatpush.msra.mxu0 %v2592
  %3022 = vmatpush.msra.mxu0 %v2589
  %3023 = vmatpush.msra.mxu0 %v2586
  %3024 = vmatpush.msra.mxu0 %v2583
  %3025 = vmatpush.msra.mxu0 %v2580
  %3026 = vmatmul.f32.gmra.mxu0 %v2965
  %v3027 = vpop.f32.mrf.mxu0
  %v3028 = vadd.f32 0.0, %v3027
  %3029 = vdwg.mxu0
  %v3030 = vadd.f32 %v2967, %v2988
  %v3031 = vadd.f32 %v2968, %v3008
  %v3032 = vxor.u32 %v3030, 2147483648
  %v3033 = vxor.u32 %v3031, 2147483648
  %v3034 = vmul.f32 %v3032, 1.442695
  %v3035 = vpow.pop %v3034
  %v3036 = vmul.f32 %v3033, 1.442695
  %v3037 = vpow.pop %v3036
  %v3038 = vadd.f32 %v3035, 1.0
  %v3039 = vadd.f32 %v3037, 1.0
  %v3040 = vrcp.pop %v3038
  %v3041 = vmul.f32 %v3038, %v3040
  %v3042 = vsub.f32 1.0, %v3041
  %v3043 = vmul.f32 %v3040, %v3042
  %v3044 = vadd.f32 %v3040, %v3043
  %vm3045 = vweird.f32 %v3038
  %vm3046 = vweird.f32 %v3040
  %vm3047 = vmor %vm3045, %vm3046
  %v3048 = vsel %vm3047, %v3040, %v3044
  %v3049 = vand.u32 2147483647, %v3038
  %vm3050 = vcmp.eq.f32.partialorder %v3049, 8.507059e+37
  %v3051 = vand.u32 %v3038, 2147483648
  %v3052 = vor.u32 1.1754944e-38, %v3051
  %v3053 = vsel %vm3050, %v3052, %v3048
  %v3054 = vmul.f32 1.0, %v3053
  %v3055 = vrcp.pop %v3039
  %v3056 = vmul.f32 %v3039, %v3055
  %v3057 = vsub.f32 1.0, %v3056
  %v3058 = vmul.f32 %v3055, %v3057
  %v3059 = vadd.f32 %v3055, %v3058
  %vm3060 = vweird.f32 %v3039
  %vm3061 = vweird.f32 %v3055
  %vm3062 = vmor %vm3060, %vm3061
  %v3063 = vsel %vm3062, %v3055, %v3059
  %v3064 = vand.u32 2147483647, %v3039
  %vm3065 = vcmp.eq.f32.partialorder %v3064, 8.507059e+37
  %v3066 = vand.u32 %v3039, 2147483648
  %v3067 = vor.u32 1.1754944e-38, %v3066
  %v3068 = vsel %vm3065, %v3067, %v3063
  %v3069 = vmul.f32 1.0, %v3068
  %v3070 = vadd.f32 %v3028, %v2732
  %v3071 = vmul.f32 %v3054, %v3070
  %v3072 = vadd.f32 %v2969, %v3071
  %v3073 = vtanh.pop %v3072
  %v3074 = vsub.f32 1.0, %v3069
  %v3075 = vmul.f32 %v3074, %v3073
  %v3076 = vmul.f32 %v3069, %v2965
  %v3077 = vadd.f32 %v3075, %v3076
  %3078 = vst [vmem:[%s744] sm:$0xff] %v3077
  %v3079 = vld [vmem:[%s746] sm:$0xff]
  %v3080 = vld [vmem:[%s746 + $0x8] sm:$0xff]
  %v3081 = vld [vmem:[%s746 + $0x10] sm:$0xff]
  %3082 = vmatpush.msra.mxu0 %v2623
  %3083 = vmatpush.msra.mxu0 %v2620
  %3084 = vmatpush.msra.mxu0 %v2617
  %3085 = vmatpush.msra.mxu0 %v2614
  %3086 = vmatpush.msra.mxu0 %v2611
  %3087 = vmatpush.msra.mxu0 %v2608
  %3088 = vmatpush.msra.mxu0 %v2605
  %3089 = vmatpush.msra.mxu0 %v2602
  %3090 = vmatpush.msra.mxu0 %v2599
  %3091 = vmatpush.msra.mxu0 %v2596
  %3092 = vmatpush.msra.mxu0 %v2593
  %3093 = vmatpush.msra.mxu0 %v2590
  %3094 = vmatpush.msra.mxu0 %v2587
  %3095 = vmatpush.msra.mxu0 %v2584
  %3096 = vmatpush.msra.mxu0 %v2581
  %3097 = vmatpush.msra.mxu0 %v2578
  %3098 = vmatmul.f32.gmra.mxu0 %v3077
  %v3099 = vpop.f32.mrf.mxu0
  %v3100 = vadd.f32 0.0, %v3099
  %3101 = vdwg.mxu0
  %3102 = vmatpush.msra.mxu0 %v2624
  %3103 = vmatpush.msra.mxu0 %v2621
  %3104 = vmatpush.msra.mxu0 %v2618
  %3105 = vmatpush.msra.mxu0 %v2615
  %3106 = vmatpush.msra.mxu0 %v2612
  %3107 = vmatpush.msra.mxu0 %v2609
  %3108 = vmatpush.msra.mxu0 %v2606
  %3109 = vmatpush.msra.mxu0 %v2603
  %3110 = vmatpush.msra.mxu0 %v2600
  %3111 = vmatpush.msra.mxu0 %v2597
  %3112 = vmatpush.msra.mxu0 %v2594
  %3113 = vmatpush.msra.mxu0 %v2591
  %3114 = vmatpush.msra.mxu0 %v2588
  %3115 = vmatpush.msra.mxu0 %v2585
  %3116 = vmatpush.msra.mxu0 %v2582
  %3117 = vmatpush.msra.mxu0 %v2579
  %3118 = vmatmul.f32.gmra.mxu0 %v3077
  %v3119 = vpop.f32.mrf.mxu0
  %v3120 = vadd.f32 0.0, %v3119
  %3121 = vdwg.mxu0
  %3122 = vmatpush.msra.mxu0 %v2625
  %3123 = vmatpush.msra.mxu0 %v2622
  %3124 = vmatpush.msra.mxu0 %v2619
  %3125 = vmatpush.msra.mxu0 %v2616
  %3126 = vmatpush.msra.mxu0 %v2613
  %3127 = vmatpush.msra.mxu0 %v2610
  %3128 = vmatpush.msra.mxu0 %v2607
  %3129 = vmatpush.msra.mxu0 %v2604
  %3130 = vmatpush.msra.mxu0 %v2601
  %3131 = vmatpush.msra.mxu0 %v2598
  %3132 = vmatpush.msra.mxu0 %v2595
  %3133 = vmatpush.msra.mxu0 %v2592
  %3134 = vmatpush.msra.mxu0 %v2589
  %3135 = vmatpush.msra.mxu0 %v2586
  %3136 = vmatpush.msra.mxu0 %v2583
  %3137 = vmatpush.msra.mxu0 %v2580
  %3138 = vmatmul.f32.gmra.mxu0 %v3077
  %v3139 = vpop.f32.mrf.mxu0
  %v3140 = vadd.f32 0.0, %v3139
  %3141 = vdwg.mxu0
  %v3142 = vadd.f32 %v3079, %v3100
  %v3143 = vadd.f32 %v3080, %v3120
  %v3144 = vxor.u32 %v3142, 2147483648
  %v3145 = vxor.u32 %v3143, 2147483648
  %v3146 = vmul.f32 %v3144, 1.442695
  %v3147 = vpow.pop %v3146
  %v3148 = vmul.f32 %v3145, 1.442695
  %v3149 = vpow.pop %v3148
  %v3150 = vadd.f32 %v3147, 1.0
  %v3151 = vadd.f32 %v3149, 1.0
  %v3152 = vrcp.pop %v3150
  %v3153 = vmul.f32 %v3150, %v3152
  %v3154 = vsub.f32 1.0, %v3153
  %v3155 = vmul.f32 %v3152, %v3154
  %v3156 = vadd.f32 %v3152, %v3155
  %vm3157 = vweird.f32 %v3150
  %vm3158 = vweird.f32 %v3152
  %vm3159 = vmor %vm3157, %vm3158
  %v3160 = vsel %vm3159, %v3152, %v3156
  %v3161 = vand.u32 2147483647, %v3150
  %vm3162 = vcmp.eq.f32.partialorder %v3161, 8.507059e+37
  %v3163 = vand.u32 %v3150, 2147483648
  %v3164 = vor.u32 1.1754944e-38, %v3163
  %v3165 = vsel %vm3162, %v3164, %v3160
  %v3166 = vmul.f32 1.0, %v3165
  %v3167 = vrcp.pop %v3151
  %v3168 = vmul.f32 %v3151, %v3167
  %v3169 = vsub.f32 1.0, %v3168
  %v3170 = vmul.f32 %v3167, %v3169
  %v3171 = vadd.f32 %v3167, %v3170
  %vm3172 = vweird.f32 %v3151
  %vm3173 = vweird.f32 %v3167
  %vm3174 = vmor %vm3172, %vm3173
  %v3175 = vsel %vm3174, %v3167, %v3171
  %v3176 = vand.u32 2147483647, %v3151
  %vm3177 = vcmp.eq.f32.partialorder %v3176, 8.507059e+37
  %v3178 = vand.u32 %v3151, 2147483648
  %v3179 = vor.u32 1.1754944e-38, %v3178
  %v3180 = vsel %vm3177, %v3179, %v3175
  %v3181 = vmul.f32 1.0, %v3180
  %v3182 = vadd.f32 %v3140, %v2732
  %v3183 = vmul.f32 %v3166, %v3182
  %v3184 = vadd.f32 %v3081, %v3183
  %v3185 = vtanh.pop %v3184
  %v3186 = vsub.f32 1.0, %v3181
  %v3187 = vmul.f32 %v3186, %v3185
  %v3188 = vmul.f32 %v3181, %v3077
  %v3189 = vadd.f32 %v3187, %v3188
  %3190 = vst [vmem:[%s858] sm:$0xff] %v3189
  %v3191 = vld [vmem:[%s860] sm:$0xff]
  %v3192 = vld [vmem:[%s860 + $0x8] sm:$0xff]
  %v3193 = vld [vmem:[%s860 + $0x10] sm:$0xff]
  %3194 = vmatpush.msra.mxu0 %v2623
  %3195 = vmatpush.msra.mxu0 %v2620
  %3196 = vmatpush.msra.mxu0 %v2617
  %3197 = vmatpush.msra.mxu0 %v2614
  %3198 = vmatpush.msra.mxu0 %v2611
  %3199 = vmatpush.msra.mxu0 %v2608
  %3200 = vmatpush.msra.mxu0 %v2605
  %3201 = vmatpush.msra.mxu0 %v2602
  %3202 = vmatpush.msra.mxu0 %v2599
  %3203 = vmatpush.msra.mxu0 %v2596
  %3204 = vmatpush.msra.mxu0 %v2593
  %3205 = vmatpush.msra.mxu0 %v2590
  %3206 = vmatpush.msra.mxu0 %v2587
  %3207 = vmatpush.msra.mxu0 %v2584
  %3208 = vmatpush.msra.mxu0 %v2581
  %3209 = vmatpush.msra.mxu0 %v2578
  %3210 = vmatmul.f32.gmra.mxu0 %v3189
  %v3211 = vpop.f32.mrf.mxu0
  %v3212 = vadd.f32 0.0, %v3211
  %3213 = vdwg.mxu0
  %3214 = vmatpush.msra.mxu0 %v2624
  %3215 = vmatpush.msra.mxu0 %v2621
  %3216 = vmatpush.msra.mxu0 %v2618
  %3217 = vmatpush.msra.mxu0 %v2615
  %3218 = vmatpush.msra.mxu0 %v2612
  %3219 = vmatpush.msra.mxu0 %v2609
  %3220 = vmatpush.msra.mxu0 %v2606
  %3221 = vmatpush.msra.mxu0 %v2603
  %3222 = vmatpush.msra.mxu0 %v2600
  %3223 = vmatpush.msra.mxu0 %v2597
  %3224 = vmatpush.msra.mxu0 %v2594
  %3225 = vmatpush.msra.mxu0 %v2591
  %3226 = vmatpush.msra.mxu0 %v2588
  %3227 = vmatpush.msra.mxu0 %v2585
  %3228 = vmatpush.msra.mxu0 %v2582
  %3229 = vmatpush.msra.mxu0 %v2579
  %3230 = vmatmul.f32.gmra.mxu0 %v3189
  %v3231 = vpop.f32.mrf.mxu0
  %v3232 = vadd.f32 0.0, %v3231
  %3233 = vdwg.mxu0
  %3234 = vmatpush.msra.mxu0 %v2625
  %3235 = vmatpush.msra.mxu0 %v2622
  %3236 = vmatpush.msra.mxu0 %v2619
  %3237 = vmatpush.msra.mxu0 %v2616
  %3238 = vmatpush.msra.mxu0 %v2613
  %3239 = vmatpush.msra.mxu0 %v2610
  %3240 = vmatpush.msra.mxu0 %v2607
  %3241 = vmatpush.msra.mxu0 %v2604
  %3242 = vmatpush.msra.mxu0 %v2601
  %3243 = vmatpush.msra.mxu0 %v2598
  %3244 = vmatpush.msra.mxu0 %v2595
  %3245 = vmatpush.msra.mxu0 %v2592
  %3246 = vmatpush.msra.mxu0 %v2589
  %3247 = vmatpush.msra.mxu0 %v2586
  %3248 = vmatpush.msra.mxu0 %v2583
  %3249 = vmatpush.msra.mxu0 %v2580
  %3250 = vmatmul.f32.gmra.mxu0 %v3189
  %v3251 = vpop.f32.mrf.mxu0
  %v3252 = vadd.f32 0.0, %v3251
  %3253 = vdwg.mxu0
  %v3254 = vadd.f32 %v3191, %v3212
  %v3255 = vadd.f32 %v3192, %v3232
  %v3256 = vxor.u32 %v3254, 2147483648
  %v3257 = vxor.u32 %v3255, 2147483648
  %v3258 = vmul.f32 %v3256, 1.442695
  %v3259 = vpow.pop %v3258
  %v3260 = vmul.f32 %v3257, 1.442695
  %v3261 = vpow.pop %v3260
  %v3262 = vadd.f32 %v3259, 1.0
  %v3263 = vadd.f32 %v3261, 1.0
  %v3264 = vrcp.pop %v3262
  %v3265 = vmul.f32 %v3262, %v3264
  %v3266 = vsub.f32 1.0, %v3265
  %v3267 = vmul.f32 %v3264, %v3266
  %v3268 = vadd.f32 %v3264, %v3267
  %vm3269 = vweird.f32 %v3262
  %vm3270 = vweird.f32 %v3264
  %vm3271 = vmor %vm3269, %vm3270
  %v3272 = vsel %vm3271, %v3264, %v3268
  %v3273 = vand.u32 2147483647, %v3262
  %vm3274 = vcmp.eq.f32.partialorder %v3273, 8.507059e+37
  %v3275 = vand.u32 %v3262, 2147483648
  %v3276 = vor.u32 1.1754944e-38, %v3275
  %v3277 = vsel %vm3274, %v3276, %v3272
  %v3278 = vmul.f32 1.0, %v3277
  %v3279 = vrcp.pop %v3263
  %v3280 = vmul.f32 %v3263, %v3279
  %v3281 = vsub.f32 1.0, %v3280
  %v3282 = vmul.f32 %v3279, %v3281
  %v3283 = vadd.f32 %v3279, %v3282
  %vm3284 = vweird.f32 %v3263
  %vm3285 = vweird.f32 %v3279
  %vm3286 = vmor %vm3284, %vm3285
  %v3287 = vsel %vm3286, %v3279, %v3283
  %v3288 = vand.u32 2147483647, %v3263
  %vm3289 = vcmp.eq.f32.partialorder %v3288, 8.507059e+37
  %v3290 = vand.u32 %v3263, 2147483648
  %v3291 = vor.u32 1.1754944e-38, %v3290
  %v3292 = vsel %vm3289, %v3291, %v3287
  %v3293 = vmul.f32 1.0, %v3292
  %v3294 = vadd.f32 %v3252, %v2732
  %v3295 = vmul.f32 %v3278, %v3294
  %v3296 = vadd.f32 %v3193, %v3295
  %v3297 = vtanh.pop %v3296
  %v3298 = vsub.f32 1.0, %v3293
  %v3299 = vmul.f32 %v3298, %v3297
  %v3300 = vmul.f32 %v3293, %v3189
  %v3301 = vadd.f32 %v3299, %v3300
  %3302 = vst [vmem:[%s972] sm:$0xff] %v3301
  %v3303 = vld [vmem:[%s974] sm:$0xff]
  %v3304 = vld [vmem:[%s974 + $0x8] sm:$0xff]
  %v3305 = vld [vmem:[%s974 + $0x10] sm:$0xff]
  %3306 = vmatpush.msra.mxu0 %v2623
  %3307 = vmatpush.msra.mxu0 %v2620
  %3308 = vmatpush.msra.mxu0 %v2617
  %3309 = vmatpush.msra.mxu0 %v2614
  %3310 = vmatpush.msra.mxu0 %v2611
  %3311 = vmatpush.msra.mxu0 %v2608
  %3312 = vmatpush.msra.mxu0 %v2605
  %3313 = vmatpush.msra.mxu0 %v2602
  %3314 = vmatpush.msra.mxu0 %v2599
  %3315 = vmatpush.msra.mxu0 %v2596
  %3316 = vmatpush.msra.mxu0 %v2593
  %3317 = vmatpush.msra.mxu0 %v2590
  %3318 = vmatpush.msra.mxu0 %v2587
  %3319 = vmatpush.msra.mxu0 %v2584
  %3320 = vmatpush.msra.mxu0 %v2581
  %3321 = vmatpush.msra.mxu0 %v2578
  %3322 = vmatmul.f32.gmra.mxu0 %v3301
  %v3323 = vpop.f32.mrf.mxu0
  %v3324 = vadd.f32 0.0, %v3323
  %3325 = vdwg.mxu0
  %3326 = vmatpush.msra.mxu0 %v2624
  %3327 = vmatpush.msra.mxu0 %v2621
  %3328 = vmatpush.msra.mxu0 %v2618
  %3329 = vmatpush.msra.mxu0 %v2615
  %3330 = vmatpush.msra.mxu0 %v2612
  %3331 = vmatpush.msra.mxu0 %v2609
  %3332 = vmatpush.msra.mxu0 %v2606
  %3333 = vmatpush.msra.mxu0 %v2603
  %3334 = vmatpush.msra.mxu0 %v2600
  %3335 = vmatpush.msra.mxu0 %v2597
  %3336 = vmatpush.msra.mxu0 %v2594
  %3337 = vmatpush.msra.mxu0 %v2591
  %3338 = vmatpush.msra.mxu0 %v2588
  %3339 = vmatpush.msra.mxu0 %v2585
  %3340 = vmatpush.msra.mxu0 %v2582
  %3341 = vmatpush.msra.mxu0 %v2579
  %3342 = vmatmul.f32.gmra.mxu0 %v3301
  %v3343 = vpop.f32.mrf.mxu0
  %v3344 = vadd.f32 0.0, %v3343
  %3345 = vdwg.mxu0
  %3346 = vmatpush.msra.mxu0 %v2625
  %3347 = vmatpush.msra.mxu0 %v2622
  %3348 = vmatpush.msra.mxu0 %v2619
  %3349 = vmatpush.msra.mxu0 %v2616
  %3350 = vmatpush.msra.mxu0 %v2613
  %3351 = vmatpush.msra.mxu0 %v2610
  %3352 = vmatpush.msra.mxu0 %v2607
  %3353 = vmatpush.msra.mxu0 %v2604
  %3354 = vmatpush.msra.mxu0 %v2601
  %3355 = vmatpush.msra.mxu0 %v2598
  %3356 = vmatpush.msra.mxu0 %v2595
  %3357 = vmatpush.msra.mxu0 %v2592
  %3358 = vmatpush.msra.mxu0 %v2589
  %3359 = vmatpush.msra.mxu0 %v2586
  %3360 = vmatpush.msra.mxu0 %v2583
  %3361 = vmatpush.msra.mxu0 %v2580
  %3362 = vmatmul.f32.gmra.mxu0 %v3301
  %v3363 = vpop.f32.mrf.mxu0
  %v3364 = vadd.f32 0.0, %v3363
  %3365 = vdwg.mxu0
  %v3366 = vadd.f32 %v3303, %v3324
  %v3367 = vadd.f32 %v3304, %v3344
  %v3368 = vxor.u32 %v3366, 2147483648
  %v3369 = vxor.u32 %v3367, 2147483648
  %v3370 = vmul.f32 %v3368, 1.442695
  %v3371 = vpow.pop %v3370
  %v3372 = vmul.f32 %v3369, 1.442695
  %v3373 = vpow.pop %v3372
  %v3374 = vadd.f32 %v3371, 1.0
  %v3375 = vadd.f32 %v3373, 1.0
  %v3376 = vrcp.pop %v3374
  %v3377 = vmul.f32 %v3374, %v3376
  %v3378 = vsub.f32 1.0, %v3377
  %v3379 = vmul.f32 %v3376, %v3378
  %v3380 = vadd.f32 %v3376, %v3379
  %vm3381 = vweird.f32 %v3374
  %vm3382 = vweird.f32 %v3376
  %vm3383 = vmor %vm3381, %vm3382
  %v3384 = vsel %vm3383, %v3376, %v3380
  %v3385 = vand.u32 2147483647, %v3374
  %vm3386 = vcmp.eq.f32.partialorder %v3385, 8.507059e+37
  %v3387 = vand.u32 %v3374, 2147483648
  %v3388 = vor.u32 1.1754944e-38, %v3387
  %v3389 = vsel %vm3386, %v3388, %v3384
  %v3390 = vmul.f32 1.0, %v3389
  %v3391 = vrcp.pop %v3375
  %v3392 = vmul.f32 %v3375, %v3391
  %v3393 = vsub.f32 1.0, %v3392
  %v3394 = vmul.f32 %v3391, %v3393
  %v3395 = vadd.f32 %v3391, %v3394
  %vm3396 = vweird.f32 %v3375
  %vm3397 = vweird.f32 %v3391
  %vm3398 = vmor %vm3396, %vm3397
  %v3399 = vsel %vm3398, %v3391, %v3395
  %v3400 = vand.u32 2147483647, %v3375
  %vm3401 = vcmp.eq.f32.partialorder %v3400, 8.507059e+37
  %v3402 = vand.u32 %v3375, 2147483648
  %v3403 = vor.u32 1.1754944e-38, %v3402
  %v3404 = vsel %vm3401, %v3403, %v3399
  %v3405 = vmul.f32 1.0, %v3404
  %v3406 = vadd.f32 %v3364, %v2732
  %v3407 = vmul.f32 %v3390, %v3406
  %v3408 = vadd.f32 %v3305, %v3407
  %v3409 = vtanh.pop %v3408
  %v3410 = vsub.f32 1.0, %v3405
  %v3411 = vmul.f32 %v3410, %v3409
  %v3412 = vmul.f32 %v3405, %v3301
  %v3413 = vadd.f32 %v3411, %v3412
  %3414 = vst [vmem:[%s1086] sm:$0xff] %v3413
  %v3415 = vld [vmem:[%s1088] sm:$0xff]
  %v3416 = vld [vmem:[%s1088 + $0x8] sm:$0xff]
  %v3417 = vld [vmem:[%s1088 + $0x10] sm:$0xff]
  %3418 = vmatpush.msra.mxu0 %v2623
  %3419 = vmatpush.msra.mxu0 %v2620
  %3420 = vmatpush.msra.mxu0 %v2617
  %3421 = vmatpush.msra.mxu0 %v2614
  %3422 = vmatpush.msra.mxu0 %v2611
  %3423 = vmatpush.msra.mxu0 %v2608
  %3424 = vmatpush.msra.mxu0 %v2605
  %3425 = vmatpush.msra.mxu0 %v2602
  %3426 = vmatpush.msra.mxu0 %v2599
  %3427 = vmatpush.msra.mxu0 %v2596
  %3428 = vmatpush.msra.mxu0 %v2593
  %3429 = vmatpush.msra.mxu0 %v2590
  %3430 = vmatpush.msra.mxu0 %v2587
  %3431 = vmatpush.msra.mxu0 %v2584
  %3432 = vmatpush.msra.mxu0 %v2581
  %3433 = vmatpush.msra.mxu0 %v2578
  %3434 = vmatmul.f32.gmra.mxu0 %v3413
  %v3435 = vpop.f32.mrf.mxu0
  %v3436 = vadd.f32 0.0, %v3435
  %3437 = vdwg.mxu0
  %3438 = vmatpush.msra.mxu0 %v2624
  %3439 = vmatpush.msra.mxu0 %v2621
  %3440 = vmatpush.msra.mxu0 %v2618
  %3441 = vmatpush.msra.mxu0 %v2615
  %3442 = vmatpush.msra.mxu0 %v2612
  %3443 = vmatpush.msra.mxu0 %v2609
  %3444 = vmatpush.msra.mxu0 %v2606
  %3445 = vmatpush.msra.mxu0 %v2603
  %3446 = vmatpush.msra.mxu0 %v2600
  %3447 = vmatpush.msra.mxu0 %v2597
  %3448 = vmatpush.msra.mxu0 %v2594
  %3449 = vmatpush.msra.mxu0 %v2591
  %3450 = vmatpush.msra.mxu0 %v2588
  %3451 = vmatpush.msra.mxu0 %v2585
  %3452 = vmatpush.msra.mxu0 %v2582
  %3453 = vmatpush.msra.mxu0 %v2579
  %3454 = vmatmul.f32.gmra.mxu0 %v3413
  %v3455 = vpop.f32.mrf.mxu0
  %v3456 = vadd.f32 0.0, %v3455
  %3457 = vdwg.mxu0
  %3458 = vmatpush.msra.mxu0 %v2625
  %3459 = vmatpush.msra.mxu0 %v2622
  %3460 = vmatpush.msra.mxu0 %v2619
  %3461 = vmatpush.msra.mxu0 %v2616
  %3462 = vmatpush.msra.mxu0 %v2613
  %3463 = vmatpush.msra.mxu0 %v2610
  %3464 = vmatpush.msra.mxu0 %v2607
  %3465 = vmatpush.msra.mxu0 %v2604
  %3466 = vmatpush.msra.mxu0 %v2601
  %3467 = vmatpush.msra.mxu0 %v2598
  %3468 = vmatpush.msra.mxu0 %v2595
  %3469 = vmatpush.msra.mxu0 %v2592
  %3470 = vmatpush.msra.mxu0 %v2589
  %3471 = vmatpush.msra.mxu0 %v2586
  %3472 = vmatpush.msra.mxu0 %v2583
  %3473 = vmatpush.msra.mxu0 %v2580
  %3474 = vmatmul.f32.gmra.mxu0 %v3413
  %v3475 = vpop.f32.mrf.mxu0
  %v3476 = vadd.f32 0.0, %v3475
  %3477 = vdwg.mxu0
  %v3478 = vadd.f32 %v3415, %v3436
  %v3479 = vadd.f32 %v3416, %v3456
  %v3480 = vxor.u32 %v3478, 2147483648
  %v3481 = vxor.u32 %v3479, 2147483648
  %v3482 = vmul.f32 %v3480, 1.442695
  %v3483 = vpow.pop %v3482
  %v3484 = vmul.f32 %v3481, 1.442695
  %v3485 = vpow.pop %v3484
  %v3486 = vadd.f32 %v3483, 1.0
  %v3487 = vadd.f32 %v3485, 1.0
  %v3488 = vrcp.pop %v3486
  %v3489 = vmul.f32 %v3486, %v3488
  %v3490 = vsub.f32 1.0, %v3489
  %v3491 = vmul.f32 %v3488, %v3490
  %v3492 = vadd.f32 %v3488, %v3491
  %vm3493 = vweird.f32 %v3486
  %vm3494 = vweird.f32 %v3488
  %vm3495 = vmor %vm3493, %vm3494
  %v3496 = vsel %vm3495, %v3488, %v3492
  %v3497 = vand.u32 2147483647, %v3486
  %vm3498 = vcmp.eq.f32.partialorder %v3497, 8.507059e+37
  %v3499 = vand.u32 %v3486, 2147483648
  %v3500 = vor.u32 1.1754944e-38, %v3499
  %v3501 = vsel %vm3498, %v3500, %v3496
  %v3502 = vmul.f32 1.0, %v3501
  %v3503 = vrcp.pop %v3487
  %v3504 = vmul.f32 %v3487, %v3503
  %v3505 = vsub.f32 1.0, %v3504
  %v3506 = vmul.f32 %v3503, %v3505
  %v3507 = vadd.f32 %v3503, %v3506
  %vm3508 = vweird.f32 %v3487
  %vm3509 = vweird.f32 %v3503
  %vm3510 = vmor %vm3508, %vm3509
  %v3511 = vsel %vm3510, %v3503, %v3507
  %v3512 = vand.u32 2147483647, %v3487
  %vm3513 = vcmp.eq.f32.partialorder %v3512, 8.507059e+37
  %v3514 = vand.u32 %v3487, 2147483648
  %v3515 = vor.u32 1.1754944e-38, %v3514
  %v3516 = vsel %vm3513, %v3515, %v3511
  %v3517 = vmul.f32 1.0, %v3516
  %v3518 = vadd.f32 %v3476, %v2732
  %v3519 = vmul.f32 %v3502, %v3518
  %v3520 = vadd.f32 %v3417, %v3519
  %v3521 = vtanh.pop %v3520
  %v3522 = vsub.f32 1.0, %v3517
  %v3523 = vmul.f32 %v3522, %v3521
  %v3524 = vmul.f32 %v3517, %v3413
  %v3525 = vadd.f32 %v3523, %v3524
  %3526 = vst [vmem:[%s1200] sm:$0xff] %v3525
  %v3527 = vld [vmem:[#allocation2] sm:$0xff]
  %v3528 = vld [vmem:[#allocation2 + $0x8] sm:$0xff]
  %v3529 = vld [vmem:[#allocation2 + $0x10] sm:$0xff]
  %v3530 = vld [vmem:[#allocation2 + $0x18] sm:$0xff]
  %v3531 = vld [vmem:[#allocation2 + $0x20] sm:$0xff]
  %v3532 = vld [vmem:[#allocation2 + $0x28] sm:$0xff]
  %v3533 = vld [vmem:[#allocation2 + $0x30] sm:$0xff]
  %v3534 = vld [vmem:[#allocation2 + $0x38] sm:$0xff]
  %v3535 = vld [vmem:[%s6] sm:$0xff]
  %v3536 = vld [vmem:[%s6 + $0x8] sm:$0xff]
  %v3537 = vld [vmem:[%s6 + $0x10] sm:$0xff]
  %v3538 = vld [vmem:[%s6 + $0x18] sm:$0xff]
  %v3539 = vld [vmem:[%s6 + $0x20] sm:$0xff]
  %v3540 = vld [vmem:[%s6 + $0x28] sm:$0xff]
  %v3541 = vld [vmem:[%s6 + $0x30] sm:$0xff]
  %v3542 = vld [vmem:[%s6 + $0x38] sm:$0xff]
  %v3543 = vld [vmem:[%s6 + $0x40] sm:$0xff]
  %v3544 = vld [vmem:[%s6 + $0x48] sm:$0xff]
  %v3545 = vld [vmem:[%s6 + $0x50] sm:$0xff]
  %v3546 = vld [vmem:[%s6 + $0x58] sm:$0xff]
  %v3547 = vld [vmem:[%s6 + $0x60] sm:$0xff]
  %v3548 = vld [vmem:[%s6 + $0x68] sm:$0xff]
  %v3549 = vld [vmem:[%s6 + $0x70] sm:$0xff]
  %v3550 = vld [vmem:[%s6 + $0x78] sm:$0xff]
  %v3551 = vld [vmem:[%s7] sm:$0x1]
  %v3553 = vperm.slane %v3551, 0
  %3555 = vmatpush.msra.mxu0 %v3550
  %3556 = vmatpush.msra.mxu0 %v3549
  %3557 = vmatpush.msra.mxu0 %v3548
  %3558 = vmatpush.msra.mxu0 %v3547
  %3559 = vmatpush.msra.mxu0 %v3546
  %3560 = vmatpush.msra.mxu0 %v3545
  %3561 = vmatpush.msra.mxu0 %v3544
  %3562 = vmatpush.msra.mxu0 %v3543
  %3563 = vmatpush.msra.mxu0 %v3542
  %3564 = vmatpush.msra.mxu0 %v3541
  %3565 = vmatpush.msra.mxu0 %v3540
  %3566 = vmatpush.msra.mxu0 %v3539
  %3567 = vmatpush.msra.mxu0 %v3538
  %3568 = vmatpush.msra.mxu0 %v3537
  %3569 = vmatpush.msra.mxu0 %v3536
  %3570 = vmatpush.msra.mxu0 %v3535
  %3571 = vmatmul.f32.gmra.mxu0 %v3527
  %v3572 = vpop.f32.mrf.mxu0
  %v3573 = vadd.f32 %v3553, %v3572
  %3574 = vmatmul.f32.gmra.mxu0 %v3528
  %v3575 = vpop.f32.mrf.mxu0
  %v3576 = vadd.f32 %v3553, %v3575
  %3577 = vmatmul.f32.gmra.mxu0 %v3529
  %v3578 = vpop.f32.mrf.mxu0
  %v3579 = vadd.f32 %v3553, %v3578
  %3580 = vmatmul.f32.gmra.mxu0 %v3530
  %v3581 = vpop.f32.mrf.mxu0
  %v3582 = vadd.f32 %v3553, %v3581
  %3583 = vmatmul.f32.gmra.mxu0 %v3531
  %v3584 = vpop.f32.mrf.mxu0
  %v3585 = vadd.f32 %v3553, %v3584
  %3586 = vmatmul.f32.gmra.mxu0 %v3532
  %v3587 = vpop.f32.mrf.mxu0
  %v3588 = vadd.f32 %v3553, %v3587
  %3589 = vmatmul.f32.gmra.mxu0 %v3533
  %v3590 = vpop.f32.mrf.mxu0
  %v3591 = vadd.f32 %v3553, %v3590
  %3592 = vmatmul.f32.gmra.mxu0 %v3534
  %v3593 = vpop.f32.mrf.mxu0
  %v3594 = vadd.f32 %v3553, %v3593
  %3595 = vdwg.mxu0
  %3596 = vst [vmem:[%s8] sm:$0xff] %v3573
  %3597 = vst [vmem:[%s8 + $0x8] sm:$0xff] %v3576
  %3598 = vst [vmem:[%s8 + $0x10] sm:$0xff] %v3579
  %3599 = vst [vmem:[%s8 + $0x18] sm:$0xff] %v3582
  %3600 = vst [vmem:[%s8 + $0x20] sm:$0xff] %v3585
  %3601 = vst [vmem:[%s8 + $0x28] sm:$0xff] %v3588
  %3602 = vst [vmem:[%s8 + $0x30] sm:$0xff] %v3591
  %3603 = vst [vmem:[%s8 + $0x38] sm:$0xff] %v3594
  // Predicated region
  $region34: #{recurrent_collaborative_forward.1} parent=0 // pred_check
    _
  $region35: #{recurrent_collaborative_forward.1} parent=0 // pred_check_branch
    %3605 = sbr.rel (0) target = $region37
  $region36: #{recurrent_collaborative_forward.1} parent=0 // pred_region
    _
  $region37: #{recurrent_collaborative_forward.1} parent=0 // pred_fallthru
    _
  // Predicated region
  $region38: #{recurrent_collaborative_forward.1} parent=0 // pred_check
    _
  $region39: #{recurrent_collaborative_forward.1} parent=0 // pred_check_branch
    %3607 = sbr.rel (0) target = $region41
  $region40: #{recurrent_collaborative_forward.1} parent=0 // pred_region
    _
  $region41: #{recurrent_collaborative_forward.1} parent=0 // pred_fallthru
    _

</llo_original>
